<compile_context>
chip_gen: v7x
topology: tpu7x:2x2x1
jax: 0.10.0
libtpu: 0.0.40
codegen_flags: <defaults>
</compile_context>

<pallas_src>
import functools

import numpy as np
import jax
import jax.numpy as jnp
from jax.experimental import pallas as pl
from jax.experimental.pallas import tpu as pltpu

SMEM = pltpu.MemorySpace.SMEM
_BN_EPS = 1e-5


# ---------------------------------------------------------------------------
# Helpers
# ---------------------------------------------------------------------------

def _pick_block_rows(n, target=128):
    """Largest multiple-of-8 divisor of n that is <= target (falls back to n).

    Keeps BlockSpec second-to-last dims legal ((8,128) rule) while giving the grid
    several row-blocks so the pipeline / megacore sharding has work.  On v7x one
    would halve `target` (64 MiB VMEM); blocks here are tiny either way.
    """
    best = n
    d = 8
    while d <= min(n, target):
        if n % d == 0:
            best = d
        d += 8
    if best == n and n % 16 == 0 and (n // 2) % 8 == 0:
        best = n // 2  # prefer >= 2 row blocks per image when cheap to do so
    return best


def bilinear_matrix(out_size, in_size):
    """Row-interpolation matrix matching F.interpolate(mode='bilinear', align_corners=False)."""
    scale = in_size / out_size
    dst = np.arange(out_size, dtype=np.float64)
    src = np.maximum((dst + 0.5) * scale - 0.5, 0.0)
    i0 = np.minimum(np.floor(src).astype(np.int64), in_size - 1)
    i1 = np.minimum(i0 + 1, in_size - 1)
    w1 = src - i0
    w0 = 1.0 - w1
    R = np.zeros((out_size, in_size), dtype=np.float32)
    R[np.arange(out_size), i0] += w0.astype(np.float32)
    R[np.arange(out_size), i1] += w1.astype(np.float32)
    return jnp.asarray(R)


# ---------------------------------------------------------------------------
# Kernel A: fused attention-map kernel
#   phi 1x1 conv (VPU) -> bilinear upsample (2 small matmuls) -> + theta strided conv
#   (space-to-depth planes, VPU) -> ReLU -> psi projection -> stable sigmoid
# ---------------------------------------------------------------------------

def _attention_map(theta_planes, g, theta_w, phi_w, phi_b, psi_w, psi_b, rh1, rw1t):
    b, K1, H2, W2 = theta_planes.shape
    _, Cg, Hg, Wg = g.shape
    inter = theta_w.shape[0]
    th2 = _pick_block_rows(H2)
    nhb = H2 // th2

    def kernel(th_ref, g_ref, rh_ref, rwt_ref,
               tw_ref, pw_ref, pb_ref, qw_ref, qb_ref, o_ref):
        acc = None
        for o in range(inter):
            # phi: 1x1 conv of the gating signal (tiny channels -> VPU + SMEM scalar weights)
            phi_o = g_ref[0, 0] * pw_ref[o, 0]
            for c in range(1, Cg):
                phi_o = phi_o + g_ref[0, c] * pw_ref[o, c]
            phi_o = phi_o + pb_ref[o]
            # bilinear upsample of phi channel o to this (th2, W2) block: Rh @ phi @ Rw^T
            up_o = jnp.dot(
                jnp.dot(rh_ref[...], phi_o, preferred_element_type=jnp.float32),
                rwt_ref[...], preferred_element_type=jnp.float32)
            # theta: stride-2 2x2 conv == scalar-weighted sum of space-to-depth planes
            t_o = th_ref[0, 0] * tw_ref[o, 0]
            for k in range(1, K1):
                t_o = t_o + th_ref[0, k] * tw_ref[o, k]
            f_o = jnp.maximum(t_o + up_o, 0.0)
            term = f_o * qw_ref[o]
            acc = term if acc is None else acc + term
        z = acc + qb_ref[0]
        # numerically stable sigmoid (no inf intermediates for large |z|)
        e = jnp.exp(-jnp.abs(z))
        o_ref[0] = jnp.where(z >= 0.0, 1.0 / (1.0 + e), e / (1.0 + e))

    return pl.pallas_call(
        kernel,
        out_shape=jax.ShapeDtypeStruct((b, H2, W2), jnp.float32),
        grid=(b, nhb),
        in_specs=[
            pl.BlockSpec((1, K1, th2, W2), lambda bi, hi: (bi, 0, hi, 0)),
            pl.BlockSpec((1, Cg, Hg, Wg), lambda bi, hi: (bi, 0, 0, 0)),
            pl.BlockSpec((th2, Hg), lambda bi, hi: (hi, 0)),
            pl.BlockSpec((Wg, W2), lambda bi, hi: (0, 0)),
            pl.BlockSpec(memory_space=SMEM),   # theta_w (inter, K1)
            pl.BlockSpec(memory_space=SMEM),   # phi_w   (inter, Cg)
            pl.BlockSpec(memory_space=SMEM),   # phi_b   (inter,)
            pl.BlockSpec(memory_space=SMEM),   # psi_w   (inter,)
            pl.BlockSpec(memory_space=SMEM),   # psi_b   (1,)
        ],
        out_specs=pl.BlockSpec((1, th2, W2), lambda bi, hi: (bi, hi, 0)),
        compiler_params=pltpu.CompilerParams(
            dimension_semantics=("parallel", "parallel"),
            vmem_limit_bytes=32 * 1024 * 1024),
    )(theta_planes, g, rh1, rw1t, theta_w, phi_w, phi_b, psi_w, psi_b)


# ---------------------------------------------------------------------------
# Kernel C: fused apply kernel
#   upsample s_low -> s_up block ; y = s_up * x ; t = Conv1x1(y)+bias ;
#   per-block BatchNorm partial sums (sum, sumsq) per channel.
# ---------------------------------------------------------------------------

def _apply_attention(x, s_low, w_w, w_b, rh2, rw2t):
    b, Cin, H, W = x.shape
    _, H2, W2 = s_low.shape
    th = _pick_block_rows(H)
    nhb = H // th
    C2 = 2 * Cin

    def kernel(x_ref, s_ref, rh_ref, rwt_ref, ww_ref, wb_ref,
               sup_ref, t_ref, st_ref):
        # bilinear upsample of the attention coefficients for this row block
        s_up = jnp.dot(
            jnp.dot(rh_ref[...], s_ref[0], preferred_element_type=jnp.float32),
            rwt_ref[...], preferred_element_type=jnp.float32)               # (th, W)
        sup_ref[0] = s_up

        ys = [x_ref[0, c] * s_up for c in range(Cin)]                       # y = s_up * x
        sub = jax.lax.broadcasted_iota(jnp.int32, (8, C2), 0)
        lane = jax.lax.broadcasted_iota(jnp.int32, (8, C2), 1)
        stats = jnp.zeros((8, C2), jnp.float32)
        for o in range(Cin):
            # 1x1 conv on the VPU (tiny channel count), weights as SMEM scalars
            t_o = ys[0] * ww_ref[o, 0]
            for c in range(1, Cin):
                t_o = t_o + ys[c] * ww_ref[o, c]
            t_o = t_o + wb_ref[o]
            t_ref[0, o] = t_o
            # partial BatchNorm sums for this block (global stats finalized in kernel E)
            t_sum = jnp.sum(jnp.sum(t_o, axis=1, keepdims=True), axis=0, keepdims=True)
            t_sq = jnp.sum(jnp.sum(t_o * t_o, axis=1, keepdims=True), axis=0, keepdims=True)
            stats = stats + jnp.where((sub == 0) & (lane == o), t_sum, 0.0)
            stats = stats + jnp.where((sub == 0) & (lane == Cin + o), t_sq, 0.0)
        st_ref[...] = stats

    out_shapes = (
        jax.ShapeDtypeStruct((b, H, W), jnp.float32),           # s_up (returned output)
        jax.ShapeDtypeStruct((b, Cin, H, W), jnp.float32),      # t = Conv1x1(s_up*x)+bias
        jax.ShapeDtypeStruct((b * nhb * 8, C2), jnp.float32),   # per-block BN partial sums
    )
    return pl.pallas_call(
        kernel,
        out_shape=out_shapes,
        grid=(b, nhb),
        in_specs=[
            pl.BlockSpec((1, Cin, th, W), lambda bi, hi: (bi, 0, hi, 0)),
            pl.BlockSpec((1, H2, W2), lambda bi, hi: (bi, 0, 0)),
            pl.BlockSpec((th, H2), lambda bi, hi: (hi, 0)),
            pl.BlockSpec((W2, W), lambda bi, hi: (0, 0)),
            pl.BlockSpec(memory_space=SMEM),   # W_w (Cin, Cin)
            pl.BlockSpec(memory_space=SMEM),   # W_b (Cin,)
        ],
        out_specs=(
            pl.BlockSpec((1, th, W), lambda bi, hi: (bi, hi, 0)),
            pl.BlockSpec((1, Cin, th, W), lambda bi, hi: (bi, 0, hi, 0)),
            pl.BlockSpec((8, C2), lambda bi, hi: (bi * nhb + hi, 0)),
        ),
        compiler_params=pltpu.CompilerParams(
            dimension_semantics=("parallel", "parallel"),
            vmem_limit_bytes=32 * 1024 * 1024),
    )(x, s_low, rh2, rw2t, w_w, w_b)


# ---------------------------------------------------------------------------
# Kernel E: BatchNorm finalize (global batch stats from partial sums, then normalize)
# ---------------------------------------------------------------------------

def _batchnorm_apply(t, stats):
    b, Cin, H, W = t.shape
    th = _pick_block_rows(H)
    nhb = H // th
    nblk = stats.shape[0] // 8
    inv_count = 1.0 / float(b * H * W)

    def kernel(t_ref, st_ref, o_ref):
        for c in range(Cin):
            s1 = st_ref[0, c]
            s2 = st_ref[0, Cin + c]
            for i in range(1, nblk):
                s1 = s1 + st_ref[8 * i, c]
                s2 = s2 + st_ref[8 * i, Cin + c]
            mean = s1 * inv_count
            var = s2 * inv_count - mean * mean
            diff = t_ref[0, c] - mean
            o_ref[0, c] = diff * jax.lax.rsqrt(var + _BN_EPS + jnp.zeros_like(diff))

    return pl.pallas_call(
        kernel,
        out_shape=jax.ShapeDtypeStruct((b, Cin, H, W), jnp.float32),
        grid=(b, nhb),
        in_specs=[
            pl.BlockSpec((1, Cin, th, W), lambda bi, hi: (bi, 0, hi, 0)),
            pl.BlockSpec(memory_space=SMEM),   # partial stats (small; scalar reads)
        ],
        out_specs=pl.BlockSpec((1, Cin, th, W), lambda bi, hi: (bi, 0, hi, 0)),
        compiler_params=pltpu.CompilerParams(
            dimension_semantics=("parallel", "parallel"),
            vmem_limit_bytes=32 * 1024 * 1024),
    )(t, stats)


# ---------------------------------------------------------------------------
# Parameters + forward
# ---------------------------------------------------------------------------

def init_params(key, in_channels, gating_channels, inter_channels, sub_sample_factor):
    kh, kw = sub_sample_factor
    ks = jax.random.split(key, 7)

    def kaiming(k, shape, fan_in):
        return jax.random.normal(k, shape, jnp.float32) * np.sqrt(2.0 / fan_in)

    return {
        # theta: Conv2d(Cin -> inter, kernel=sub_sample_factor, stride=sub_sample_factor, no bias)
        "theta_w": kaiming(ks[0], (inter_channels, in_channels, kh, kw), in_channels * kh * kw),
        # phi: Conv2d(Cg -> inter, 1x1, bias)
        "phi_w": kaiming(ks[1], (inter_channels, gating_channels, 1, 1), gating_channels),
        "phi_b": jax.random.normal(ks[2], (inter_channels,), jnp.float32) * 0.01,
        # psi: Conv2d(inter -> 1, 1x1, bias)
        "psi_w": kaiming(ks[3], (1, inter_channels, 1, 1), inter_channels),
        "psi_b": jax.random.normal(ks[4], (1,), jnp.float32) * 0.01,
        # W: Conv2d(Cin -> Cin, 1x1, bias) followed by BatchNorm2d (gamma=1, beta=0)
        "W_w": kaiming(ks[5], (in_channels, in_channels, 1, 1), in_channels),
        "W_b": jax.random.normal(ks[6], (in_channels,), jnp.float32) * 0.01,
    }


@functools.partial(jax.jit, static_argnames=("sub_sample_factor",))
def grid_attention_forward(params, x, g, sub_sample_factor=(2, 2)):
    """x: (b, Cin, H, W) NCHW; g: (b, Cg, Hg, Wg) NCHW. Returns (W_y, sigm_psi_f) in NCHW."""
    b, Cin, H, W = x.shape
    _, Cg, Hg, Wg = g.shape
    kh, kw = sub_sample_factor
    assert H % kh == 0 and W % kw == 0
    H2, W2 = H // kh, W // kw
    inter = params["theta_w"].shape[0]
    K1 = Cin * kh * kw

    x = x.astype(jnp.float32)
    g = g.astype(jnp.float32)

    # Space-to-depth planes for the strided theta conv (single XLA pass over x; x itself is
    # consumed directly in NCHW by the apply kernel, so there are no NHWC round trips).
    theta_planes = (
        x.reshape(b, Cin, H2, kh, W2, kw)
         .transpose(0, 1, 3, 5, 2, 4)
         .reshape(b, K1, H2, W2))

    # Weight plumbing (tiny): flatten conv weights for scalar (SMEM) access in the kernels.
    theta_w = params["theta_w"].reshape(inter, K1).astype(jnp.float32)
    phi_w = params["phi_w"].reshape(inter, Cg).astype(jnp.float32)
    phi_b = params["phi_b"].astype(jnp.float32)
    psi_w = params["psi_w"].reshape(inter).astype(jnp.float32)
    psi_b = params["psi_b"].astype(jnp.float32)
    w_w = params["W_w"].reshape(Cin, Cin).astype(jnp.float32)
    w_b = params["W_b"].astype(jnp.float32)

    # Bilinear interpolation matrices (align_corners=False), trace-time constants.
    rh1 = bilinear_matrix(H2, Hg)
    rw1t = bilinear_matrix(W2, Wg).T      # (Wg, W2)
    rh2 = bilinear_matrix(H, H2)
    rw2t = bilinear_matrix(W, W2).T       # (W2, W)

    # Kernel A: attention coefficients at theta resolution.
    s_low = _attention_map(theta_planes, g, theta_w, phi_w, phi_b, psi_w, psi_b, rh1, rw1t)

    # Kernel C: upsample coefficients + apply + W conv + BN partial stats.
    s_up, t, stats = _apply_attention(x, s_low, w_w, w_b, rh2, rw2t)

    # Kernel E: BatchNorm finalize (training mode: batch statistics, gamma=1, beta=0).
    # TODO(synk): running_mean/running_var buffers of BatchNorm2d are not produced/updated.
    W_y = _batchnorm_apply(t, stats)

    return W_y, s_up.reshape(b, 1, H, W)


# ---------------------------------------------------------------------------
# Main
# ---------------------------------------------------------------------------

if __name__ == "__main__":
    in_channels = 4
    gating_channels = 8
    inter_channels = in_channels // 2          # = 2 (module default)
    sub_sample_factor = (2, 2)

    b, H, W = 2, 16, 16
    Hg, Wg = 4, 4

    key = jax.random.PRNGKey(0)
    kx, kg, kp = jax.random.split(key, 3)
    x = jax.random.normal(kx, (b, in_channels, H, W), jnp.float32)
    g = jax.random.normal(kg, (b, gating_channels, Hg, Wg), jnp.float32)

    params = init_params(kp, in_channels, gating_channels, inter_channels, sub_sample_factor)

    W_y, sigm_psi_f = grid_attention_forward(params, x, g, sub_sample_factor=sub_sample_factor)
    W_y = jax.block_until_ready(W_y)
    sigm_psi_f = jax.block_until_ready(sigm_psi_f)

    assert W_y.shape == (b, in_channels, H, W)
    assert sigm_psi_f.shape == (b, 1, H, W)
    assert bool(jnp.all(jnp.isfinite(W_y))) and bool(jnp.all(jnp.isfinite(sigm_psi_f)))

    print("KERNEL_OK")
</pallas_src>

<mosaic_0001>
module attributes {stable_mosaic.version = 11 : i64} {
  func.func @kernel(%arg0: i32, %arg1: i32, %arg2: memref<1x4x8x16xf32, #tpu.memory_space<vmem>>, %arg3: memref<32x8xf32, #tpu.memory_space<smem>>, %arg4: memref<1x4x8x16xf32, #tpu.memory_space<vmem>>) attributes {dimension_semantics = [#tpu.dimension_semantics<parallel>, #tpu.dimension_semantics<parallel>], iteration_bounds = array<i64: 2, 2>, scalar_prefetch = 0 : i64, scratch_operands = 0 : i64, tpu.core_type = #tpu.core_type<tc>, window_params = [{transform_indices = @transform_0, window_bounds = array<i64: 1, 4, 8, 16>}, {transform_indices = @transform_1, window_bounds = array<i64: 32, 8>}, {transform_indices = @transform_2, window_bounds = array<i64: 1, 4, 8, 16>}]} {
    %c0 = arith.constant 0 : index
    %c0_0 = arith.constant 0 : index
    %0 = memref.load %arg3[%c0, %c0_0] : memref<32x8xf32, #tpu.memory_space<smem>>
    %c0_1 = arith.constant 0 : index
    %c4 = arith.constant 4 : index
    %1 = memref.load %arg3[%c0_1, %c4] : memref<32x8xf32, #tpu.memory_space<smem>>
    %c8 = arith.constant 8 : index
    %c0_2 = arith.constant 0 : index
    %2 = memref.load %arg3[%c8, %c0_2] : memref<32x8xf32, #tpu.memory_space<smem>>
    %3 = arith.addf %0, %2 : f32
    %c8_3 = arith.constant 8 : index
    %c4_4 = arith.constant 4 : index
    %4 = memref.load %arg3[%c8_3, %c4_4] : memref<32x8xf32, #tpu.memory_space<smem>>
    %5 = arith.addf %1, %4 : f32
    %c16 = arith.constant 16 : index
    %c0_5 = arith.constant 0 : index
    %6 = memref.load %arg3[%c16, %c0_5] : memref<32x8xf32, #tpu.memory_space<smem>>
    %7 = arith.addf %3, %6 : f32
    %c16_6 = arith.constant 16 : index
    %c4_7 = arith.constant 4 : index
    %8 = memref.load %arg3[%c16_6, %c4_7] : memref<32x8xf32, #tpu.memory_space<smem>>
    %9 = arith.addf %5, %8 : f32
    %c24 = arith.constant 24 : index
    %c0_8 = arith.constant 0 : index
    %10 = memref.load %arg3[%c24, %c0_8] : memref<32x8xf32, #tpu.memory_space<smem>>
    %11 = arith.addf %7, %10 : f32
    %c24_9 = arith.constant 24 : index
    %c4_10 = arith.constant 4 : index
    %12 = memref.load %arg3[%c24_9, %c4_10] : memref<32x8xf32, #tpu.memory_space<smem>>
    %13 = arith.addf %9, %12 : f32
    %cst = arith.constant 0.001953125 : f32
    %14 = arith.mulf %11, %cst : f32
    %cst_11 = arith.constant 0.001953125 : f32
    %15 = arith.mulf %13, %cst_11 : f32
    %16 = arith.mulf %14, %14 : f32
    %17 = arith.subf %15, %16 : f32
    %c0_12 = arith.constant 0 : index
    %c0_13 = arith.constant 0 : index
    %c0_14 = arith.constant 0 : index
    %c0_15 = arith.constant 0 : index
    %18 = vector.load %arg2[%c0_12, %c0_13, %c0_14, %c0_15] : memref<1x4x8x16xf32, #tpu.memory_space<vmem>>, vector<1x1x8x16xf32>
    %19 = vector.shape_cast %18 : vector<1x1x8x16xf32> to vector<8x16xf32>
    %20 = vector.broadcast %14 : f32 to vector<8x16xf32>
    %21 = arith.subf %19, %20 : vector<8x16xf32>
    %cst_16 = arith.constant 9.99999974E-6 : f32
    %22 = arith.addf %17, %cst_16 : f32
    %cst_17 = arith.constant 0.000000e+00 : f32
    %23 = vector.broadcast %cst_17 : f32 to vector<8x16xf32>
    %24 = vector.broadcast %22 : f32 to vector<8x16xf32>
    %25 = arith.addf %24, %23 : vector<8x16xf32>
    %26 = math.rsqrt %25 : vector<8x16xf32>
    %27 = arith.mulf %21, %26 : vector<8x16xf32>
    %c0_18 = arith.constant 0 : index
    %c0_19 = arith.constant 0 : index
    %c0_20 = arith.constant 0 : index
    %c0_21 = arith.constant 0 : index
    %28 = vector.load %arg4[%c0_18, %c0_19, %c0_20, %c0_21] : memref<1x4x8x16xf32, #tpu.memory_space<vmem>>, vector<1x1x8x16xf32>
    %29 = vector.shape_cast %28 : vector<1x1x8x16xf32> to vector<8x16xf32>
    %30 = vector.shape_cast %27 : vector<8x16xf32> to vector<1x1x8x16xf32>
    tpu.vector_store %arg4[%c0_18, %c0_19, %c0_20, %c0_21], %30 {strides = array<i32>} : memref<1x4x8x16xf32, #tpu.memory_space<vmem>>, vector<1x1x8x16xf32>,
    %c0_22 = arith.constant 0 : index
    %c1 = arith.constant 1 : index
    %31 = memref.load %arg3[%c0_22, %c1] : memref<32x8xf32, #tpu.memory_space<smem>>
    %c0_23 = arith.constant 0 : index
    %c5 = arith.constant 5 : index
    %32 = memref.load %arg3[%c0_23, %c5] : memref<32x8xf32, #tpu.memory_space<smem>>
    %c8_24 = arith.constant 8 : index
    %c1_25 = arith.constant 1 : index
    %33 = memref.load %arg3[%c8_24, %c1_25] : memref<32x8xf32, #tpu.memory_space<smem>>
    %34 = arith.addf %31, %33 : f32
    %c8_26 = arith.constant 8 : index
    %c5_27 = arith.constant 5 : index
    %35 = memref.load %arg3[%c8_26, %c5_27] : memref<32x8xf32, #tpu.memory_space<smem>>
    %36 = arith.addf %32, %35 : f32
    %c16_28 = arith.constant 16 : index
    %c1_29 = arith.constant 1 : index
    %37 = memref.load %arg3[%c16_28, %c1_29] : memref<32x8xf32, #tpu.memory_space<smem>>
    %38 = arith.addf %34, %37 : f32
    %c16_30 = arith.constant 16 : index
    %c5_31 = arith.constant 5 : index
    %39 = memref.load %arg3[%c16_30, %c5_31] : memref<32x8xf32, #tpu.memory_space<smem>>
    %40 = arith.addf %36, %39 : f32
    %c24_32 = arith.constant 24 : index
    %c1_33 = arith.constant 1 : index
    %41 = memref.load %arg3[%c24_32, %c1_33] : memref<32x8xf32, #tpu.memory_space<smem>>
    %42 = arith.addf %38, %41 : f32
    %c24_34 = arith.constant 24 : index
    %c5_35 = arith.constant 5 : index
    %43 = memref.load %arg3[%c24_34, %c5_35] : memref<32x8xf32, #tpu.memory_space<smem>>
    %44 = arith.addf %40, %43 : f32
    %cst_36 = arith.constant 0.001953125 : f32
    %45 = arith.mulf %42, %cst_36 : f32
    %cst_37 = arith.constant 0.001953125 : f32
    %46 = arith.mulf %44, %cst_37 : f32
    %47 = arith.mulf %45, %45 : f32
    %48 = arith.subf %46, %47 : f32
    %c0_38 = arith.constant 0 : index
    %c1_39 = arith.constant 1 : index
    %c0_40 = arith.constant 0 : index
    %c0_41 = arith.constant 0 : index
    %49 = vector.load %arg2[%c0_38, %c1_39, %c0_40, %c0_41] : memref<1x4x8x16xf32, #tpu.memory_space<vmem>>, vector<1x1x8x16xf32>
    %50 = vector.shape_cast %49 : vector<1x1x8x16xf32> to vector<8x16xf32>
    %51 = vector.broadcast %45 : f32 to vector<8x16xf32>
    %52 = arith.subf %50, %51 : vector<8x16xf32>
    %cst_42 = arith.constant 9.99999974E-6 : f32
    %53 = arith.addf %48, %cst_42 : f32
    %cst_43 = arith.constant 0.000000e+00 : f32
    %54 = vector.broadcast %cst_43 : f32 to vector<8x16xf32>
    %55 = vector.broadcast %53 : f32 to vector<8x16xf32>
    %56 = arith.addf %55, %54 : vector<8x16xf32>
    %57 = math.rsqrt %56 : vector<8x16xf32>
    %58 = arith.mulf %52, %57 : vector<8x16xf32>
    %c0_44 = arith.constant 0 : index
    %c1_45 = arith.constant 1 : index
    %c0_46 = arith.constant 0 : index
    %c0_47 = arith.constant 0 : index
    %59 = vector.load %arg4[%c0_44, %c1_45, %c0_46, %c0_47] : memref<1x4x8x16xf32, #tpu.memory_space<vmem>>, vector<1x1x8x16xf32>
    %60 = vector.shape_cast %59 : vector<1x1x8x16xf32> to vector<8x16xf32>
    %61 = vector.shape_cast %58 : vector<8x16xf32> to vector<1x1x8x16xf32>
    tpu.vector_store %arg4[%c0_44, %c1_45, %c0_46, %c0_47], %61 {strides = array<i32>} : memref<1x4x8x16xf32, #tpu.memory_space<vmem>>, vector<1x1x8x16xf32>,
    %c0_48 = arith.constant 0 : index
    %c2 = arith.constant 2 : index
    %62 = memref.load %arg3[%c0_48, %c2] : memref<32x8xf32, #tpu.memory_space<smem>>
    %c0_49 = arith.constant 0 : index
    %c6 = arith.constant 6 : index
    %63 = memref.load %arg3[%c0_49, %c6] : memref<32x8xf32, #tpu.memory_space<smem>>
    %c8_50 = arith.constant 8 : index
    %c2_51 = arith.constant 2 : index
    %64 = memref.load %arg3[%c8_50, %c2_51] : memref<32x8xf32, #tpu.memory_space<smem>>
    %65 = arith.addf %62, %64 : f32
    %c8_52 = arith.constant 8 : index
    %c6_53 = arith.constant 6 : index
    %66 = memref.load %arg3[%c8_52, %c6_53] : memref<32x8xf32, #tpu.memory_space<smem>>
    %67 = arith.addf %63, %66 : f32
    %c16_54 = arith.constant 16 : index
    %c2_55 = arith.constant 2 : index
    %68 = memref.load %arg3[%c16_54, %c2_55] : memref<32x8xf32, #tpu.memory_space<smem>>
    %69 = arith.addf %65, %68 : f32
    %c16_56 = arith.constant 16 : index
    %c6_57 = arith.constant 6 : index
    %70 = memref.load %arg3[%c16_56, %c6_57] : memref<32x8xf32, #tpu.memory_space<smem>>
    %71 = arith.addf %67, %70 : f32
    %c24_58 = arith.constant 24 : index
    %c2_59 = arith.constant 2 : index
    %72 = memref.load %arg3[%c24_58, %c2_59] : memref<32x8xf32, #tpu.memory_space<smem>>
    %73 = arith.addf %69, %72 : f32
    %c24_60 = arith.constant 24 : index
    %c6_61 = arith.constant 6 : index
    %74 = memref.load %arg3[%c24_60, %c6_61] : memref<32x8xf32, #tpu.memory_space<smem>>
    %75 = arith.addf %71, %74 : f32
    %cst_62 = arith.constant 0.001953125 : f32
    %76 = arith.mulf %73, %cst_62 : f32
    %cst_63 = arith.constant 0.001953125 : f32
    %77 = arith.mulf %75, %cst_63 : f32
    %78 = arith.mulf %76, %76 : f32
    %79 = arith.subf %77, %78 : f32
    %c0_64 = arith.constant 0 : index
    %c2_65 = arith.constant 2 : index
    %c0_66 = arith.constant 0 : index
    %c0_67 = arith.constant 0 : index
    %80 = vector.load %arg2[%c0_64, %c2_65, %c0_66, %c0_67] : memref<1x4x8x16xf32, #tpu.memory_space<vmem>>, vector<1x1x8x16xf32>
    %81 = vector.shape_cast %80 : vector<1x1x8x16xf32> to vector<8x16xf32>
    %82 = vector.broadcast %76 : f32 to vector<8x16xf32>
    %83 = arith.subf %81, %82 : vector<8x16xf32>
    %cst_68 = arith.constant 9.99999974E-6 : f32
    %84 = arith.addf %79, %cst_68 : f32
    %cst_69 = arith.constant 0.000000e+00 : f32
    %85 = vector.broadcast %cst_69 : f32 to vector<8x16xf32>
    %86 = vector.broadcast %84 : f32 to vector<8x16xf32>
    %87 = arith.addf %86, %85 : vector<8x16xf32>
    %88 = math.rsqrt %87 : vector<8x16xf32>
    %89 = arith.mulf %83, %88 : vector<8x16xf32>
    %c0_70 = arith.constant 0 : index
    %c2_71 = arith.constant 2 : index
    %c0_72 = arith.constant 0 : index
    %c0_73 = arith.constant 0 : index
    %90 = vector.load %arg4[%c0_70, %c2_71, %c0_72, %c0_73] : memref<1x4x8x16xf32, #tpu.memory_space<vmem>>, vector<1x1x8x16xf32>
    %91 = vector.shape_cast %90 : vector<1x1x8x16xf32> to vector<8x16xf32>
    %92 = vector.shape_cast %89 : vector<8x16xf32> to vector<1x1x8x16xf32>
    tpu.vector_store %arg4[%c0_70, %c2_71, %c0_72, %c0_73], %92 {strides = array<i32>} : memref<1x4x8x16xf32, #tpu.memory_space<vmem>>, vector<1x1x8x16xf32>,
    %c0_74 = arith.constant 0 : index
    %c3 = arith.constant 3 : index
    %93 = memref.load %arg3[%c0_74, %c3] : memref<32x8xf32, #tpu.memory_space<smem>>
    %c0_75 = arith.constant 0 : index
    %c7 = arith.constant 7 : index
    %94 = memref.load %arg3[%c0_75, %c7] : memref<32x8xf32, #tpu.memory_space<smem>>
    %c8_76 = arith.constant 8 : index
    %c3_77 = arith.constant 3 : index
    %95 = memref.load %arg3[%c8_76, %c3_77] : memref<32x8xf32, #tpu.memory_space<smem>>
    %96 = arith.addf %93, %95 : f32
    %c8_78 = arith.constant 8 : index
    %c7_79 = arith.constant 7 : index
    %97 = memref.load %arg3[%c8_78, %c7_79] : memref<32x8xf32, #tpu.memory_space<smem>>
    %98 = arith.addf %94, %97 : f32
    %c16_80 = arith.constant 16 : index
    %c3_81 = arith.constant 3 : index
    %99 = memref.load %arg3[%c16_80, %c3_81] : memref<32x8xf32, #tpu.memory_space<smem>>
    %100 = arith.addf %96, %99 : f32
    %c16_82 = arith.constant 16 : index
    %c7_83 = arith.constant 7 : index
    %101 = memref.load %arg3[%c16_82, %c7_83] : memref<32x8xf32, #tpu.memory_space<smem>>
    %102 = arith.addf %98, %101 : f32
    %c24_84 = arith.constant 24 : index
    %c3_85 = arith.constant 3 : index
    %103 = memref.load %arg3[%c24_84, %c3_85] : memref<32x8xf32, #tpu.memory_space<smem>>
    %104 = arith.addf %100, %103 : f32
    %c24_86 = arith.constant 24 : index
    %c7_87 = arith.constant 7 : index
    %105 = memref.load %arg3[%c24_86, %c7_87] : memref<32x8xf32, #tpu.memory_space<smem>>
    %106 = arith.addf %102, %105 : f32
    %cst_88 = arith.constant 0.001953125 : f32
    %107 = arith.mulf %104, %cst_88 : f32
    %cst_89 = arith.constant 0.001953125 : f32
    %108 = arith.mulf %106, %cst_89 : f32
    %109 = arith.mulf %107, %107 : f32
    %110 = arith.subf %108, %109 : f32
    %c0_90 = arith.constant 0 : index
    %c3_91 = arith.constant 3 : index
    %c0_92 = arith.constant 0 : index
    %c0_93 = arith.constant 0 : index
    %111 = vector.load %arg2[%c0_90, %c3_91, %c0_92, %c0_93] : memref<1x4x8x16xf32, #tpu.memory_space<vmem>>, vector<1x1x8x16xf32>
    %112 = vector.shape_cast %111 : vector<1x1x8x16xf32> to vector<8x16xf32>
    %113 = vector.broadcast %107 : f32 to vector<8x16xf32>
    %114 = arith.subf %112, %113 : vector<8x16xf32>
    %cst_94 = arith.constant 9.99999974E-6 : f32
    %115 = arith.addf %110, %cst_94 : f32
    %cst_95 = arith.constant 0.000000e+00 : f32
    %116 = vector.broadcast %cst_95 : f32 to vector<8x16xf32>
    %117 = vector.broadcast %115 : f32 to vector<8x16xf32>
    %118 = arith.addf %117, %116 : vector<8x16xf32>
    %119 = math.rsqrt %118 : vector<8x16xf32>
    %120 = arith.mulf %114, %119 : vector<8x16xf32>
    %c0_96 = arith.constant 0 : index
    %c3_97 = arith.constant 3 : index
    %c0_98 = arith.constant 0 : index
    %c0_99 = arith.constant 0 : index
    %121 = vector.load %arg4[%c0_96, %c3_97, %c0_98, %c0_99] : memref<1x4x8x16xf32, #tpu.memory_space<vmem>>, vector<1x1x8x16xf32>
    %122 = vector.shape_cast %121 : vector<1x1x8x16xf32> to vector<8x16xf32>
    %123 = vector.shape_cast %120 : vector<8x16xf32> to vector<1x1x8x16xf32>
    tpu.vector_store %arg4[%c0_96, %c3_97, %c0_98, %c0_99], %123 {strides = array<i32>} : memref<1x4x8x16xf32, #tpu.memory_space<vmem>>, vector<1x1x8x16xf32>,
    return
  }
  func.func @transform_0(%arg0: i32, %arg1: i32) -> (i32, i32, i32, i32) {
    %c0_i32 = arith.constant 0 : i32
    %c0_i32_0 = arith.constant 0 : i32
    %c0_i32_1 = arith.constant 0 : i32
    return %arg0, %c0_i32, %arg1, %c0_i32_0 : i32, i32, i32, i32
  }
  func.func @transform_1(%arg0: i32, %arg1: i32) -> (i32, i32) {
    %c0_i32 = arith.constant 0 : i32
    %c0_i32_0 = arith.constant 0 : i32
    %c0_i32_1 = arith.constant 0 : i32
    return %c0_i32, %c0_i32_0 : i32, i32
  }
  func.func @transform_2(%arg0: i32, %arg1: i32) -> (i32, i32, i32, i32) {
    %c0_i32 = arith.constant 0 : i32
    %c0_i32_0 = arith.constant 0 : i32
    %c0_i32_1 = arith.constant 0 : i32
    return %arg0, %c0_i32, %arg1, %c0_i32_0 : i32, i32, i32, i32
  }
}

module attributes {stable_mosaic.version = 11 : i64} {
  func.func @kernel(%arg0: i32, %arg1: i32, %arg2: memref<1x4x8x16xf32, #tpu.memory_space<vmem>>, %arg3: memref<1x8x8xf32, #tpu.memory_space<vmem>>, %arg4: memref<8x8xf32, #tpu.memory_space<vmem>>, %arg5: memref<8x16xf32, #tpu.memory_space<vmem>>, %arg6: memref<4x4xf32, #tpu.memory_space<smem>>, %arg7: memref<4xf32, #tpu.memory_space<smem>>, %arg8: memref<1x8x16xf32, #tpu.memory_space<vmem>>, %arg9: memref<1x4x8x16xf32, #tpu.memory_space<vmem>>, %arg10: memref<8x8xf32, #tpu.memory_space<vmem>>) attributes {dimension_semantics = [#tpu.dimension_semantics<parallel>, #tpu.dimension_semantics<parallel>], iteration_bounds = array<i64: 2, 2>, scalar_prefetch = 0 : i64, scratch_operands = 0 : i64, tpu.core_type = #tpu.core_type<tc>, window_params = [{transform_indices = @transform_0, window_bounds = array<i64: 1, 4, 8, 16>}, {transform_indices = @transform_1, window_bounds = array<i64: 1, 8, 8>}, {transform_indices = @transform_2, window_bounds = array<i64: 8, 8>}, {pipeline_mode = #tpu.pipeline_mode<synchronous>, transform_indices = @transform_3, window_bounds = array<i64: 8, 16>}, {transform_indices = @transform_4, window_bounds = array<i64: 4, 4>}, {transform_indices = @transform_5, window_bounds = array<i64: 4>}, {transform_indices = @transform_6, window_bounds = array<i64: 1, 8, 16>}, {transform_indices = @transform_7, window_bounds = array<i64: 1, 4, 8, 16>}, {transform_indices = @transform_8, window_bounds = array<i64: 8, 8>}]} {
    %c0 = arith.constant 0 : index
    %c0_0 = arith.constant 0 : index
    %0 = vector.load %arg4[%c0, %c0_0] : memref<8x8xf32, #tpu.memory_space<vmem>>, vector<8x8xf32>
    %c0_1 = arith.constant 0 : index
    %c0_2 = arith.constant 0 : index
    %c0_3 = arith.constant 0 : index
    %1 = vector.load %arg3[%c0_1, %c0_2, %c0_3] : memref<1x8x8xf32, #tpu.memory_space<vmem>>, vector<1x8x8xf32>
    %2 = vector.shape_cast %1 : vector<1x8x8xf32> to vector<8x8xf32>
    %cst = arith.constant dense<0.000000e+00> : vector<8x8xf32>
    %3 = tpu.matmul %0, %2, %cst {dimension_numbers = #tpu.dot_dimension_numbers<[1], [0], [0], [1], [0, 0, 1, 1], [], []>} : vector<8x8xf32>, vector<8x8xf32>, vector<8x8xf32> -> vector<8x8xf32>
    %c0_4 = arith.constant 0 : index
    %c0_5 = arith.constant 0 : index
    %4 = vector.load %arg5[%c0_4, %c0_5] : memref<8x16xf32, #tpu.memory_space<vmem>>, vector<8x16xf32>
    %cst_6 = arith.constant dense<0.000000e+00> : vector<8x16xf32>
    %5 = tpu.matmul %3, %4, %cst_6 {dimension_numbers = #tpu.dot_dimension_numbers<[1], [0], [0], [1], [0, 0, 1, 1], [], []>} : vector<8x8xf32>, vector<8x16xf32>, vector<8x16xf32> -> vector<8x16xf32>
    %c0_7 = arith.constant 0 : index
    %c0_8 = arith.constant 0 : index
    %c0_9 = arith.constant 0 : index
    %6 = vector.load %arg8[%c0_7, %c0_8, %c0_9] : memref<1x8x16xf32, #tpu.memory_space<vmem>>, vector<1x8x16xf32>
    %7 = vector.shape_cast %6 : vector<1x8x16xf32> to vector<8x16xf32>
    %8 = vector.shape_cast %5 : vector<8x16xf32> to vector<1x8x16xf32>
    tpu.vector_store %arg8[%c0_7, %c0_8, %c0_9], %8 {strides = array<i32>} : memref<1x8x16xf32, #tpu.memory_space<vmem>>, vector<1x8x16xf32>,
    %c0_10 = arith.constant 0 : index
    %c0_11 = arith.constant 0 : index
    %c0_12 = arith.constant 0 : index
    %c0_13 = arith.constant 0 : index
    %9 = vector.load %arg2[%c0_10, %c0_11, %c0_12, %c0_13] : memref<1x4x8x16xf32, #tpu.memory_space<vmem>>, vector<1x1x8x16xf32>
    %10 = vector.shape_cast %9 : vector<1x1x8x16xf32> to vector<8x16xf32>
    %11 = arith.mulf %10, %5 : vector<8x16xf32>
    %c0_14 = arith.constant 0 : index
    %c1 = arith.constant 1 : index
    %c0_15 = arith.constant 0 : index
    %c0_16 = arith.constant 0 : index
    %12 = vector.load %arg2[%c0_14, %c1, %c0_15, %c0_16] : memref<1x4x8x16xf32, #tpu.memory_space<vmem>>, vector<1x1x8x16xf32>
    %13 = vector.shape_cast %12 : vector<1x1x8x16xf32> to vector<8x16xf32>
    %14 = arith.mulf %13, %5 : vector<8x16xf32>
    %c0_17 = arith.constant 0 : index
    %c2 = arith.constant 2 : index
    %c0_18 = arith.constant 0 : index
    %c0_19 = arith.constant 0 : index
    %15 = vector.load %arg2[%c0_17, %c2, %c0_18, %c0_19] : memref<1x4x8x16xf32, #tpu.memory_space<vmem>>, vector<1x1x8x16xf32>
    %16 = vector.shape_cast %15 : vector<1x1x8x16xf32> to vector<8x16xf32>
    %17 = arith.mulf %16, %5 : vector<8x16xf32>
    %c0_20 = arith.constant 0 : index
    %c3 = arith.constant 3 : index
    %c0_21 = arith.constant 0 : index
    %c0_22 = arith.constant 0 : index
    %18 = vector.load %arg2[%c0_20, %c3, %c0_21, %c0_22] : memref<1x4x8x16xf32, #tpu.memory_space<vmem>>, vector<1x1x8x16xf32>
    %19 = vector.shape_cast %18 : vector<1x1x8x16xf32> to vector<8x16xf32>
    %20 = arith.mulf %19, %5 : vector<8x16xf32>
    %21 = tpu.iota {dimensions = array<i32: 0>} : vector<8x8xi32>
    %22 = tpu.iota {dimensions = array<i32: 1>} : vector<8x8xi32>
    %cst_23 = arith.constant 0.000000e+00 : f32
    %23 = vector.broadcast %cst_23 : f32 to vector<8x8xf32>
    %c0_24 = arith.constant 0 : index
    %c0_25 = arith.constant 0 : index
    %24 = memref.load %arg6[%c0_24, %c0_25] : memref<4x4xf32, #tpu.memory_space<smem>>
    %25 = vector.broadcast %24 : f32 to vector<8x16xf32>
    %26 = arith.mulf %11, %25 : vector<8x16xf32>
    %c0_26 = arith.constant 0 : index
    %c1_27 = arith.constant 1 : index
    %27 = memref.load %arg6[%c0_26, %c1_27] : memref<4x4xf32, #tpu.memory_space<smem>>
    %28 = vector.broadcast %27 : f32 to vector<8x16xf32>
    %29 = arith.mulf %14, %28 : vector<8x16xf32>
    %30 = arith.addf %26, %29 : vector<8x16xf32>
    %c0_28 = arith.constant 0 : index
    %c2_29 = arith.constant 2 : index
    %31 = memref.load %arg6[%c0_28, %c2_29] : memref<4x4xf32, #tpu.memory_space<smem>>
    %32 = vector.broadcast %31 : f32 to vector<8x16xf32>
    %33 = arith.mulf %17, %32 : vector<8x16xf32>
    %34 = arith.addf %30, %33 : vector<8x16xf32>
    %c0_30 = arith.constant 0 : index
    %c3_31 = arith.constant 3 : index
    %35 = memref.load %arg6[%c0_30, %c3_31] : memref<4x4xf32, #tpu.memory_space<smem>>
    %36 = vector.broadcast %35 : f32 to vector<8x16xf32>
    %37 = arith.mulf %20, %36 : vector<8x16xf32>
    %38 = arith.addf %34, %37 : vector<8x16xf32>
    %c0_32 = arith.constant 0 : index
    %39 = memref.load %arg7[%c0_32] : memref<4xf32, #tpu.memory_space<smem>>
    %40 = vector.broadcast %39 : f32 to vector<8x16xf32>
    %41 = arith.addf %38, %40 : vector<8x16xf32>
    %c0_33 = arith.constant 0 : index
    %c0_34 = arith.constant 0 : index
    %c0_35 = arith.constant 0 : index
    %c0_36 = arith.constant 0 : index
    %42 = vector.load %arg9[%c0_33, %c0_34, %c0_35, %c0_36] : memref<1x4x8x16xf32, #tpu.memory_space<vmem>>, vector<1x1x8x16xf32>
    %43 = vector.shape_cast %42 : vector<1x1x8x16xf32> to vector<8x16xf32>
    %44 = vector.shape_cast %41 : vector<8x16xf32> to vector<1x1x8x16xf32>
    tpu.vector_store %arg9[%c0_33, %c0_34, %c0_35, %c0_36], %44 {strides = array<i32>} : memref<1x4x8x16xf32, #tpu.memory_space<vmem>>, vector<1x1x8x16xf32>,
    %cst_37 = arith.constant dense<0.000000e+00> : vector<8xf32>
    %45 = vector.multi_reduction <add>, %41, %cst_37 [1] : vector<8x16xf32> to vector<8xf32>
    %46 = vector.shape_cast %45 : vector<8xf32> to vector<8x1xf32>
    %cst_38 = arith.constant dense<0.000000e+00> : vector<1xf32>
    %47 = vector.multi_reduction <add>, %46, %cst_38 [0] : vector<8x1xf32> to vector<1xf32>
    %48 = vector.shape_cast %47 : vector<1xf32> to vector<1x1xf32>
    %49 = arith.mulf %41, %41 : vector<8x16xf32>
    %cst_39 = arith.constant dense<0.000000e+00> : vector<8xf32>
    %50 = vector.multi_reduction <add>, %49, %cst_39 [1] : vector<8x16xf32> to vector<8xf32>
    %51 = vector.shape_cast %50 : vector<8xf32> to vector<8x1xf32>
    %cst_40 = arith.constant dense<0.000000e+00> : vector<1xf32>
    %52 = vector.multi_reduction <add>, %51, %cst_40 [0] : vector<8x1xf32> to vector<1xf32>
    %53 = vector.shape_cast %52 : vector<1xf32> to vector<1x1xf32>
    %c0_i32 = arith.constant 0 : i32
    %54 = vector.broadcast %c0_i32 : i32 to vector<8x8xi32>
    %55 = arith.cmpi eq, %21, %54 : vector<8x8xi32>
    %c0_i32_41 = arith.constant 0 : i32
    %56 = vector.broadcast %c0_i32_41 : i32 to vector<8x8xi32>
    %57 = arith.cmpi eq, %22, %56 : vector<8x8xi32>
    %58 = arith.andi %55, %57 : vector<8x8xi1>
    %cst_42 = arith.constant 0.000000e+00 : f32
    %59 = vector.shape_cast %48 : vector<1x1xf32> to vector<1x1xf32>
    %60 = vector.broadcast %59 : vector<1x1xf32> to vector<8x8xf32>
    %61 = vector.broadcast %cst_42 : f32 to vector<8x8xf32>
    %62 = arith.select %58, %60, %61 : vector<8x8xi1>, vector<8x8xf32>
    %63 = arith.addf %23, %62 : vector<8x8xf32>
    %c0_i32_43 = arith.constant 0 : i32
    %64 = vector.broadcast %c0_i32_43 : i32 to vector<8x8xi32>
    %65 = arith.cmpi eq, %21, %64 : vector<8x8xi32>
    %c4_i32 = arith.constant 4 : i32
    %66 = vector.broadcast %c4_i32 : i32 to vector<8x8xi32>
    %67 = arith.cmpi eq, %22, %66 : vector<8x8xi32>
    %68 = arith.andi %65, %67 : vector<8x8xi1>
    %cst_44 = arith.constant 0.000000e+00 : f32
    %69 = vector.shape_cast %53 : vector<1x1xf32> to vector<1x1xf32>
    %70 = vector.broadcast %69 : vector<1x1xf32> to vector<8x8xf32>
    %71 = vector.broadcast %cst_44 : f32 to vector<8x8xf32>
    %72 = arith.select %68, %70, %71 : vector<8x8xi1>, vector<8x8xf32>
    %73 = arith.addf %63, %72 : vector<8x8xf32>
    %c1_45 = arith.constant 1 : index
    %c0_46 = arith.constant 0 : index
    %74 = memref.load %arg6[%c1_45, %c0_46] : memref<4x4xf32, #tpu.memory_space<smem>>
    %75 = vector.broadcast %74 : f32 to vector<8x16xf32>
    %76 = arith.mulf %11, %75 : vector<8x16xf32>
    %c1_47 = arith.constant 1 : index
    %c1_48 = arith.constant 1 : index
    %77 = memref.load %arg6[%c1_47, %c1_48] : memref<4x4xf32, #tpu.memory_space<smem>>
    %78 = vector.broadcast %77 : f32 to vector<8x16xf32>
    %79 = arith.mulf %14, %78 : vector<8x16xf32>
    %80 = arith.addf %76, %79 : vector<8x16xf32>
    %c1_49 = arith.constant 1 : index
    %c2_50 = arith.constant 2 : index
    %81 = memref.load %arg6[%c1_49, %c2_50] : memref<4x4xf32, #tpu.memory_space<smem>>
    %82 = vector.broadcast %81 : f32 to vector<8x16xf32>
    %83 = arith.mulf %17, %82 : vector<8x16xf32>
    %84 = arith.addf %80, %83 : vector<8x16xf32>
    %c1_51 = arith.constant 1 : index
    %c3_52 = arith.constant 3 : index
    %85 = memref.load %arg6[%c1_51, %c3_52] : memref<4x4xf32, #tpu.memory_space<smem>>
    %86 = vector.broadcast %85 : f32 to vector<8x16xf32>
    %87 = arith.mulf %20, %86 : vector<8x16xf32>
    %88 = arith.addf %84, %87 : vector<8x16xf32>
    %c1_53 = arith.constant 1 : index
    %89 = memref.load %arg7[%c1_53] : memref<4xf32, #tpu.memory_space<smem>>
    %90 = vector.broadcast %89 : f32 to vector<8x16xf32>
    %91 = arith.addf %88, %90 : vector<8x16xf32>
    %c0_54 = arith.constant 0 : index
    %c1_55 = arith.constant 1 : index
    %c0_56 = arith.constant 0 : index
    %c0_57 = arith.constant 0 : index
    %92 = vector.load %arg9[%c0_54, %c1_55, %c0_56, %c0_57] : memref<1x4x8x16xf32, #tpu.memory_space<vmem>>, vector<1x1x8x16xf32>
    %93 = vector.shape_cast %92 : vector<1x1x8x16xf32> to vector<8x16xf32>
    %94 = vector.shape_cast %91 : vector<8x16xf32> to vector<1x1x8x16xf32>
    tpu.vector_store %arg9[%c0_54, %c1_55, %c0_56, %c0_57], %94 {strides = array<i32>} : memref<1x4x8x16xf32, #tpu.memory_space<vmem>>, vector<1x1x8x16xf32>,
    %cst_58 = arith.constant dense<0.000000e+00> : vector<8xf32>
    %95 = vector.multi_reduction <add>, %91, %cst_58 [1] : vector<8x16xf32> to vector<8xf32>
    %96 = vector.shape_cast %95 : vector<8xf32> to vector<8x1xf32>
    %cst_59 = arith.constant dense<0.000000e+00> : vector<1xf32>
    %97 = vector.multi_reduction <add>, %96, %cst_59 [0] : vector<8x1xf32> to vector<1xf32>
    %98 = vector.shape_cast %97 : vector<1xf32> to vector<1x1xf32>
    %99 = arith.mulf %91, %91 : vector<8x16xf32>
    %cst_60 = arith.constant dense<0.000000e+00> : vector<8xf32>
    %100 = vector.multi_reduction <add>, %99, %cst_60 [1] : vector<8x16xf32> to vector<8xf32>
    %101 = vector.shape_cast %100 : vector<8xf32> to vector<8x1xf32>
    %cst_61 = arith.constant dense<0.000000e+00> : vector<1xf32>
    %102 = vector.multi_reduction <add>, %101, %cst_61 [0] : vector<8x1xf32> to vector<1xf32>
    %103 = vector.shape_cast %102 : vector<1xf32> to vector<1x1xf32>
    %c0_i32_62 = arith.constant 0 : i32
    %104 = vector.broadcast %c0_i32_62 : i32 to vector<8x8xi32>
    %105 = arith.cmpi eq, %21, %104 : vector<8x8xi32>
    %c1_i32 = arith.constant 1 : i32
    %106 = vector.broadcast %c1_i32 : i32 to vector<8x8xi32>
    %107 = arith.cmpi eq, %22, %106 : vector<8x8xi32>
    %108 = arith.andi %105, %107 : vector<8x8xi1>
    %cst_63 = arith.constant 0.000000e+00 : f32
    %109 = vector.shape_cast %98 : vector<1x1xf32> to vector<1x1xf32>
    %110 = vector.broadcast %109 : vector<1x1xf32> to vector<8x8xf32>
    %111 = vector.broadcast %cst_63 : f32 to vector<8x8xf32>
    %112 = arith.select %108, %110, %111 : vector<8x8xi1>, vector<8x8xf32>
    %113 = arith.addf %73, %112 : vector<8x8xf32>
    %c0_i32_64 = arith.constant 0 : i32
    %114 = vector.broadcast %c0_i32_64 : i32 to vector<8x8xi32>
    %115 = arith.cmpi eq, %21, %114 : vector<8x8xi32>
    %c5_i32 = arith.constant 5 : i32
    %116 = vector.broadcast %c5_i32 : i32 to vector<8x8xi32>
    %117 = arith.cmpi eq, %22, %116 : vector<8x8xi32>
    %118 = arith.andi %115, %117 : vector<8x8xi1>
    %cst_65 = arith.constant 0.000000e+00 : f32
    %119 = vector.shape_cast %103 : vector<1x1xf32> to vector<1x1xf32>
    %120 = vector.broadcast %119 : vector<1x1xf32> to vector<8x8xf32>
    %121 = vector.broadcast %cst_65 : f32 to vector<8x8xf32>
    %122 = arith.select %118, %120, %121 : vector<8x8xi1>, vector<8x8xf32>
    %123 = arith.addf %113, %122 : vector<8x8xf32>
    %c2_66 = arith.constant 2 : index
    %c0_67 = arith.constant 0 : index
    %124 = memref.load %arg6[%c2_66, %c0_67] : memref<4x4xf32, #tpu.memory_space<smem>>
    %125 = vector.broadcast %124 : f32 to vector<8x16xf32>
    %126 = arith.mulf %11, %125 : vector<8x16xf32>
    %c2_68 = arith.constant 2 : index
    %c1_69 = arith.constant 1 : index
    %127 = memref.load %arg6[%c2_68, %c1_69] : memref<4x4xf32, #tpu.memory_space<smem>>
    %128 = vector.broadcast %127 : f32 to vector<8x16xf32>
    %129 = arith.mulf %14, %128 : vector<8x16xf32>
    %130 = arith.addf %126, %129 : vector<8x16xf32>
    %c2_70 = arith.constant 2 : index
    %c2_71 = arith.constant 2 : index
    %131 = memref.load %arg6[%c2_70, %c2_71] : memref<4x4xf32, #tpu.memory_space<smem>>
    %132 = vector.broadcast %131 : f32 to vector<8x16xf32>
    %133 = arith.mulf %17, %132 : vector<8x16xf32>
    %134 = arith.addf %130, %133 : vector<8x16xf32>
    %c2_72 = arith.constant 2 : index
    %c3_73 = arith.constant 3 : index
    %135 = memref.load %arg6[%c2_72, %c3_73] : memref<4x4xf32, #tpu.memory_space<smem>>
    %136 = vector.broadcast %135 : f32 to vector<8x16xf32>
    %137 = arith.mulf %20, %136 : vector<8x16xf32>
    %138 = arith.addf %134, %137 : vector<8x16xf32>
    %c2_74 = arith.constant 2 : index
    %139 = memref.load %arg7[%c2_74] : memref<4xf32, #tpu.memory_space<smem>>
    %140 = vector.broadcast %139 : f32 to vector<8x16xf32>
    %141 = arith.addf %138, %140 : vector<8x16xf32>
    %c0_75 = arith.constant 0 : index
    %c2_76 = arith.constant 2 : index
    %c0_77 = arith.constant 0 : index
    %c0_78 = arith.constant 0 : index
    %142 = vector.load %arg9[%c0_75, %c2_76, %c0_77, %c0_78] : memref<1x4x8x16xf32, #tpu.memory_space<vmem>>, vector<1x1x8x16xf32>
    %143 = vector.shape_cast %142 : vector<1x1x8x16xf32> to vector<8x16xf32>
    %144 = vector.shape_cast %141 : vector<8x16xf32> to vector<1x1x8x16xf32>
    tpu.vector_store %arg9[%c0_75, %c2_76, %c0_77, %c0_78], %144 {strides = array<i32>} : memref<1x4x8x16xf32, #tpu.memory_space<vmem>>, vector<1x1x8x16xf32>,
    %cst_79 = arith.constant dense<0.000000e+00> : vector<8xf32>
    %145 = vector.multi_reduction <add>, %141, %cst_79 [1] : vector<8x16xf32> to vector<8xf32>
    %146 = vector.shape_cast %145 : vector<8xf32> to vector<8x1xf32>
    %cst_80 = arith.constant dense<0.000000e+00> : vector<1xf32>
    %147 = vector.multi_reduction <add>, %146, %cst_80 [0] : vector<8x1xf32> to vector<1xf32>
    %148 = vector.shape_cast %147 : vector<1xf32> to vector<1x1xf32>
    %149 = arith.mulf %141, %141 : vector<8x16xf32>
    %cst_81 = arith.constant dense<0.000000e+00> : vector<8xf32>
    %150 = vector.multi_reduction <add>, %149, %cst_81 [1] : vector<8x16xf32> to vector<8xf32>
    %151 = vector.shape_cast %150 : vector<8xf32> to vector<8x1xf32>
    %cst_82 = arith.constant dense<0.000000e+00> : vector<1xf32>
    %152 = vector.multi_reduction <add>, %151, %cst_82 [0] : vector<8x1xf32> to vector<1xf32>
    %153 = vector.shape_cast %152 : vector<1xf32> to vector<1x1xf32>
    %c0_i32_83 = arith.constant 0 : i32
    %154 = vector.broadcast %c0_i32_83 : i32 to vector<8x8xi32>
    %155 = arith.cmpi eq, %21, %154 : vector<8x8xi32>
    %c2_i32 = arith.constant 2 : i32
    %156 = vector.broadcast %c2_i32 : i32 to vector<8x8xi32>
    %157 = arith.cmpi eq, %22, %156 : vector<8x8xi32>
    %158 = arith.andi %155, %157 : vector<8x8xi1>
    %cst_84 = arith.constant 0.000000e+00 : f32
    %159 = vector.shape_cast %148 : vector<1x1xf32> to vector<1x1xf32>
    %160 = vector.broadcast %159 : vector<1x1xf32> to vector<8x8xf32>
    %161 = vector.broadcast %cst_84 : f32 to vector<8x8xf32>
    %162 = arith.select %158, %160, %161 : vector<8x8xi1>, vector<8x8xf32>
    %163 = arith.addf %123, %162 : vector<8x8xf32>
    %c0_i32_85 = arith.constant 0 : i32
    %164 = vector.broadcast %c0_i32_85 : i32 to vector<8x8xi32>
    %165 = arith.cmpi eq, %21, %164 : vector<8x8xi32>
    %c6_i32 = arith.constant 6 : i32
    %166 = vector.broadcast %c6_i32 : i32 to vector<8x8xi32>
    %167 = arith.cmpi eq, %22, %166 : vector<8x8xi32>
    %168 = arith.andi %165, %167 : vector<8x8xi1>
    %cst_86 = arith.constant 0.000000e+00 : f32
    %169 = vector.shape_cast %153 : vector<1x1xf32> to vector<1x1xf32>
    %170 = vector.broadcast %169 : vector<1x1xf32> to vector<8x8xf32>
    %171 = vector.broadcast %cst_86 : f32 to vector<8x8xf32>
    %172 = arith.select %168, %170, %171 : vector<8x8xi1>, vector<8x8xf32>
    %173 = arith.addf %163, %172 : vector<8x8xf32>
    %c3_87 = arith.constant 3 : index
    %c0_88 = arith.constant 0 : index
    %174 = memref.load %arg6[%c3_87, %c0_88] : memref<4x4xf32, #tpu.memory_space<smem>>
    %175 = vector.broadcast %174 : f32 to vector<8x16xf32>
    %176 = arith.mulf %11, %175 : vector<8x16xf32>
    %c3_89 = arith.constant 3 : index
    %c1_90 = arith.constant 1 : index
    %177 = memref.load %arg6[%c3_89, %c1_90] : memref<4x4xf32, #tpu.memory_space<smem>>
    %178 = vector.broadcast %177 : f32 to vector<8x16xf32>
    %179 = arith.mulf %14, %178 : vector<8x16xf32>
    %180 = arith.addf %176, %179 : vector<8x16xf32>
    %c3_91 = arith.constant 3 : index
    %c2_92 = arith.constant 2 : index
    %181 = memref.load %arg6[%c3_91, %c2_92] : memref<4x4xf32, #tpu.memory_space<smem>>
    %182 = vector.broadcast %181 : f32 to vector<8x16xf32>
    %183 = arith.mulf %17, %182 : vector<8x16xf32>
    %184 = arith.addf %180, %183 : vector<8x16xf32>
    %c3_93 = arith.constant 3 : index
    %c3_94 = arith.constant 3 : index
    %185 = memref.load %arg6[%c3_93, %c3_94] : memref<4x4xf32, #tpu.memory_space<smem>>
    %186 = vector.broadcast %185 : f32 to vector<8x16xf32>
    %187 = arith.mulf %20, %186 : vector<8x16xf32>
    %188 = arith.addf %184, %187 : vector<8x16xf32>
    %c3_95 = arith.constant 3 : index
    %189 = memref.load %arg7[%c3_95] : memref<4xf32, #tpu.memory_space<smem>>
    %190 = vector.broadcast %189 : f32 to vector<8x16xf32>
    %191 = arith.addf %188, %190 : vector<8x16xf32>
    %c0_96 = arith.constant 0 : index
    %c3_97 = arith.constant 3 : index
    %c0_98 = arith.constant 0 : index
    %c0_99 = arith.constant 0 : index
    %192 = vector.load %arg9[%c0_96, %c3_97, %c0_98, %c0_99] : memref<1x4x8x16xf32, #tpu.memory_space<vmem>>, vector<1x1x8x16xf32>
    %193 = vector.shape_cast %192 : vector<1x1x8x16xf32> to vector<8x16xf32>
    %194 = vector.shape_cast %191 : vector<8x16xf32> to vector<1x1x8x16xf32>
    tpu.vector_store %arg9[%c0_96, %c3_97, %c0_98, %c0_99], %194 {strides = array<i32>} : memref<1x4x8x16xf32, #tpu.memory_space<vmem>>, vector<1x1x8x16xf32>,
    %cst_100 = arith.constant dense<0.000000e+00> : vector<8xf32>
    %195 = vector.multi_reduction <add>, %191, %cst_100 [1] : vector<8x16xf32> to vector<8xf32>
    %196 = vector.shape_cast %195 : vector<8xf32> to vector<8x1xf32>
    %cst_101 = arith.constant dense<0.000000e+00> : vector<1xf32>
    %197 = vector.multi_reduction <add>, %196, %cst_101 [0] : vector<8x1xf32> to vector<1xf32>
    %198 = vector.shape_cast %197 : vector<1xf32> to vector<1x1xf32>
    %199 = arith.mulf %191, %191 : vector<8x16xf32>
    %cst_102 = arith.constant dense<0.000000e+00> : vector<8xf32>
    %200 = vector.multi_reduction <add>, %199, %cst_102 [1] : vector<8x16xf32> to vector<8xf32>
    %201 = vector.shape_cast %200 : vector<8xf32> to vector<8x1xf32>
    %cst_103 = arith.constant dense<0.000000e+00> : vector<1xf32>
    %202 = vector.multi_reduction <add>, %201, %cst_103 [0] : vector<8x1xf32> to vector<1xf32>
    %203 = vector.shape_cast %202 : vector<1xf32> to vector<1x1xf32>
    %c0_i32_104 = arith.constant 0 : i32
    %204 = vector.broadcast %c0_i32_104 : i32 to vector<8x8xi32>
    %205 = arith.cmpi eq, %21, %204 : vector<8x8xi32>
    %c3_i32 = arith.constant 3 : i32
    %206 = vector.broadcast %c3_i32 : i32 to vector<8x8xi32>
    %207 = arith.cmpi eq, %22, %206 : vector<8x8xi32>
    %208 = arith.andi %205, %207 : vector<8x8xi1>
    %cst_105 = arith.constant 0.000000e+00 : f32
    %209 = vector.shape_cast %198 : vector<1x1xf32> to vector<1x1xf32>
    %210 = vector.broadcast %209 : vector<1x1xf32> to vector<8x8xf32>
    %211 = vector.broadcast %cst_105 : f32 to vector<8x8xf32>
    %212 = arith.select %208, %210, %211 : vector<8x8xi1>, vector<8x8xf32>
    %213 = arith.addf %173, %212 : vector<8x8xf32>
    %c0_i32_106 = arith.constant 0 : i32
    %214 = vector.broadcast %c0_i32_106 : i32 to vector<8x8xi32>
    %215 = arith.cmpi eq, %21, %214 : vector<8x8xi32>
    %c7_i32 = arith.constant 7 : i32
    %216 = vector.broadcast %c7_i32 : i32 to vector<8x8xi32>
    %217 = arith.cmpi eq, %22, %216 : vector<8x8xi32>
    %218 = arith.andi %215, %217 : vector<8x8xi1>
    %cst_107 = arith.constant 0.000000e+00 : f32
    %219 = vector.shape_cast %203 : vector<1x1xf32> to vector<1x1xf32>
    %220 = vector.broadcast %219 : vector<1x1xf32> to vector<8x8xf32>
    %221 = vector.broadcast %cst_107 : f32 to vector<8x8xf32>
    %222 = arith.select %218, %220, %221 : vector<8x8xi1>, vector<8x8xf32>
    %223 = arith.addf %213, %222 : vector<8x8xf32>
    %c0_108 = arith.constant 0 : index
    %c0_109 = arith.constant 0 : index
    %224 = vector.load %arg10[%c0_108, %c0_109] : memref<8x8xf32, #tpu.memory_space<vmem>>, vector<8x8xf32>
    tpu.vector_store %arg10[%c0_108, %c0_109], %223 {strides = array<i32>} : memref<8x8xf32, #tpu.memory_space<vmem>>, vector<8x8xf32>,
    return
  }
  func.func @transform_0(%arg0: i32, %arg1: i32) -> (i32, i32, i32, i32) {
    %c0_i32 = arith.constant 0 : i32
    %c0_i32_0 = arith.constant 0 : i32
    %c0_i32_1 = arith.constant 0 : i32
    return %arg0, %c0_i32, %arg1, %c0_i32_0 : i32, i32, i32, i32
  }
  func.func @transform_1(%arg0: i32, %arg1: i32) -> (i32, i32, i32) {
    %c0_i32 = arith.constant 0 : i32
    %c0_i32_0 = arith.constant 0 : i32
    %c0_i32_1 = arith.constant 0 : i32
    return %arg0, %c0_i32, %c0_i32_0 : i32, i32, i32
  }
  func.func @transform_2(%arg0: i32, %arg1: i32) -> (i32, i32) {
    %c0_i32 = arith.constant 0 : i32
    %c0_i32_0 = arith.constant 0 : i32
    return %arg1, %c0_i32 : i32, i32
  }
  func.func @transform_3(%arg0: i32, %arg1: i32) -> (i32, i32) {
    %c0_i32 = arith.constant 0 : i32
    %c0_i32_0 = arith.constant 0 : i32
    %c0_i32_1 = arith.constant 0 : i32
    return %c0_i32, %c0_i32_0 : i32, i32
  }
  func.func @transform_4(%arg0: i32, %arg1: i32) -> (i32, i32) {
    %c0_i32 = arith.constant 0 : i32
    %c0_i32_0 = arith.constant 0 : i32
    %c0_i32_1 = arith.constant 0 : i32
    return %c0_i32, %c0_i32_0 : i32, i32
  }
  func.func @transform_5(%arg0: i32, %arg1: i32) -> i32 {
    %c0_i32 = arith.constant 0 : i32
    %c0_i32_0 = arith.constant 0 : i32
    return %c0_i32 : i32
  }
  func.func @transform_6(%arg0: i32, %arg1: i32) -> (i32, i32, i32) {
    %c0_i32 = arith.constant 0 : i32
    %c0_i32_0 = arith.constant 0 : i32
    return %arg0, %arg1, %c0_i32 : i32, i32, i32
  }
  func.func @transform_7(%arg0: i32, %arg1: i32) -> (i32, i32, i32, i32) {
    %c0_i32 = arith.constant 0 : i32
    %c0_i32_0 = arith.constant 0 : i32
    %c0_i32_1 = arith.constant 0 : i32
    return %arg0, %c0_i32, %arg1, %c0_i32_0 : i32, i32, i32, i32
  }
  func.func @transform_8(%arg0: i32, %arg1: i32) -> (i32, i32) {
    %c2_i32 = arith.constant 2 : i32
    %0 = arith.muli %arg0, %c2_i32 : i32
    %1 = arith.addi %0, %arg1 : i32
    %c0_i32 = arith.constant 0 : i32
    %c0_i32_0 = arith.constant 0 : i32
    return %1, %c0_i32 : i32, i32
  }
}

module attributes {stable_mosaic.version = 11 : i64} {
  func.func @kernel(%arg0: i32, %arg1: i32, %arg2: memref<1x16x8x8xf32, #tpu.memory_space<vmem>>, %arg3: memref<1x8x4x4xf32, #tpu.memory_space<vmem>>, %arg4: memref<8x4xf32, #tpu.memory_space<vmem>>, %arg5: memref<4x8xf32, #tpu.memory_space<vmem>>, %arg6: memref<2x16xf32, #tpu.memory_space<smem>>, %arg7: memref<2x8xf32, #tpu.memory_space<smem>>, %arg8: memref<2xf32, #tpu.memory_space<smem>>, %arg9: memref<2xf32, #tpu.memory_space<smem>>, %arg10: memref<1xf32, #tpu.memory_space<smem>>, %arg11: memref<1x8x8xf32, #tpu.memory_space<vmem>>) attributes {dimension_semantics = [#tpu.dimension_semantics<parallel>, #tpu.dimension_semantics<parallel>], iteration_bounds = array<i64: 2, 1>, scalar_prefetch = 0 : i64, scratch_operands = 0 : i64, tpu.core_type = #tpu.core_type<tc>, window_params = [{transform_indices = @transform_0, window_bounds = array<i64: 1, 16, 8, 8>}, {transform_indices = @transform_1, window_bounds = array<i64: 1, 8, 4, 4>}, {transform_indices = @transform_2, window_bounds = array<i64: 8, 4>}, {pipeline_mode = #tpu.pipeline_mode<synchronous>, transform_indices = @transform_3, window_bounds = array<i64: 4, 8>}, {transform_indices = @transform_4, window_bounds = array<i64: 2, 16>}, {transform_indices = @transform_5, window_bounds = array<i64: 2, 8>}, {transform_indices = @transform_6, window_bounds = array<i64: 2>}, {transform_indices = @transform_7, window_bounds = array<i64: 2>}, {transform_indices = @transform_8, window_bounds = array<i64: 1>}, {transform_indices = @transform_9, window_bounds = array<i64: 1, 8, 8>}]} {
    %c0 = arith.constant 0 : index
    %c0_0 = arith.constant 0 : index
    %c0_1 = arith.constant 0 : index
    %c0_2 = arith.constant 0 : index
    %0 = vector.load %arg3[%c0, %c0_0, %c0_1, %c0_2] : memref<1x8x4x4xf32, #tpu.memory_space<vmem>>, vector<1x1x4x4xf32>
    %1 = vector.shape_cast %0 : vector<1x1x4x4xf32> to vector<4x4xf32>
    %c0_3 = arith.constant 0 : index
    %c0_4 = arith.constant 0 : index
    %2 = memref.load %arg7[%c0_3, %c0_4] : memref<2x8xf32, #tpu.memory_space<smem>>
    %3 = vector.broadcast %2 : f32 to vector<4x4xf32>
    %4 = arith.mulf %1, %3 : vector<4x4xf32>
    %c0_5 = arith.constant 0 : index
    %c1 = arith.constant 1 : index
    %c0_6 = arith.constant 0 : index
    %c0_7 = arith.constant 0 : index
    %5 = vector.load %arg3[%c0_5, %c1, %c0_6, %c0_7] : memref<1x8x4x4xf32, #tpu.memory_space<vmem>>, vector<1x1x4x4xf32>
    %6 = vector.shape_cast %5 : vector<1x1x4x4xf32> to vector<4x4xf32>
    %c0_8 = arith.constant 0 : index
    %c1_9 = arith.constant 1 : index
    %7 = memref.load %arg7[%c0_8, %c1_9] : memref<2x8xf32, #tpu.memory_space<smem>>
    %8 = vector.broadcast %7 : f32 to vector<4x4xf32>
    %9 = arith.mulf %6, %8 : vector<4x4xf32>
    %10 = arith.addf %4, %9 : vector<4x4xf32>
    %c0_10 = arith.constant 0 : index
    %c2 = arith.constant 2 : index
    %c0_11 = arith.constant 0 : index
    %c0_12 = arith.constant 0 : index
    %11 = vector.load %arg3[%c0_10, %c2, %c0_11, %c0_12] : memref<1x8x4x4xf32, #tpu.memory_space<vmem>>, vector<1x1x4x4xf32>
    %12 = vector.shape_cast %11 : vector<1x1x4x4xf32> to vector<4x4xf32>
    %c0_13 = arith.constant 0 : index
    %c2_14 = arith.constant 2 : index
    %13 = memref.load %arg7[%c0_13, %c2_14] : memref<2x8xf32, #tpu.memory_space<smem>>
    %14 = vector.broadcast %13 : f32 to vector<4x4xf32>
    %15 = arith.mulf %12, %14 : vector<4x4xf32>
    %16 = arith.addf %10, %15 : vector<4x4xf32>
    %c0_15 = arith.constant 0 : index
    %c3 = arith.constant 3 : index
    %c0_16 = arith.constant 0 : index
    %c0_17 = arith.constant 0 : index
    %17 = vector.load %arg3[%c0_15, %c3, %c0_16, %c0_17] : memref<1x8x4x4xf32, #tpu.memory_space<vmem>>, vector<1x1x4x4xf32>
    %18 = vector.shape_cast %17 : vector<1x1x4x4xf32> to vector<4x4xf32>
    %c0_18 = arith.constant 0 : index
    %c3_19 = arith.constant 3 : index
    %19 = memref.load %arg7[%c0_18, %c3_19] : memref<2x8xf32, #tpu.memory_space<smem>>
    %20 = vector.broadcast %19 : f32 to vector<4x4xf32>
    %21 = arith.mulf %18, %20 : vector<4x4xf32>
    %22 = arith.addf %16, %21 : vector<4x4xf32>
    %c0_20 = arith.constant 0 : index
    %c4 = arith.constant 4 : index
    %c0_21 = arith.constant 0 : index
    %c0_22 = arith.constant 0 : index
    %23 = vector.load %arg3[%c0_20, %c4, %c0_21, %c0_22] : memref<1x8x4x4xf32, #tpu.memory_space<vmem>>, vector<1x1x4x4xf32>
    %24 = vector.shape_cast %23 : vector<1x1x4x4xf32> to vector<4x4xf32>
    %c0_23 = arith.constant 0 : index
    %c4_24 = arith.constant 4 : index
    %25 = memref.load %arg7[%c0_23, %c4_24] : memref<2x8xf32, #tpu.memory_space<smem>>
    %26 = vector.broadcast %25 : f32 to vector<4x4xf32>
    %27 = arith.mulf %24, %26 : vector<4x4xf32>
    %28 = arith.addf %22, %27 : vector<4x4xf32>
    %c0_25 = arith.constant 0 : index
    %c5 = arith.constant 5 : index
    %c0_26 = arith.constant 0 : index
    %c0_27 = arith.constant 0 : index
    %29 = vector.load %arg3[%c0_25, %c5, %c0_26, %c0_27] : memref<1x8x4x4xf32, #tpu.memory_space<vmem>>, vector<1x1x4x4xf32>
    %30 = vector.shape_cast %29 : vector<1x1x4x4xf32> to vector<4x4xf32>
    %c0_28 = arith.constant 0 : index
    %c5_29 = arith.constant 5 : index
    %31 = memref.load %arg7[%c0_28, %c5_29] : memref<2x8xf32, #tpu.memory_space<smem>>
    %32 = vector.broadcast %31 : f32 to vector<4x4xf32>
    %33 = arith.mulf %30, %32 : vector<4x4xf32>
    %34 = arith.addf %28, %33 : vector<4x4xf32>
    %c0_30 = arith.constant 0 : index
    %c6 = arith.constant 6 : index
    %c0_31 = arith.constant 0 : index
    %c0_32 = arith.constant 0 : index
    %35 = vector.load %arg3[%c0_30, %c6, %c0_31, %c0_32] : memref<1x8x4x4xf32, #tpu.memory_space<vmem>>, vector<1x1x4x4xf32>
    %36 = vector.shape_cast %35 : vector<1x1x4x4xf32> to vector<4x4xf32>
    %c0_33 = arith.constant 0 : index
    %c6_34 = arith.constant 6 : index
    %37 = memref.load %arg7[%c0_33, %c6_34] : memref<2x8xf32, #tpu.memory_space<smem>>
    %38 = vector.broadcast %37 : f32 to vector<4x4xf32>
    %39 = arith.mulf %36, %38 : vector<4x4xf32>
    %40 = arith.addf %34, %39 : vector<4x4xf32>
    %c0_35 = arith.constant 0 : index
    %c7 = arith.constant 7 : index
    %c0_36 = arith.constant 0 : index
    %c0_37 = arith.constant 0 : index
    %41 = vector.load %arg3[%c0_35, %c7, %c0_36, %c0_37] : memref<1x8x4x4xf32, #tpu.memory_space<vmem>>, vector<1x1x4x4xf32>
    %42 = vector.shape_cast %41 : vector<1x1x4x4xf32> to vector<4x4xf32>
    %c0_38 = arith.constant 0 : index
    %c7_39 = arith.constant 7 : index
    %43 = memref.load %arg7[%c0_38, %c7_39] : memref<2x8xf32, #tpu.memory_space<smem>>
    %44 = vector.broadcast %43 : f32 to vector<4x4xf32>
    %45 = arith.mulf %42, %44 : vector<4x4xf32>
    %46 = arith.addf %40, %45 : vector<4x4xf32>
    %c0_40 = arith.constant 0 : index
    %47 = memref.load %arg8[%c0_40] : memref<2xf32, #tpu.memory_space<smem>>
    %48 = vector.broadcast %47 : f32 to vector<4x4xf32>
    %49 = arith.addf %46, %48 : vector<4x4xf32>
    %c0_41 = arith.constant 0 : index
    %c0_42 = arith.constant 0 : index
    %50 = vector.load %arg4[%c0_41, %c0_42] : memref<8x4xf32, #tpu.memory_space<vmem>>, vector<8x4xf32>
    %cst = arith.constant dense<0.000000e+00> : vector<8x4xf32>
    %51 = tpu.matmul %50, %49, %cst {dimension_numbers = #tpu.dot_dimension_numbers<[1], [0], [0], [1], [0, 0, 1, 1], [], []>} : vector<8x4xf32>, vector<4x4xf32>, vector<8x4xf32> -> vector<8x4xf32>
    %c0_43 = arith.constant 0 : index
    %c0_44 = arith.constant 0 : index
    %52 = vector.load %arg5[%c0_43, %c0_44] : memref<4x8xf32, #tpu.memory_space<vmem>>, vector<4x8xf32>
    %cst_45 = arith.constant dense<0.000000e+00> : vector<8x8xf32>
    %53 = tpu.matmul %51, %52, %cst_45 {dimension_numbers = #tpu.dot_dimension_numbers<[1], [0], [0], [1], [0, 0, 1, 1], [], []>} : vector<8x4xf32>, vector<4x8xf32>, vector<8x8xf32> -> vector<8x8xf32>
    %c0_46 = arith.constant 0 : index
    %c0_47 = arith.constant 0 : index
    %c0_48 = arith.constant 0 : index
    %c0_49 = arith.constant 0 : index
    %54 = vector.load %arg2[%c0_46, %c0_47, %c0_48, %c0_49] : memref<1x16x8x8xf32, #tpu.memory_space<vmem>>, vector<1x1x8x8xf32>
    %55 = vector.shape_cast %54 : vector<1x1x8x8xf32> to vector<8x8xf32>
    %c0_50 = arith.constant 0 : index
    %c0_51 = arith.constant 0 : index
    %56 = memref.load %arg6[%c0_50, %c0_51] : memref<2x16xf32, #tpu.memory_space<smem>>
    %57 = vector.broadcast %56 : f32 to vector<8x8xf32>
    %58 = arith.mulf %55, %57 : vector<8x8xf32>
    %c0_52 = arith.constant 0 : index
    %c1_53 = arith.constant 1 : index
    %c0_54 = arith.constant 0 : index
    %c0_55 = arith.constant 0 : index
    %59 = vector.load %arg2[%c0_52, %c1_53, %c0_54, %c0_55] : memref<1x16x8x8xf32, #tpu.memory_space<vmem>>, vector<1x1x8x8xf32>
    %60 = vector.shape_cast %59 : vector<1x1x8x8xf32> to vector<8x8xf32>
    %c0_56 = arith.constant 0 : index
    %c1_57 = arith.constant 1 : index
    %61 = memref.load %arg6[%c0_56, %c1_57] : memref<2x16xf32, #tpu.memory_space<smem>>
    %62 = vector.broadcast %61 : f32 to vector<8x8xf32>
    %63 = arith.mulf %60, %62 : vector<8x8xf32>
    %64 = arith.addf %58, %63 : vector<8x8xf32>
    %c0_58 = arith.constant 0 : index
    %c2_59 = arith.constant 2 : index
    %c0_60 = arith.constant 0 : index
    %c0_61 = arith.constant 0 : index
    %65 = vector.load %arg2[%c0_58, %c2_59, %c0_60, %c0_61] : memref<1x16x8x8xf32, #tpu.memory_space<vmem>>, vector<1x1x8x8xf32>
    %66 = vector.shape_cast %65 : vector<1x1x8x8xf32> to vector<8x8xf32>
    %c0_62 = arith.constant 0 : index
    %c2_63 = arith.constant 2 : index
    %67 = memref.load %arg6[%c0_62, %c2_63] : memref<2x16xf32, #tpu.memory_space<smem>>
    %68 = vector.broadcast %67 : f32 to vector<8x8xf32>
    %69 = arith.mulf %66, %68 : vector<8x8xf32>
    %70 = arith.addf %64, %69 : vector<8x8xf32>
    %c0_64 = arith.constant 0 : index
    %c3_65 = arith.constant 3 : index
    %c0_66 = arith.constant 0 : index
    %c0_67 = arith.constant 0 : index
    %71 = vector.load %arg2[%c0_64, %c3_65, %c0_66, %c0_67] : memref<1x16x8x8xf32, #tpu.memory_space<vmem>>, vector<1x1x8x8xf32>
    %72 = vector.shape_cast %71 : vector<1x1x8x8xf32> to vector<8x8xf32>
    %c0_68 = arith.constant 0 : index
    %c3_69 = arith.constant 3 : index
    %73 = memref.load %arg6[%c0_68, %c3_69] : memref<2x16xf32, #tpu.memory_space<smem>>
    %74 = vector.broadcast %73 : f32 to vector<8x8xf32>
    %75 = arith.mulf %72, %74 : vector<8x8xf32>
    %76 = arith.addf %70, %75 : vector<8x8xf32>
    %c0_70 = arith.constant 0 : index
    %c4_71 = arith.constant 4 : index
    %c0_72 = arith.constant 0 : index
    %c0_73 = arith.constant 0 : index
    %77 = vector.load %arg2[%c0_70, %c4_71, %c0_72, %c0_73] : memref<1x16x8x8xf32, #tpu.memory_space<vmem>>, vector<1x1x8x8xf32>
    %78 = vector.shape_cast %77 : vector<1x1x8x8xf32> to vector<8x8xf32>
    %c0_74 = arith.constant 0 : index
    %c4_75 = arith.constant 4 : index
    %79 = memref.load %arg6[%c0_74, %c4_75] : memref<2x16xf32, #tpu.memory_space<smem>>
    %80 = vector.broadcast %79 : f32 to vector<8x8xf32>
    %81 = arith.mulf %78, %80 : vector<8x8xf32>
    %82 = arith.addf %76, %81 : vector<8x8xf32>
    %c0_76 = arith.constant 0 : index
    %c5_77 = arith.constant 5 : index
    %c0_78 = arith.constant 0 : index
    %c0_79 = arith.constant 0 : index
    %83 = vector.load %arg2[%c0_76, %c5_77, %c0_78, %c0_79] : memref<1x16x8x8xf32, #tpu.memory_space<vmem>>, vector<1x1x8x8xf32>
    %84 = vector.shape_cast %83 : vector<1x1x8x8xf32> to vector<8x8xf32>
    %c0_80 = arith.constant 0 : index
    %c5_81 = arith.constant 5 : index
    %85 = memref.load %arg6[%c0_80, %c5_81] : memref<2x16xf32, #tpu.memory_space<smem>>
    %86 = vector.broadcast %85 : f32 to vector<8x8xf32>
    %87 = arith.mulf %84, %86 : vector<8x8xf32>
    %88 = arith.addf %82, %87 : vector<8x8xf32>
    %c0_82 = arith.constant 0 : index
    %c6_83 = arith.constant 6 : index
    %c0_84 = arith.constant 0 : index
    %c0_85 = arith.constant 0 : index
    %89 = vector.load %arg2[%c0_82, %c6_83, %c0_84, %c0_85] : memref<1x16x8x8xf32, #tpu.memory_space<vmem>>, vector<1x1x8x8xf32>
    %90 = vector.shape_cast %89 : vector<1x1x8x8xf32> to vector<8x8xf32>
    %c0_86 = arith.constant 0 : index
    %c6_87 = arith.constant 6 : index
    %91 = memref.load %arg6[%c0_86, %c6_87] : memref<2x16xf32, #tpu.memory_space<smem>>
    %92 = vector.broadcast %91 : f32 to vector<8x8xf32>
    %93 = arith.mulf %90, %92 : vector<8x8xf32>
    %94 = arith.addf %88, %93 : vector<8x8xf32>
    %c0_88 = arith.constant 0 : index
    %c7_89 = arith.constant 7 : index
    %c0_90 = arith.constant 0 : index
    %c0_91 = arith.constant 0 : index
    %95 = vector.load %arg2[%c0_88, %c7_89, %c0_90, %c0_91] : memref<1x16x8x8xf32, #tpu.memory_space<vmem>>, vector<1x1x8x8xf32>
    %96 = vector.shape_cast %95 : vector<1x1x8x8xf32> to vector<8x8xf32>
    %c0_92 = arith.constant 0 : index
    %c7_93 = arith.constant 7 : index
    %97 = memref.load %arg6[%c0_92, %c7_93] : memref<2x16xf32, #tpu.memory_space<smem>>
    %98 = vector.broadcast %97 : f32 to vector<8x8xf32>
    %99 = arith.mulf %96, %98 : vector<8x8xf32>
    %100 = arith.addf %94, %99 : vector<8x8xf32>
    %c0_94 = arith.constant 0 : index
    %c8 = arith.constant 8 : index
    %c0_95 = arith.constant 0 : index
    %c0_96 = arith.constant 0 : index
    %101 = vector.load %arg2[%c0_94, %c8, %c0_95, %c0_96] : memref<1x16x8x8xf32, #tpu.memory_space<vmem>>, vector<1x1x8x8xf32>
    %102 = vector.shape_cast %101 : vector<1x1x8x8xf32> to vector<8x8xf32>
    %c0_97 = arith.constant 0 : index
    %c8_98 = arith.constant 8 : index
    %103 = memref.load %arg6[%c0_97, %c8_98] : memref<2x16xf32, #tpu.memory_space<smem>>
    %104 = vector.broadcast %103 : f32 to vector<8x8xf32>
    %105 = arith.mulf %102, %104 : vector<8x8xf32>
    %106 = arith.addf %100, %105 : vector<8x8xf32>
    %c0_99 = arith.constant 0 : index
    %c9 = arith.constant 9 : index
    %c0_100 = arith.constant 0 : index
    %c0_101 = arith.constant 0 : index
    %107 = vector.load %arg2[%c0_99, %c9, %c0_100, %c0_101] : memref<1x16x8x8xf32, #tpu.memory_space<vmem>>, vector<1x1x8x8xf32>
    %108 = vector.shape_cast %107 : vector<1x1x8x8xf32> to vector<8x8xf32>
    %c0_102 = arith.constant 0 : index
    %c9_103 = arith.constant 9 : index
    %109 = memref.load %arg6[%c0_102, %c9_103] : memref<2x16xf32, #tpu.memory_space<smem>>
    %110 = vector.broadcast %109 : f32 to vector<8x8xf32>
    %111 = arith.mulf %108, %110 : vector<8x8xf32>
    %112 = arith.addf %106, %111 : vector<8x8xf32>
    %c0_104 = arith.constant 0 : index
    %c10 = arith.constant 10 : index
    %c0_105 = arith.constant 0 : index
    %c0_106 = arith.constant 0 : index
    %113 = vector.load %arg2[%c0_104, %c10, %c0_105, %c0_106] : memref<1x16x8x8xf32, #tpu.memory_space<vmem>>, vector<1x1x8x8xf32>
    %114 = vector.shape_cast %113 : vector<1x1x8x8xf32> to vector<8x8xf32>
    %c0_107 = arith.constant 0 : index
    %c10_108 = arith.constant 10 : index
    %115 = memref.load %arg6[%c0_107, %c10_108] : memref<2x16xf32, #tpu.memory_space<smem>>
    %116 = vector.broadcast %115 : f32 to vector<8x8xf32>
    %117 = arith.mulf %114, %116 : vector<8x8xf32>
    %118 = arith.addf %112, %117 : vector<8x8xf32>
    %c0_109 = arith.constant 0 : index
    %c11 = arith.constant 11 : index
    %c0_110 = arith.constant 0 : index
    %c0_111 = arith.constant 0 : index
    %119 = vector.load %arg2[%c0_109, %c11, %c0_110, %c0_111] : memref<1x16x8x8xf32, #tpu.memory_space<vmem>>, vector<1x1x8x8xf32>
    %120 = vector.shape_cast %119 : vector<1x1x8x8xf32> to vector<8x8xf32>
    %c0_112 = arith.constant 0 : index
    %c11_113 = arith.constant 11 : index
    %121 = memref.load %arg6[%c0_112, %c11_113] : memref<2x16xf32, #tpu.memory_space<smem>>
    %122 = vector.broadcast %121 : f32 to vector<8x8xf32>
    %123 = arith.mulf %120, %122 : vector<8x8xf32>
    %124 = arith.addf %118, %123 : vector<8x8xf32>
    %c0_114 = arith.constant 0 : index
    %c12 = arith.constant 12 : index
    %c0_115 = arith.constant 0 : index
    %c0_116 = arith.constant 0 : index
    %125 = vector.load %arg2[%c0_114, %c12, %c0_115, %c0_116] : memref<1x16x8x8xf32, #tpu.memory_space<vmem>>, vector<1x1x8x8xf32>
    %126 = vector.shape_cast %125 : vector<1x1x8x8xf32> to vector<8x8xf32>
    %c0_117 = arith.constant 0 : index
    %c12_118 = arith.constant 12 : index
    %127 = memref.load %arg6[%c0_117, %c12_118] : memref<2x16xf32, #tpu.memory_space<smem>>
    %128 = vector.broadcast %127 : f32 to vector<8x8xf32>
    %129 = arith.mulf %126, %128 : vector<8x8xf32>
    %130 = arith.addf %124, %129 : vector<8x8xf32>
    %c0_119 = arith.constant 0 : index
    %c13 = arith.constant 13 : index
    %c0_120 = arith.constant 0 : index
    %c0_121 = arith.constant 0 : index
    %131 = vector.load %arg2[%c0_119, %c13, %c0_120, %c0_121] : memref<1x16x8x8xf32, #tpu.memory_space<vmem>>, vector<1x1x8x8xf32>
    %132 = vector.shape_cast %131 : vector<1x1x8x8xf32> to vector<8x8xf32>
    %c0_122 = arith.constant 0 : index
    %c13_123 = arith.constant 13 : index
    %133 = memref.load %arg6[%c0_122, %c13_123] : memref<2x16xf32, #tpu.memory_space<smem>>
    %134 = vector.broadcast %133 : f32 to vector<8x8xf32>
    %135 = arith.mulf %132, %134 : vector<8x8xf32>
    %136 = arith.addf %130, %135 : vector<8x8xf32>
    %c0_124 = arith.constant 0 : index
    %c14 = arith.constant 14 : index
    %c0_125 = arith.constant 0 : index
    %c0_126 = arith.constant 0 : index
    %137 = vector.load %arg2[%c0_124, %c14, %c0_125, %c0_126] : memref<1x16x8x8xf32, #tpu.memory_space<vmem>>, vector<1x1x8x8xf32>
    %138 = vector.shape_cast %137 : vector<1x1x8x8xf32> to vector<8x8xf32>
    %c0_127 = arith.constant 0 : index
    %c14_128 = arith.constant 14 : index
    %139 = memref.load %arg6[%c0_127, %c14_128] : memref<2x16xf32, #tpu.memory_space<smem>>
    %140 = vector.broadcast %139 : f32 to vector<8x8xf32>
    %141 = arith.mulf %138, %140 : vector<8x8xf32>
    %142 = arith.addf %136, %141 : vector<8x8xf32>
    %c0_129 = arith.constant 0 : index
    %c15 = arith.constant 15 : index
    %c0_130 = arith.constant 0 : index
    %c0_131 = arith.constant 0 : index
    %143 = vector.load %arg2[%c0_129, %c15, %c0_130, %c0_131] : memref<1x16x8x8xf32, #tpu.memory_space<vmem>>, vector<1x1x8x8xf32>
    %144 = vector.shape_cast %143 : vector<1x1x8x8xf32> to vector<8x8xf32>
    %c0_132 = arith.constant 0 : index
    %c15_133 = arith.constant 15 : index
    %145 = memref.load %arg6[%c0_132, %c15_133] : memref<2x16xf32, #tpu.memory_space<smem>>
    %146 = vector.broadcast %145 : f32 to vector<8x8xf32>
    %147 = arith.mulf %144, %146 : vector<8x8xf32>
    %148 = arith.addf %142, %147 : vector<8x8xf32>
    %149 = arith.addf %148, %53 : vector<8x8xf32>
    %cst_134 = arith.constant 0.000000e+00 : f32
    %150 = vector.broadcast %cst_134 : f32 to vector<8x8xf32>
    %151 = arith.maximumf %149, %150 : vector<8x8xf32>
    %c0_135 = arith.constant 0 : index
    %152 = memref.load %arg9[%c0_135] : memref<2xf32, #tpu.memory_space<smem>>
    %153 = vector.broadcast %152 : f32 to vector<8x8xf32>
    %154 = arith.mulf %151, %153 : vector<8x8xf32>
    %c0_136 = arith.constant 0 : index
    %c0_137 = arith.constant 0 : index
    %c0_138 = arith.constant 0 : index
    %c0_139 = arith.constant 0 : index
    %155 = vector.load %arg3[%c0_136, %c0_137, %c0_138, %c0_139] : memref<1x8x4x4xf32, #tpu.memory_space<vmem>>, vector<1x1x4x4xf32>
    %156 = vector.shape_cast %155 : vector<1x1x4x4xf32> to vector<4x4xf32>
    %c1_140 = arith.constant 1 : index
    %c0_141 = arith.constant 0 : index
    %157 = memref.load %arg7[%c1_140, %c0_141] : memref<2x8xf32, #tpu.memory_space<smem>>
    %158 = vector.broadcast %157 : f32 to vector<4x4xf32>
    %159 = arith.mulf %156, %158 : vector<4x4xf32>
    %c0_142 = arith.constant 0 : index
    %c1_143 = arith.constant 1 : index
    %c0_144 = arith.constant 0 : index
    %c0_145 = arith.constant 0 : index
    %160 = vector.load %arg3[%c0_142, %c1_143, %c0_144, %c0_145] : memref<1x8x4x4xf32, #tpu.memory_space<vmem>>, vector<1x1x4x4xf32>
    %161 = vector.shape_cast %160 : vector<1x1x4x4xf32> to vector<4x4xf32>
    %c1_146 = arith.constant 1 : index
    %c1_147 = arith.constant 1 : index
    %162 = memref.load %arg7[%c1_146, %c1_147] : memref<2x8xf32, #tpu.memory_space<smem>>
    %163 = vector.broadcast %162 : f32 to vector<4x4xf32>
    %164 = arith.mulf %161, %163 : vector<4x4xf32>
    %165 = arith.addf %159, %164 : vector<4x4xf32>
    %c0_148 = arith.constant 0 : index
    %c2_149 = arith.constant 2 : index
    %c0_150 = arith.constant 0 : index
    %c0_151 = arith.constant 0 : index
    %166 = vector.load %arg3[%c0_148, %c2_149, %c0_150, %c0_151] : memref<1x8x4x4xf32, #tpu.memory_space<vmem>>, vector<1x1x4x4xf32>
    %167 = vector.shape_cast %166 : vector<1x1x4x4xf32> to vector<4x4xf32>
    %c1_152 = arith.constant 1 : index
    %c2_153 = arith.constant 2 : index
    %168 = memref.load %arg7[%c1_152, %c2_153] : memref<2x8xf32, #tpu.memory_space<smem>>
    %169 = vector.broadcast %168 : f32 to vector<4x4xf32>
    %170 = arith.mulf %167, %169 : vector<4x4xf32>
    %171 = arith.addf %165, %170 : vector<4x4xf32>
    %c0_154 = arith.constant 0 : index
    %c3_155 = arith.constant 3 : index
    %c0_156 = arith.constant 0 : index
    %c0_157 = arith.constant 0 : index
    %172 = vector.load %arg3[%c0_154, %c3_155, %c0_156, %c0_157] : memref<1x8x4x4xf32, #tpu.memory_space<vmem>>, vector<1x1x4x4xf32>
    %173 = vector.shape_cast %172 : vector<1x1x4x4xf32> to vector<4x4xf32>
    %c1_158 = arith.constant 1 : index
    %c3_159 = arith.constant 3 : index
    %174 = memref.load %arg7[%c1_158, %c3_159] : memref<2x8xf32, #tpu.memory_space<smem>>
    %175 = vector.broadcast %174 : f32 to vector<4x4xf32>
    %176 = arith.mulf %173, %175 : vector<4x4xf32>
    %177 = arith.addf %171, %176 : vector<4x4xf32>
    %c0_160 = arith.constant 0 : index
    %c4_161 = arith.constant 4 : index
    %c0_162 = arith.constant 0 : index
    %c0_163 = arith.constant 0 : index
    %178 = vector.load %arg3[%c0_160, %c4_161, %c0_162, %c0_163] : memref<1x8x4x4xf32, #tpu.memory_space<vmem>>, vector<1x1x4x4xf32>
    %179 = vector.shape_cast %178 : vector<1x1x4x4xf32> to vector<4x4xf32>
    %c1_164 = arith.constant 1 : index
    %c4_165 = arith.constant 4 : index
    %180 = memref.load %arg7[%c1_164, %c4_165] : memref<2x8xf32, #tpu.memory_space<smem>>
    %181 = vector.broadcast %180 : f32 to vector<4x4xf32>
    %182 = arith.mulf %179, %181 : vector<4x4xf32>
    %183 = arith.addf %177, %182 : vector<4x4xf32>
    %c0_166 = arith.constant 0 : index
    %c5_167 = arith.constant 5 : index
    %c0_168 = arith.constant 0 : index
    %c0_169 = arith.constant 0 : index
    %184 = vector.load %arg3[%c0_166, %c5_167, %c0_168, %c0_169] : memref<1x8x4x4xf32, #tpu.memory_space<vmem>>, vector<1x1x4x4xf32>
    %185 = vector.shape_cast %184 : vector<1x1x4x4xf32> to vector<4x4xf32>
    %c1_170 = arith.constant 1 : index
    %c5_171 = arith.constant 5 : index
    %186 = memref.load %arg7[%c1_170, %c5_171] : memref<2x8xf32, #tpu.memory_space<smem>>
    %187 = vector.broadcast %186 : f32 to vector<4x4xf32>
    %188 = arith.mulf %185, %187 : vector<4x4xf32>
    %189 = arith.addf %183, %188 : vector<4x4xf32>
    %c0_172 = arith.constant 0 : index
    %c6_173 = arith.constant 6 : index
    %c0_174 = arith.constant 0 : index
    %c0_175 = arith.constant 0 : index
    %190 = vector.load %arg3[%c0_172, %c6_173, %c0_174, %c0_175] : memref<1x8x4x4xf32, #tpu.memory_space<vmem>>, vector<1x1x4x4xf32>
    %191 = vector.shape_cast %190 : vector<1x1x4x4xf32> to vector<4x4xf32>
    %c1_176 = arith.constant 1 : index
    %c6_177 = arith.constant 6 : index
    %192 = memref.load %arg7[%c1_176, %c6_177] : memref<2x8xf32, #tpu.memory_space<smem>>
    %193 = vector.broadcast %192 : f32 to vector<4x4xf32>
    %194 = arith.mulf %191, %193 : vector<4x4xf32>
    %195 = arith.addf %189, %194 : vector<4x4xf32>
    %c0_178 = arith.constant 0 : index
    %c7_179 = arith.constant 7 : index
    %c0_180 = arith.constant 0 : index
    %c0_181 = arith.constant 0 : index
    %196 = vector.load %arg3[%c0_178, %c7_179, %c0_180, %c0_181] : memref<1x8x4x4xf32, #tpu.memory_space<vmem>>, vector<1x1x4x4xf32>
    %197 = vector.shape_cast %196 : vector<1x1x4x4xf32> to vector<4x4xf32>
    %c1_182 = arith.constant 1 : index
    %c7_183 = arith.constant 7 : index
    %198 = memref.load %arg7[%c1_182, %c7_183] : memref<2x8xf32, #tpu.memory_space<smem>>
    %199 = vector.broadcast %198 : f32 to vector<4x4xf32>
    %200 = arith.mulf %197, %199 : vector<4x4xf32>
    %201 = arith.addf %195, %200 : vector<4x4xf32>
    %c1_184 = arith.constant 1 : index
    %202 = memref.load %arg8[%c1_184] : memref<2xf32, #tpu.memory_space<smem>>
    %203 = vector.broadcast %202 : f32 to vector<4x4xf32>
    %204 = arith.addf %201, %203 : vector<4x4xf32>
    %c0_185 = arith.constant 0 : index
    %c0_186 = arith.constant 0 : index
    %205 = vector.load %arg4[%c0_185, %c0_186] : memref<8x4xf32, #tpu.memory_space<vmem>>, vector<8x4xf32>
    %cst_187 = arith.constant dense<0.000000e+00> : vector<8x4xf32>
    %206 = tpu.matmul %205, %204, %cst_187 {dimension_numbers = #tpu.dot_dimension_numbers<[1], [0], [0], [1], [0, 0, 1, 1], [], []>} : vector<8x4xf32>, vector<4x4xf32>, vector<8x4xf32> -> vector<8x4xf32>
    %c0_188 = arith.constant 0 : index
    %c0_189 = arith.constant 0 : index
    %207 = vector.load %arg5[%c0_188, %c0_189] : memref<4x8xf32, #tpu.memory_space<vmem>>, vector<4x8xf32>
    %cst_190 = arith.constant dense<0.000000e+00> : vector<8x8xf32>
    %208 = tpu.matmul %206, %207, %cst_190 {dimension_numbers = #tpu.dot_dimension_numbers<[1], [0], [0], [1], [0, 0, 1, 1], [], []>} : vector<8x4xf32>, vector<4x8xf32>, vector<8x8xf32> -> vector<8x8xf32>
    %c0_191 = arith.constant 0 : index
    %c0_192 = arith.constant 0 : index
    %c0_193 = arith.constant 0 : index
    %c0_194 = arith.constant 0 : index
    %209 = vector.load %arg2[%c0_191, %c0_192, %c0_193, %c0_194] : memref<1x16x8x8xf32, #tpu.memory_space<vmem>>, vector<1x1x8x8xf32>
    %210 = vector.shape_cast %209 : vector<1x1x8x8xf32> to vector<8x8xf32>
    %c1_195 = arith.constant 1 : index
    %c0_196 = arith.constant 0 : index
    %211 = memref.load %arg6[%c1_195, %c0_196] : memref<2x16xf32, #tpu.memory_space<smem>>
    %212 = vector.broadcast %211 : f32 to vector<8x8xf32>
    %213 = arith.mulf %210, %212 : vector<8x8xf32>
    %c0_197 = arith.constant 0 : index
    %c1_198 = arith.constant 1 : index
    %c0_199 = arith.constant 0 : index
    %c0_200 = arith.constant 0 : index
    %214 = vector.load %arg2[%c0_197, %c1_198, %c0_199, %c0_200] : memref<1x16x8x8xf32, #tpu.memory_space<vmem>>, vector<1x1x8x8xf32>
    %215 = vector.shape_cast %214 : vector<1x1x8x8xf32> to vector<8x8xf32>
    %c1_201 = arith.constant 1 : index
    %c1_202 = arith.constant 1 : index
    %216 = memref.load %arg6[%c1_201, %c1_202] : memref<2x16xf32, #tpu.memory_space<smem>>
    %217 = vector.broadcast %216 : f32 to vector<8x8xf32>
    %218 = arith.mulf %215, %217 : vector<8x8xf32>
    %219 = arith.addf %213, %218 : vector<8x8xf32>
    %c0_203 = arith.constant 0 : index
    %c2_204 = arith.constant 2 : index
    %c0_205 = arith.constant 0 : index
    %c0_206 = arith.constant 0 : index
    %220 = vector.load %arg2[%c0_203, %c2_204, %c0_205, %c0_206] : memref<1x16x8x8xf32, #tpu.memory_space<vmem>>, vector<1x1x8x8xf32>
    %221 = vector.shape_cast %220 : vector<1x1x8x8xf32> to vector<8x8xf32>
    %c1_207 = arith.constant 1 : index
    %c2_208 = arith.constant 2 : index
    %222 = memref.load %arg6[%c1_207, %c2_208] : memref<2x16xf32, #tpu.memory_space<smem>>
    %223 = vector.broadcast %222 : f32 to vector<8x8xf32>
    %224 = arith.mulf %221, %223 : vector<8x8xf32>
    %225 = arith.addf %219, %224 : vector<8x8xf32>
    %c0_209 = arith.constant 0 : index
    %c3_210 = arith.constant 3 : index
    %c0_211 = arith.constant 0 : index
    %c0_212 = arith.constant 0 : index
    %226 = vector.load %arg2[%c0_209, %c3_210, %c0_211, %c0_212] : memref<1x16x8x8xf32, #tpu.memory_space<vmem>>, vector<1x1x8x8xf32>
    %227 = vector.shape_cast %226 : vector<1x1x8x8xf32> to vector<8x8xf32>
    %c1_213 = arith.constant 1 : index
    %c3_214 = arith.constant 3 : index
    %228 = memref.load %arg6[%c1_213, %c3_214] : memref<2x16xf32, #tpu.memory_space<smem>>
    %229 = vector.broadcast %228 : f32 to vector<8x8xf32>
    %230 = arith.mulf %227, %229 : vector<8x8xf32>
    %231 = arith.addf %225, %230 : vector<8x8xf32>
    %c0_215 = arith.constant 0 : index
    %c4_216 = arith.constant 4 : index
    %c0_217 = arith.constant 0 : index
    %c0_218 = arith.constant 0 : index
    %232 = vector.load %arg2[%c0_215, %c4_216, %c0_217, %c0_218] : memref<1x16x8x8xf32, #tpu.memory_space<vmem>>, vector<1x1x8x8xf32>
    %233 = vector.shape_cast %232 : vector<1x1x8x8xf32> to vector<8x8xf32>
    %c1_219 = arith.constant 1 : index
    %c4_220 = arith.constant 4 : index
    %234 = memref.load %arg6[%c1_219, %c4_220] : memref<2x16xf32, #tpu.memory_space<smem>>
    %235 = vector.broadcast %234 : f32 to vector<8x8xf32>
    %236 = arith.mulf %233, %235 : vector<8x8xf32>
    %237 = arith.addf %231, %236 : vector<8x8xf32>
    %c0_221 = arith.constant 0 : index
    %c5_222 = arith.constant 5 : index
    %c0_223 = arith.constant 0 : index
    %c0_224 = arith.constant 0 : index
    %238 = vector.load %arg2[%c0_221, %c5_222, %c0_223, %c0_224] : memref<1x16x8x8xf32, #tpu.memory_space<vmem>>, vector<1x1x8x8xf32>
    %239 = vector.shape_cast %238 : vector<1x1x8x8xf32> to vector<8x8xf32>
    %c1_225 = arith.constant 1 : index
    %c5_226 = arith.constant 5 : index
    %240 = memref.load %arg6[%c1_225, %c5_226] : memref<2x16xf32, #tpu.memory_space<smem>>
    %241 = vector.broadcast %240 : f32 to vector<8x8xf32>
    %242 = arith.mulf %239, %241 : vector<8x8xf32>
    %243 = arith.addf %237, %242 : vector<8x8xf32>
    %c0_227 = arith.constant 0 : index
    %c6_228 = arith.constant 6 : index
    %c0_229 = arith.constant 0 : index
    %c0_230 = arith.constant 0 : index
    %244 = vector.load %arg2[%c0_227, %c6_228, %c0_229, %c0_230] : memref<1x16x8x8xf32, #tpu.memory_space<vmem>>, vector<1x1x8x8xf32>
    %245 = vector.shape_cast %244 : vector<1x1x8x8xf32> to vector<8x8xf32>
    %c1_231 = arith.constant 1 : index
    %c6_232 = arith.constant 6 : index
    %246 = memref.load %arg6[%c1_231, %c6_232] : memref<2x16xf32, #tpu.memory_space<smem>>
    %247 = vector.broadcast %246 : f32 to vector<8x8xf32>
    %248 = arith.mulf %245, %247 : vector<8x8xf32>
    %249 = arith.addf %243, %248 : vector<8x8xf32>
    %c0_233 = arith.constant 0 : index
    %c7_234 = arith.constant 7 : index
    %c0_235 = arith.constant 0 : index
    %c0_236 = arith.constant 0 : index
    %250 = vector.load %arg2[%c0_233, %c7_234, %c0_235, %c0_236] : memref<1x16x8x8xf32, #tpu.memory_space<vmem>>, vector<1x1x8x8xf32>
    %251 = vector.shape_cast %250 : vector<1x1x8x8xf32> to vector<8x8xf32>
    %c1_237 = arith.constant 1 : index
    %c7_238 = arith.constant 7 : index
    %252 = memref.load %arg6[%c1_237, %c7_238] : memref<2x16xf32, #tpu.memory_space<smem>>
    %253 = vector.broadcast %252 : f32 to vector<8x8xf32>
    %254 = arith.mulf %251, %253 : vector<8x8xf32>
    %255 = arith.addf %249, %254 : vector<8x8xf32>
    %c0_239 = arith.constant 0 : index
    %c8_240 = arith.constant 8 : index
    %c0_241 = arith.constant 0 : index
    %c0_242 = arith.constant 0 : index
    %256 = vector.load %arg2[%c0_239, %c8_240, %c0_241, %c0_242] : memref<1x16x8x8xf32, #tpu.memory_space<vmem>>, vector<1x1x8x8xf32>
    %257 = vector.shape_cast %256 : vector<1x1x8x8xf32> to vector<8x8xf32>
    %c1_243 = arith.constant 1 : index
    %c8_244 = arith.constant 8 : index
    %258 = memref.load %arg6[%c1_243, %c8_244] : memref<2x16xf32, #tpu.memory_space<smem>>
    %259 = vector.broadcast %258 : f32 to vector<8x8xf32>
    %260 = arith.mulf %257, %259 : vector<8x8xf32>
    %261 = arith.addf %255, %260 : vector<8x8xf32>
    %c0_245 = arith.constant 0 : index
    %c9_246 = arith.constant 9 : index
    %c0_247 = arith.constant 0 : index
    %c0_248 = arith.constant 0 : index
    %262 = vector.load %arg2[%c0_245, %c9_246, %c0_247, %c0_248] : memref<1x16x8x8xf32, #tpu.memory_space<vmem>>, vector<1x1x8x8xf32>
    %263 = vector.shape_cast %262 : vector<1x1x8x8xf32> to vector<8x8xf32>
    %c1_249 = arith.constant 1 : index
    %c9_250 = arith.constant 9 : index
    %264 = memref.load %arg6[%c1_249, %c9_250] : memref<2x16xf32, #tpu.memory_space<smem>>
    %265 = vector.broadcast %264 : f32 to vector<8x8xf32>
    %266 = arith.mulf %263, %265 : vector<8x8xf32>
    %267 = arith.addf %261, %266 : vector<8x8xf32>
    %c0_251 = arith.constant 0 : index
    %c10_252 = arith.constant 10 : index
    %c0_253 = arith.constant 0 : index
    %c0_254 = arith.constant 0 : index
    %268 = vector.load %arg2[%c0_251, %c10_252, %c0_253, %c0_254] : memref<1x16x8x8xf32, #tpu.memory_space<vmem>>, vector<1x1x8x8xf32>
    %269 = vector.shape_cast %268 : vector<1x1x8x8xf32> to vector<8x8xf32>
    %c1_255 = arith.constant 1 : index
    %c10_256 = arith.constant 10 : index
    %270 = memref.load %arg6[%c1_255, %c10_256] : memref<2x16xf32, #tpu.memory_space<smem>>
    %271 = vector.broadcast %270 : f32 to vector<8x8xf32>
    %272 = arith.mulf %269, %271 : vector<8x8xf32>
    %273 = arith.addf %267, %272 : vector<8x8xf32>
    %c0_257 = arith.constant 0 : index
    %c11_258 = arith.constant 11 : index
    %c0_259 = arith.constant 0 : index
    %c0_260 = arith.constant 0 : index
    %274 = vector.load %arg2[%c0_257, %c11_258, %c0_259, %c0_260] : memref<1x16x8x8xf32, #tpu.memory_space<vmem>>, vector<1x1x8x8xf32>
    %275 = vector.shape_cast %274 : vector<1x1x8x8xf32> to vector<8x8xf32>
    %c1_261 = arith.constant 1 : index
    %c11_262 = arith.constant 11 : index
    %276 = memref.load %arg6[%c1_261, %c11_262] : memref<2x16xf32, #tpu.memory_space<smem>>
    %277 = vector.broadcast %276 : f32 to vector<8x8xf32>
    %278 = arith.mulf %275, %277 : vector<8x8xf32>
    %279 = arith.addf %273, %278 : vector<8x8xf32>
    %c0_263 = arith.constant 0 : index
    %c12_264 = arith.constant 12 : index
    %c0_265 = arith.constant 0 : index
    %c0_266 = arith.constant 0 : index
    %280 = vector.load %arg2[%c0_263, %c12_264, %c0_265, %c0_266] : memref<1x16x8x8xf32, #tpu.memory_space<vmem>>, vector<1x1x8x8xf32>
    %281 = vector.shape_cast %280 : vector<1x1x8x8xf32> to vector<8x8xf32>
    %c1_267 = arith.constant 1 : index
    %c12_268 = arith.constant 12 : index
    %282 = memref.load %arg6[%c1_267, %c12_268] : memref<2x16xf32, #tpu.memory_space<smem>>
    %283 = vector.broadcast %282 : f32 to vector<8x8xf32>
    %284 = arith.mulf %281, %283 : vector<8x8xf32>
    %285 = arith.addf %279, %284 : vector<8x8xf32>
    %c0_269 = arith.constant 0 : index
    %c13_270 = arith.constant 13 : index
    %c0_271 = arith.constant 0 : index
    %c0_272 = arith.constant 0 : index
    %286 = vector.load %arg2[%c0_269, %c13_270, %c0_271, %c0_272] : memref<1x16x8x8xf32, #tpu.memory_space<vmem>>, vector<1x1x8x8xf32>
    %287 = vector.shape_cast %286 : vector<1x1x8x8xf32> to vector<8x8xf32>
    %c1_273 = arith.constant 1 : index
    %c13_274 = arith.constant 13 : index
    %288 = memref.load %arg6[%c1_273, %c13_274] : memref<2x16xf32, #tpu.memory_space<smem>>
    %289 = vector.broadcast %288 : f32 to vector<8x8xf32>
    %290 = arith.mulf %287, %289 : vector<8x8xf32>
    %291 = arith.addf %285, %290 : vector<8x8xf32>
    %c0_275 = arith.constant 0 : index
    %c14_276 = arith.constant 14 : index
    %c0_277 = arith.constant 0 : index
    %c0_278 = arith.constant 0 : index
    %292 = vector.load %arg2[%c0_275, %c14_276, %c0_277, %c0_278] : memref<1x16x8x8xf32, #tpu.memory_space<vmem>>, vector<1x1x8x8xf32>
    %293 = vector.shape_cast %292 : vector<1x1x8x8xf32> to vector<8x8xf32>
    %c1_279 = arith.constant 1 : index
    %c14_280 = arith.constant 14 : index
    %294 = memref.load %arg6[%c1_279, %c14_280] : memref<2x16xf32, #tpu.memory_space<smem>>
    %295 = vector.broadcast %294 : f32 to vector<8x8xf32>
    %296 = arith.mulf %293, %295 : vector<8x8xf32>
    %297 = arith.addf %291, %296 : vector<8x8xf32>
    %c0_281 = arith.constant 0 : index
    %c15_282 = arith.constant 15 : index
    %c0_283 = arith.constant 0 : index
    %c0_284 = arith.constant 0 : index
    %298 = vector.load %arg2[%c0_281, %c15_282, %c0_283, %c0_284] : memref<1x16x8x8xf32, #tpu.memory_space<vmem>>, vector<1x1x8x8xf32>
    %299 = vector.shape_cast %298 : vector<1x1x8x8xf32> to vector<8x8xf32>
    %c1_285 = arith.constant 1 : index
    %c15_286 = arith.constant 15 : index
    %300 = memref.load %arg6[%c1_285, %c15_286] : memref<2x16xf32, #tpu.memory_space<smem>>
    %301 = vector.broadcast %300 : f32 to vector<8x8xf32>
    %302 = arith.mulf %299, %301 : vector<8x8xf32>
    %303 = arith.addf %297, %302 : vector<8x8xf32>
    %304 = arith.addf %303, %208 : vector<8x8xf32>
    %cst_287 = arith.constant 0.000000e+00 : f32
    %305 = vector.broadcast %cst_287 : f32 to vector<8x8xf32>
    %306 = arith.maximumf %304, %305 : vector<8x8xf32>
    %c1_288 = arith.constant 1 : index
    %307 = memref.load %arg9[%c1_288] : memref<2xf32, #tpu.memory_space<smem>>
    %308 = vector.broadcast %307 : f32 to vector<8x8xf32>
    %309 = arith.mulf %306, %308 : vector<8x8xf32>
    %310 = arith.addf %154, %309 : vector<8x8xf32>
    %c0_289 = arith.constant 0 : index
    %311 = memref.load %arg10[%c0_289] : memref<1xf32, #tpu.memory_space<smem>>
    %312 = vector.broadcast %311 : f32 to vector<8x8xf32>
    %313 = arith.addf %310, %312 : vector<8x8xf32>
    %314 = math.absf %313 : vector<8x8xf32>
    %cst_290 = arith.constant 0.000000e+00 : f32
    %315 = vector.broadcast %cst_290 : f32 to vector<8x8xf32>
    %316 = arith.subf %315, %314 : vector<8x8xf32>
    %317 = math.exp %316 : vector<8x8xf32>
    %cst_291 = arith.constant 0.000000e+00 : f32
    %318 = vector.broadcast %cst_291 : f32 to vector<8x8xf32>
    %319 = arith.cmpf oge, %313, %318 : vector<8x8xf32>
    %cst_292 = arith.constant 1.000000e+00 : f32
    %320 = vector.broadcast %cst_292 : f32 to vector<8x8xf32>
    %321 = arith.addf %320, %317 : vector<8x8xf32>
    %cst_293 = arith.constant 1.000000e+00 : f32
    %322 = vector.broadcast %cst_293 : f32 to vector<8x8xf32>
    %323 = arith.divf %322, %321 : vector<8x8xf32>
    %cst_294 = arith.constant 1.000000e+00 : f32
    %324 = vector.broadcast %cst_294 : f32 to vector<8x8xf32>
    %325 = arith.addf %324, %317 : vector<8x8xf32>
    %326 = arith.divf %317, %325 : vector<8x8xf32>
    %327 = arith.select %319, %323, %326 : vector<8x8xi1>, vector<8x8xf32>
    %c0_295 = arith.constant 0 : index
    %c0_296 = arith.constant 0 : index
    %c0_297 = arith.constant 0 : index
    %328 = vector.load %arg11[%c0_295, %c0_296, %c0_297] : memref<1x8x8xf32, #tpu.memory_space<vmem>>, vector<1x8x8xf32>
    %329 = vector.shape_cast %328 : vector<1x8x8xf32> to vector<8x8xf32>
    %330 = vector.shape_cast %327 : vector<8x8xf32> to vector<1x8x8xf32>
    tpu.vector_store %arg11[%c0_295, %c0_296, %c0_297], %330 {strides = array<i32>} : memref<1x8x8xf32, #tpu.memory_space<vmem>>, vector<1x8x8xf32>,
    return
  }
  func.func @transform_0(%arg0: i32, %arg1: i32) -> (i32, i32, i32, i32) {
    %c0_i32 = arith.constant 0 : i32
    %c0_i32_0 = arith.constant 0 : i32
    %c0_i32_1 = arith.constant 0 : i32
    return %arg0, %c0_i32, %arg1, %c0_i32_0 : i32, i32, i32, i32
  }
  func.func @transform_1(%arg0: i32, %arg1: i32) -> (i32, i32, i32, i32) {
    %c0_i32 = arith.constant 0 : i32
    %c0_i32_0 = arith.constant 0 : i32
    %c0_i32_1 = arith.constant 0 : i32
    %c0_i32_2 = arith.constant 0 : i32
    return %arg0, %c0_i32, %c0_i32_0, %c0_i32_1 : i32, i32, i32, i32
  }
  func.func @transform_2(%arg0: i32, %arg1: i32) -> (i32, i32) {
    %c0_i32 = arith.constant 0 : i32
    %c0_i32_0 = arith.constant 0 : i32
    return %arg1, %c0_i32 : i32, i32
  }
  func.func @transform_3(%arg0: i32, %arg1: i32) -> (i32, i32) {
    %c0_i32 = arith.constant 0 : i32
    %c0_i32_0 = arith.constant 0 : i32
    %c0_i32_1 = arith.constant 0 : i32
    return %c0_i32, %c0_i32_0 : i32, i32
  }
  func.func @transform_4(%arg0: i32, %arg1: i32) -> (i32, i32) {
    %c0_i32 = arith.constant 0 : i32
    %c0_i32_0 = arith.constant 0 : i32
    %c0_i32_1 = arith.constant 0 : i32
    return %c0_i32, %c0_i32_0 : i32, i32
  }
  func.func @transform_5(%arg0: i32, %arg1: i32) -> (i32, i32) {
    %c0_i32 = arith.constant 0 : i32
    %c0_i32_0 = arith.constant 0 : i32
    %c0_i32_1 = arith.constant 0 : i32
    return %c0_i32, %c0_i32_0 : i32, i32
  }
  func.func @transform_6(%arg0: i32, %arg1: i32) -> i32 {
    %c0_i32 = arith.constant 0 : i32
    %c0_i32_0 = arith.constant 0 : i32
    return %c0_i32 : i32
  }
  func.func @transform_7(%arg0: i32, %arg1: i32) -> i32 {
    %c0_i32 = arith.constant 0 : i32
    %c0_i32_0 = arith.constant 0 : i32
    return %c0_i32 : i32
  }
  func.func @transform_8(%arg0: i32, %arg1: i32) -> i32 {
    %c0_i32 = arith.constant 0 : i32
    %c0_i32_0 = arith.constant 0 : i32
    return %c0_i32 : i32
  }
  func.func @transform_9(%arg0: i32, %arg1: i32) -> (i32, i32, i32) {
    %c0_i32 = arith.constant 0 : i32
    %c0_i32_0 = arith.constant 0 : i32
    return %arg0, %arg1, %c0_i32 : i32, i32, i32
  }
}

</mosaic_0001>

<llo_original>
// kernel: grid_attention_forward.5
$region0: #{grid_attention_forward.5}
  #allocation0 [shape = 'u32[]', space=smem, size = 0x4, offset = 0x4, fixed_abs, tag = 'smem constant byte address 0x4 - core index']
  #allocation1 [shape = 'u32[144,128]{1,0:T(1,128)}', space=vmem, size = 0x12000, scoped, tag = 'internal scratch']
  %s0 = inlined_call_operand.vmem [shape: f32[2,4,16,16], index: 0, kind: input, shape index: {}]
  %s1 = inlined_call_operand.vmem [shape: f32[32,8], index: 1, kind: input, shape index: {}]
  %s2 = inlined_call_operand.hbm [shape: f32[2,4,16,16], index: 2, kind: output, shape index: {}]
  %s3 = sld [smem:[#allocation0]]
  $region83: #{grid_attention_forward.5} parent=0
    _
  %s5 = ssub.s32 1, %s3
  %s6 = scalar_select 0, %s5, %s3
  $region1: #{grid_attention_forward.5} parent=0
    #allocation2 [shape = 'u8[32768]{0}', space=vmem, size = 0x8000, scoped, tag = 'input window, operand 0']
    #allocation3 [shape = 'u8[16384]{0}', space=smem, size = 0x4000, scoped, tag = 'input window, operand 1, single buffered']
    #allocation4 [shape = 's32[2]{0}', space=sflag, size = 0x8, scoped, tag = 'scoped memory for grid_attention_forward.5']
    #allocation5 [shape = 's32[2]{0}', space=sflag, size = 0x8, scoped, tag = 'scoped memory for grid_attention_forward.5']
    #allocation6 [shape = 'u8[32768]{0}', space=vmem, size = 0x8000, scoped, tag = 'output window, operand 0']
    %7 = vsyncpa [#allocation5], 0
    %8 = vsyncpa [#allocation4], 0
    %s9 = scalar_lea.sflag [#allocation4], 1
    %10 = vsyncpa %s9, 0
    loop: start=0, step=1, limit=6
    $region2: #{grid_attention_forward.5} parent=1 // loop_pre_header
      _
    $region3: #{grid_attention_forward.5} parent=1 // loop_header
      %s12 = sphi 0, %s16
      %p13 = scmp.ge.s32.totalorder %s12, 6
      %s19 = sphi 0, %s31
      %s20 = sphi 0, %s27
      %s21 = sphi 0, %s19
      %s22 = sphi 0, %s20
      %s23 = sphi 0, %s21
      %s24 = sphi 0, %s22
      %s36 = sphi 0, %s38
      %s39 = sphi 0, %s36
      %s40 = sphi 0, %s39
      %s56 = sphi 0, %s40
      %s60 = sphi 0, %s60
      %s62 = sphi 0, %s60
      %s63 = sphi 0, %s62
      %s77 = sphi 0, %s63
      %s85 = sphi 0, %s87
      %s88 = sphi 0, %s85
      %s89 = sphi 0, %s88
      %s105 = sphi 0, %s89
    $region4: #{grid_attention_forward.5} parent=1 // loop_header_branch
      %15 = sbr.rel (%p13) target = $region8
    $region5: #{grid_attention_forward.5} parent=1 // loop_body
      %s17 = ssub.s32 %s12, 1
      %s18 = ssub.s32 %s12, 2
      %s25 = sadd.s32 1, %s20
      %p26 = scmp.ge.s32.totalorder %s25, 2
      %s27 = scalar_select %p26, 0, %s25
      %s28 = sadd.s32 1, %s19
      %s29 = scalar_select %p26, %s28, %s19
      %p30 = scmp.ge.s32.totalorder %s29, 2
      %s31 = scalar_select %p30, 0, %s29
      %s32 = ssub.s32 %s19, %s31
      %s33 = ssub.s32 %s20, %s27
      %s34 = sor.u32 %s32, %s33
      %p35 = scmp.eq.s32.totalorder %s34, 0
      %s37 = sadd.s32 %s36, 1
      %s38 = scalar_select %p35, %s36, %s37
      %p41 = pneg %p35
      %p42 = scmp.eq.s32.totalorder %s12, 3
      %p43 = por %p41, %p42
      %p44 = scmp.ne.s32.totalorder %s36, %s39
      %p45 = scmp.eq.s32.totalorder %s12, 0
      %p46 = por %p44, %p45
      %p47 = scmp.ne.s32.totalorder %s36, %s39
      %p48 = scmp.eq.s32.totalorder %s17, 3
      %p49 = por %p47, %p48
      %p50 = scmp.ne.s32.totalorder %s39, %s40
      %p51 = scmp.eq.s32.totalorder %s17, 0
      %p52 = por %p50, %p51
      %p53 = scmp.ne.s32.totalorder %s39, %s40
      %p54 = scmp.eq.s32.totalorder %s18, 3
      %p55 = por %p53, %p54
      %p57 = scmp.ne.s32.totalorder %s40, %s56
      %p58 = scmp.eq.s32.totalorder %s18, 0
      %p59 = por %p57, %p58
      %s61 = sadd.s32 %s60, 1
      %p64 = scmp.eq.s32.totalorder %s12, 3
      %p65 = scmp.ne.s32.totalorder %s60, %s62
      %p66 = scmp.eq.s32.totalorder %s12, 0
      %p67 = por %p65, %p66
      %p68 = scmp.ne.s32.totalorder %s60, %s62
      %p69 = scmp.eq.s32.totalorder %s17, 3
      %p70 = por %p68, %p69
      %p71 = scmp.ne.s32.totalorder %s62, %s63
      %p72 = scmp.eq.s32.totalorder %s17, 0
      %p73 = por %p71, %p72
      %p74 = scmp.ne.s32.totalorder %s62, %s63
      %p75 = scmp.eq.s32.totalorder %s18, 3
      %p76 = por %p74, %p75
      %p78 = scmp.ne.s32.totalorder %s63, %s77
      %p79 = scmp.eq.s32.totalorder %s18, 0
      %p80 = por %p78, %p79
      %s81 = ssub.s32 %s19, %s31
      %s82 = ssub.s32 %s20, %s27
      %s83 = sor.u32 %s81, %s82
      %p84 = scmp.eq.s32.totalorder %s83, 0
      %s86 = sadd.s32 %s85, 1
      %s87 = scalar_select %p84, %s85, %s86
      %p90 = pneg %p84
      %p91 = scmp.eq.s32.totalorder %s12, 3
      %p92 = por %p90, %p91
      %p93 = scmp.ne.s32.totalorder %s85, %s88
      %p94 = scmp.eq.s32.totalorder %s12, 0
      %p95 = por %p93, %p94
      %p96 = scmp.ne.s32.totalorder %s85, %s88
      %p97 = scmp.eq.s32.totalorder %s17, 3
      %p98 = por %p96, %p97
      %p99 = scmp.ne.s32.totalorder %s88, %s89
      %p100 = scmp.eq.s32.totalorder %s17, 0
      %p101 = por %p99, %p100
      %p102 = scmp.ne.s32.totalorder %s88, %s89
      %p103 = scmp.eq.s32.totalorder %s18, 3
      %p104 = por %p102, %p103
      %p106 = scmp.ne.s32.totalorder %s89, %s105
      %p107 = scmp.eq.s32.totalorder %s18, 0
      %p108 = por %p106, %p107
      %p109 = scmp.le.s32.totalorder 1, %s12
      %p110 = scmp.lt.s32.totalorder %s12, 5
      %p111 = pnand %p109, %p110
      %p112 = pneg %p111
      // Predicated region
      $region9: #{grid_attention_forward.5} parent=5 // pred_check
        _
      $region10: #{grid_attention_forward.5} parent=5 // pred_check_branch
        %114 = sbr.rel (%p111) target = $region12
      $region11: #{grid_attention_forward.5} parent=5 // pred_region
        %s115 = ssub.s32 %s12, 1
        // Predicated region
        $region13: #{grid_attention_forward.5} parent=11 // pred_check
          %p116 = pneg %p73
        $region14: #{grid_attention_forward.5} parent=11 // pred_check_branch
          %118 = sbr.rel (%p116) target = $region16
        $region15: #{grid_attention_forward.5} parent=11 // pred_region
          %s120 = ssub.s32 512, 512
          %121 = vsyncadd [#allocation5], %s120
          %s122 = sshll.u32 %s1, 4
          %s123 = int_to_ptr.vmem [resolvable:$true] %s122
          %128 = dma.vmem_to_smem %s123, 512, [#allocation3], [#allocation5], 128, 128, 8
        $region16: #{grid_attention_forward.5} parent=11 // pred_fallthru
          _
      $region12: #{grid_attention_forward.5} parent=5 // pred_fallthru
        _
      %p129 = scmp.lt.s32.totalorder %s12, 4
      // Predicated region
      $region17: #{grid_attention_forward.5} parent=5 // pred_check
        %p130 = pneg %p129
      $region18: #{grid_attention_forward.5} parent=5 // pred_check_branch
        %132 = sbr.rel (%p130) target = $region20
      $region19: #{grid_attention_forward.5} parent=5 // pred_region
        // Predicated region
        $region21: #{grid_attention_forward.5} parent=19 // pred_check
          %p133 = pneg %p46
        $region22: #{grid_attention_forward.5} parent=19 // pred_check_branch
          %135 = sbr.rel (%p133) target = $region24
        $region23: #{grid_attention_forward.5} parent=19 // pred_region
          %s136 = sand.u32 %s36, 1
          %s137 = sand.u32 %s36, 1
          %s138 = smul.addr %s137, 32
          %s139 = scalar_lea.vmem [#allocation2], %s138
          %s140 = smul.addr %s19, 8
          %s141 = sadd.s32 %s20, %s140
          %s142 = smul.addr %s141, 8
          %s143 = scalar_lea.vmem %s0, %s142
          // Predicated region
          $region25: #{grid_attention_forward.5} parent=23 // pred_check
            _
          $region26: #{grid_attention_forward.5} parent=23 // pred_check_branch
            %145 = sbr.rel (0) target = $region28
          $region27: #{grid_attention_forward.5} parent=23 // pred_region
            // Predicated region
            $region29: #{grid_attention_forward.5} parent=27 // pred_check
              _
            $region30: #{grid_attention_forward.5} parent=27 // pred_check_branch
              %147 = sbr.rel (0) target = $region32
            $region31: #{grid_attention_forward.5} parent=27 // pred_region
              // Predicated region
              $region44: #{grid_attention_forward.5} parent=31 // pred_check
                _
              $region45: #{grid_attention_forward.5} parent=31 // pred_check_branch
                %168 = sbr.rel (0) target = $region47
              $region46: #{grid_attention_forward.5} parent=31 // pred_region
                loop: start=0, step=1, limit=1
                $region48: #{grid_attention_forward.5} parent=46 // loop_pre_header
                  _
                $region49: #{grid_attention_forward.5} parent=46 // loop_header
                  %s170 = sphi 0, %s174
                  %p171 = scmp.ge.s32.totalorder %s170, 1
                  %s175 = sphi %s143, %s143
                  %s176 = sphi %s139, %s139
                $region50: #{grid_attention_forward.5} parent=46 // loop_header_branch
                  %173 = sbr.rel (%p171) target = $region54
                $region51: #{grid_attention_forward.5} parent=46 // loop_body
                  %v177 = vld [vmem:[%s175] sm:$0xff]
                  %178 = vst [vmem:[%s176] sm:$0xff] %v177
                  %v179 = vld [vmem:[%s175 + $0x10] sm:$0xff]
                  %180 = vst [vmem:[%s176 + $0x8] sm:$0xff] %v179
                  %v181 = vld [vmem:[%s175 + $0x20] sm:$0xff]
                  %182 = vst [vmem:[%s176 + $0x10] sm:$0xff] %v181
                  %v183 = vld [vmem:[%s175 + $0x30] sm:$0xff]
                  %184 = vst [vmem:[%s176 + $0x18] sm:$0xff] %v183
                $region52: #{grid_attention_forward.5} parent=46 // loop_footer
                  %s174 = sadd.s32 1, %s170
                $region53: #{grid_attention_forward.5} parent=46 // loop_footer_branch
                  %169 = sbr.rel target = $region49
                $region54: #{grid_attention_forward.5} parent=46 // loop_exit
                  _
              $region47: #{grid_attention_forward.5} parent=31 // pred_fallthru
                _
              // Predicated region
              $region55: #{grid_attention_forward.5} parent=31 // pred_check
                _
              $region56: #{grid_attention_forward.5} parent=31 // pred_check_branch
                %186 = sbr.rel target = $region58
              $region57: #{grid_attention_forward.5} parent=31 // pred_region
                _
              $region58: #{grid_attention_forward.5} parent=31 // pred_fallthru
                _
            $region32: #{grid_attention_forward.5} parent=27 // pred_fallthru
              _
            // Predicated region
            $region33: #{grid_attention_forward.5} parent=27 // pred_check
              _
            $region34: #{grid_attention_forward.5} parent=27 // pred_check_branch
              %149 = sbr.rel target = $region36
            $region35: #{grid_attention_forward.5} parent=27 // pred_region
              loop: start=0, step=1, limit=1
              $region37: #{grid_attention_forward.5} parent=35 // loop_pre_header
                _
              $region38: #{grid_attention_forward.5} parent=35 // loop_header
                %s152 = sphi 0, %s156
                %p153 = scmp.ge.s32.totalorder %s152, 1
                %s157 = sphi %s143, %s143
                %s158 = sphi %s139, %s139
              $region39: #{grid_attention_forward.5} parent=35 // loop_header_branch
                %155 = sbr.rel (%p153) target = $region43
              $region40: #{grid_attention_forward.5} parent=35 // loop_body
                %v159 = vld [vmem:[%s157] sm:$0xff]
                %160 = vst [vmem:[%s158] sm:$0xff] %v159
                %v161 = vld [vmem:[%s157 + $0x10] sm:$0xff]
                %162 = vst [vmem:[%s158 + $0x8] sm:$0xff] %v161
                %v163 = vld [vmem:[%s157 + $0x20] sm:$0xff]
                %164 = vst [vmem:[%s158 + $0x10] sm:$0xff] %v163
                %v165 = vld [vmem:[%s157 + $0x30] sm:$0xff]
                %166 = vst [vmem:[%s158 + $0x18] sm:$0xff] %v165
              $region41: #{grid_attention_forward.5} parent=35 // loop_footer
                %s156 = sadd.s32 1, %s152
              $region42: #{grid_attention_forward.5} parent=35 // loop_footer_branch
                %151 = sbr.rel target = $region38
              $region43: #{grid_attention_forward.5} parent=35 // loop_exit
                _
            $region36: #{grid_attention_forward.5} parent=27 // pred_fallthru
              _
          $region28: #{grid_attention_forward.5} parent=23 // pred_fallthru
            _
          %187 = vnop
        $region24: #{grid_attention_forward.5} parent=19 // pred_fallthru
          _
      $region20: #{grid_attention_forward.5} parent=5 // pred_fallthru
        _
      %p188 = scmp.le.s32.totalorder 1, %s12
      %p189 = scmp.lt.s32.totalorder %s12, 5
      %p190 = pnand %p188, %p189
      %p191 = pneg %p190
      // Predicated region
      $region59: #{grid_attention_forward.5} parent=5 // pred_check
        _
      $region60: #{grid_attention_forward.5} parent=5 // pred_check_branch
        %193 = sbr.rel (%p190) target = $region62
      $region61: #{grid_attention_forward.5} parent=5 // pred_region
        %s194 = ssub.s32 %s12, 1
        %s195 = sand.u32 %s39, 1
        %s196 = sand.u32 %s39, 1
        %s197 = smul.addr %s196, 32
        %s198 = scalar_lea.vmem [#allocation2], %s197
        // Predicated region
        $region63: #{grid_attention_forward.5} parent=61 // pred_check
          %p199 = pneg %p52
        $region64: #{grid_attention_forward.5} parent=61 // pred_check_branch
          %201 = sbr.rel (%p199) target = $region66
        $region65: #{grid_attention_forward.5} parent=61 // pred_region
          _
        $region66: #{grid_attention_forward.5} parent=61 // pred_fallthru
          _
        // Predicated region
        $region67: #{grid_attention_forward.5} parent=61 // pred_check
          %p202 = pneg %p73
        $region68: #{grid_attention_forward.5} parent=61 // pred_check_branch
          %204 = sbr.rel (%p202) target = $region70
        $region69: #{grid_attention_forward.5} parent=61 // pred_region
          %205 = dma.done [#allocation5], 512
        $region70: #{grid_attention_forward.5} parent=61 // pred_fallthru
          _
        %206 = sfence
        %s207 = sand.u32 %s39, 1
        %s208 = sand.u32 %s39, 1
        %s209 = smul.addr %s208, 32
        %s210 = scalar_lea.vmem [#allocation2], %s209
        %p211 = pneg %p52
        %p212 = pneg %p49
        %p213 = pneg %p73
        %p214 = pneg %p70
        %p215 = pneg %p101
        %p216 = pneg %p98
        %s217 = sand.u32 %s88, 1
        %s218 = scalar_lea.sflag [#allocation4], %s217
        %s219 = sand.u32 %s88, 1
        %s220 = smul.addr %s219, 32
        %s221 = scalar_lea.vmem [#allocation6], %s220
        %s222 = sld [smem:[#allocation3]]
        %s223 = sld [smem:[#allocation3 + $0x4]]
        %s224 = sld [smem:[#allocation3 + $0x400]]
        %s225 = sadd.f32 %s222, %s224
        %s226 = sld [smem:[#allocation3 + $0x404]]
        %s227 = sadd.f32 %s223, %s226
        %s228 = sld [smem:[#allocation3 + $0x800]]
        %s229 = sadd.f32 %s225, %s228
        %s230 = sld [smem:[#allocation3 + $0x804]]
        %s231 = sadd.f32 %s227, %s230
        %s232 = sld [smem:[#allocation3 + $0xc00]]
        %s233 = sadd.f32 %s229, %s232
        %s234 = sld [smem:[#allocation3 + $0xc04]]
        %s235 = sadd.f32 %s231, %s234
        %s236 = smul.f32 %s233, 0.001953125
        %s237 = smul.f32 %s235, 0.001953125
        %s238 = smul.f32 %s236, %s236
        %s239 = ssub.f32 %s237, %s238
        %v240 = vld [vmem:[%s198] sm:$0xff]
        %v241 = vstv %s236
        %v242 = vsub.f32 %v240, %v241
        %s243 = sadd.f32 %s239, 1e-05
        %v244 = vstv %s243
        %v245 = vadd.f32 %v244, 0.0
        %v246 = vrsqrt.pop %v245
        %v247 = vmul.f32 %v242, %v246
        %vm248 = vcmask 130048
        %249 = vst.msk [vmem:[%s221] sm:$0xff] %vm248, %v247
        %s250 = sld [smem:[#allocation3 + $0x1]]
        %s251 = sld [smem:[#allocation3 + $0x5]]
        %s252 = sld [smem:[#allocation3 + $0x401]]
        %s253 = sadd.f32 %s250, %s252
        %s254 = sld [smem:[#allocation3 + $0x405]]
        %s255 = sadd.f32 %s251, %s254
        %s256 = sld [smem:[#allocation3 + $0x801]]
        %s257 = sadd.f32 %s253, %s256
        %s258 = sld [smem:[#allocation3 + $0x805]]
        %s259 = sadd.f32 %s255, %s258
        %s260 = sld [smem:[#allocation3 + $0xc01]]
        %s261 = sadd.f32 %s257, %s260
        %s262 = sld [smem:[#allocation3 + $0xc05]]
        %s263 = sadd.f32 %s259, %s262
        %s264 = smul.f32 %s261, 0.001953125
        %s265 = smul.f32 %s263, 0.001953125
        %s266 = smul.f32 %s264, %s264
        %s267 = ssub.f32 %s265, %s266
        %s268 = scalar_lea.vmem %s198, 8 [#allocation2]
        %v269 = vld [vmem:[%s268] sm:$0xff]
        %v270 = vstv %s264
        %v271 = vsub.f32 %v269, %v270
        %s272 = sadd.f32 %s267, 1e-05
        %v273 = vstv %s272
        %v274 = vadd.f32 %v273, 0.0
        %v275 = vrsqrt.pop %v274
        %v276 = vmul.f32 %v271, %v275
        %s277 = scalar_lea.vmem %s221, 8 [#allocation6]
        %278 = vst.msk [vmem:[%s277] sm:$0xff] %vm248, %v276
        %s279 = sld [smem:[#allocation3 + $0x2]]
        %s280 = sld [smem:[#allocation3 + $0x6]]
        %s281 = sld [smem:[#allocation3 + $0x402]]
        %s282 = sadd.f32 %s279, %s281
        %s283 = sld [smem:[#allocation3 + $0x406]]
        %s284 = sadd.f32 %s280, %s283
        %s285 = sld [smem:[#allocation3 + $0x802]]
        %s286 = sadd.f32 %s282, %s285
        %s287 = sld [smem:[#allocation3 + $0x806]]
        %s288 = sadd.f32 %s284, %s287
        %s289 = sld [smem:[#allocation3 + $0xc02]]
        %s290 = sadd.f32 %s286, %s289
        %s291 = sld [smem:[#allocation3 + $0xc06]]
        %s292 = sadd.f32 %s288, %s291
        %s293 = smul.f32 %s290, 0.001953125
        %s294 = smul.f32 %s292, 0.001953125
        %s295 = smul.f32 %s293, %s293
        %s296 = ssub.f32 %s294, %s295
        %s297 = scalar_lea.vmem %s198, 16 [#allocation2]
        %v298 = vld [vmem:[%s297] sm:$0xff]
        %v299 = vstv %s293
        %v300 = vsub.f32 %v298, %v299
        %s301 = sadd.f32 %s296, 1e-05
        %v302 = vstv %s301
        %v303 = vadd.f32 %v302, 0.0
        %v304 = vrsqrt.pop %v303
        %v305 = vmul.f32 %v300, %v304
        %s306 = scalar_lea.vmem %s221, 16 [#allocation6]
        %307 = vst.msk [vmem:[%s306] sm:$0xff] %vm248, %v305
        %s308 = sld [smem:[#allocation3 + $0x3]]
        %s309 = sld [smem:[#allocation3 + $0x7]]
        %s310 = sld [smem:[#allocation3 + $0x403]]
        %s311 = sadd.f32 %s308, %s310
        %s312 = sld [smem:[#allocation3 + $0x407]]
        %s313 = sadd.f32 %s309, %s312
        %s314 = sld [smem:[#allocation3 + $0x803]]
        %s315 = sadd.f32 %s311, %s314
        %s316 = sld [smem:[#allocation3 + $0x807]]
        %s317 = sadd.f32 %s313, %s316
        %s318 = sld [smem:[#allocation3 + $0xc03]]
        %s319 = sadd.f32 %s315, %s318
        %s320 = sld [smem:[#allocation3 + $0xc07]]
        %s321 = sadd.f32 %s317, %s320
        %s322 = smul.f32 %s319, 0.001953125
        %s323 = smul.f32 %s321, 0.001953125
        %s324 = smul.f32 %s322, %s322
        %s325 = ssub.f32 %s323, %s324
        %s326 = scalar_lea.vmem %s198, 24 [#allocation2]
        %v327 = vld [vmem:[%s326] sm:$0xff]
        %v328 = vstv %s322
        %v329 = vsub.f32 %v327, %v328
        %s330 = sadd.f32 %s325, 1e-05
        %v331 = vstv %s330
        %v332 = vadd.f32 %v331, 0.0
        %v333 = vrsqrt.pop %v332
        %v334 = vmul.f32 %v329, %v333
        %s335 = scalar_lea.vmem %s221, 24 [#allocation6]
        %336 = vst.msk [vmem:[%s335] sm:$0xff] %vm248, %v334
        %s337 = sand.u32 %s88, 1
        %s338 = scalar_lea.sflag [#allocation4], %s337
        %s339 = sand.u32 %s88, 1
        %s340 = smul.addr %s339, 32
        %s341 = scalar_lea.vmem [#allocation6], %s340
        // Predicated region
        $region71: #{grid_attention_forward.5} parent=61 // pred_check
          %p342 = pneg %p98
        $region72: #{grid_attention_forward.5} parent=61 // pred_check_branch
          %344 = sbr.rel (%p342) target = $region74
        $region73: #{grid_attention_forward.5} parent=61 // pred_region
          %s346 = ssub.s32 512, 512
          %347 = vsyncadd %s338, %s346
          %s348 = smul.addr %s21, 8
          %s349 = sadd.s32 %s22, %s348
          %s350 = smul.addr %s349, 128
          %s351 = scalar_lea.hbm %s2, %s350
          %s352 = sshll.u32 %s341, 4
          %s353 = int_to_ptr.vmem [resolvable:$true] %s352
          %358 = dma.vmem_to_hbm [thread:$0]  %s353, 512, %s351, %s338, 128, 256, 8
        $region74: #{grid_attention_forward.5} parent=61 // pred_fallthru
          _
      $region62: #{grid_attention_forward.5} parent=5 // pred_fallthru
        _
      %p359 = scmp.le.s32.totalorder 2, %s12
      // Predicated region
      $region75: #{grid_attention_forward.5} parent=5 // pred_check
        %p360 = pneg %p359
      $region76: #{grid_attention_forward.5} parent=5 // pred_check_branch
        %362 = sbr.rel (%p360) target = $region78
      $region77: #{grid_attention_forward.5} parent=5 // pred_region
        %s363 = ssub.s32 %s12, 2
        // Predicated region
        $region79: #{grid_attention_forward.5} parent=77 // pred_check
          %p364 = pneg %p104
        $region80: #{grid_attention_forward.5} parent=77 // pred_check_branch
          %366 = sbr.rel (%p364) target = $region82
        $region81: #{grid_attention_forward.5} parent=77 // pred_region
          %s367 = sand.u32 %s89, 1
          %s368 = scalar_lea.sflag [#allocation4], %s367
          %s369 = sand.u32 %s89, 1
          %s370 = smul.addr %s369, 32
          %s371 = scalar_lea.vmem [#allocation6], %s370
          %372 = dma.done %s368, 512
        $region82: #{grid_attention_forward.5} parent=77 // pred_fallthru
          _
      $region78: #{grid_attention_forward.5} parent=5 // pred_fallthru
        _
    $region6: #{grid_attention_forward.5} parent=1 // loop_footer
      %s16 = sadd.s32 1, %s12
    $region7: #{grid_attention_forward.5} parent=1 // loop_footer_branch
      %11 = sbr.rel target = $region3
    $region8: #{grid_attention_forward.5} parent=1 // loop_exit
      _
    %373 = vsyncpa [#allocation4], 1
    %s374 = scalar_lea.sflag [#allocation4], 1
    %375 = vsyncpa %s374, 1
    %376 = vsyncpa [#allocation5], 1
    %s377 = scalar_lea.sflag [#allocation5], 1
    %378 = vsyncpa %s377, 1

// kernel: grid_attention_forward.4
$region0: #{grid_attention_forward.4}
  #allocation0 [shape = 'u32[]', space=smem, size = 0x4, offset = 0x4, fixed_abs, tag = 'smem constant byte address 0x4 - core index']
  #allocation1 [shape = 'u32[144,128]{1,0:T(1,128)}', space=vmem, size = 0x12000, scoped, tag = 'internal scratch']
  %s0 = inlined_call_operand.vmem [shape: f32[2,4,16,16], index: 0, kind: input, shape index: {}]
  %s1 = inlined_call_operand.vmem [shape: f32[2,8,8], index: 1, kind: input, shape index: {}]
  %s2 = inlined_call_operand.vmem [shape: f32[16,8], index: 2, kind: input, shape index: {}]
  %s3 = inlined_call_operand.vmem [shape: f32[8,16], index: 3, kind: input, shape index: {}]
  %s4 = inlined_call_operand.vmem [shape: f32[4,4], index: 4, kind: input, shape index: {}]
  %s5 = inlined_call_operand.vmem [shape: f32[4], index: 5, kind: input, shape index: {}]
  %s6 = inlined_call_operand.hbm [shape: f32[2,16,16], index: 6, kind: output, shape index: {0}]
  %s7 = inlined_call_operand.vmem [shape: f32[2,4,16,16], index: 7, kind: output, shape index: {1}]
  %s8 = inlined_call_operand.vmem [shape: f32[32,8], index: 8, kind: output, shape index: {2}]
  %9 = xla_tuple %s6, %s7, %s8
  %s10 = sld [smem:[#allocation0]]
  $region153: #{grid_attention_forward.4} parent=0
    _
  %s12 = ssub.s32 1, %s10
  %s13 = scalar_select 0, %s12, %s10
  $region1: #{grid_attention_forward.4} parent=0
    #allocation2 [shape = 'u8[32768]{0}', space=vmem, size = 0x8000, scoped, tag = 'input window, operand 0']
    #allocation3 [shape = 'u8[2048]{0}', space=smem, size = 0x800, scoped, tag = 'input window, operand 4, single buffered']
    #allocation4 [shape = 's32[2]{0}', space=sflag, size = 0x8, scoped, tag = 'scoped memory for grid_attention_forward.4']
    #allocation5 [shape = 's32[2]{0}', space=sflag, size = 0x8, scoped, tag = 'scoped memory for grid_attention_forward.4']
    #allocation6 [shape = 'u8[512]{0}', space=smem, size = 0x200, scoped, tag = 'input window, operand 5, single buffered']
    #allocation7 [shape = 's32[1]{0}', space=sflag, size = 0x4, scoped, tag = 'scoped memory for grid_attention_forward.4']
    #allocation8 [shape = 'u8[8192]{0}', space=vmem, size = 0x2000, scoped, tag = 'output window, operand 0']
    #allocation9 [shape = 'u8[32768]{0}', space=vmem, size = 0x8000, scoped, tag = 'output window, operand 1']
    %14 = vsyncpa [#allocation5], 0
    %15 = vsyncpa [#allocation7], 0
    %16 = vsyncpa [#allocation4], 0
    %s17 = scalar_lea.sflag [#allocation4], 1
    %18 = vsyncpa %s17, 0
    loop: start=0, step=1, limit=6
    $region2: #{grid_attention_forward.4} parent=1 // loop_pre_header
      _
    $region3: #{grid_attention_forward.4} parent=1 // loop_header
      %s20 = sphi 0, %s24
      %p21 = scmp.ge.s32.totalorder %s20, 6
      %s27 = sphi 0, %s39
      %s28 = sphi 0, %s35
      %s29 = sphi 0, %s27
      %s30 = sphi 0, %s28
      %s31 = sphi 0, %s29
      %s32 = sphi 0, %s30
      %s44 = sphi 0, %s46
      %s47 = sphi 0, %s44
      %s48 = sphi 0, %s47
      %s64 = sphi 0, %s48
      %s70 = sphi 0, %s72
      %s73 = sphi 0, %s70
      %s74 = sphi 0, %s73
      %s90 = sphi 0, %s74
      %s96 = sphi 0, %s98
      %s99 = sphi 0, %s96
      %s100 = sphi 0, %s99
      %s116 = sphi 0, %s100
      %s120 = sphi 0, %s120
      %s122 = sphi 0, %s120
      %s123 = sphi 0, %s122
      %s137 = sphi 0, %s123
      %s141 = sphi 0, %s141
      %s143 = sphi 0, %s141
      %s144 = sphi 0, %s143
      %s158 = sphi 0, %s144
      %s162 = sphi 0, %s162
      %s164 = sphi 0, %s162
      %s165 = sphi 0, %s164
      %s179 = sphi 0, %s165
      %s187 = sphi 0, %s189
      %s190 = sphi 0, %s187
      %s191 = sphi 0, %s190
      %s207 = sphi 0, %s191
      %s215 = sphi 0, %s217
      %s218 = sphi 0, %s215
      %s219 = sphi 0, %s218
      %s235 = sphi 0, %s219
      %s245 = sphi 0, %s247
      %s248 = sphi 0, %s245
      %s249 = sphi 0, %s248
      %s265 = sphi 0, %s249
    $region4: #{grid_attention_forward.4} parent=1 // loop_header_branch
      %23 = sbr.rel (%p21) target = $region8
    $region5: #{grid_attention_forward.4} parent=1 // loop_body
      %s25 = ssub.s32 %s20, 1
      %s26 = ssub.s32 %s20, 2
      %s33 = sadd.s32 1, %s28
      %p34 = scmp.ge.s32.totalorder %s33, 2
      %s35 = scalar_select %p34, 0, %s33
      %s36 = sadd.s32 1, %s27
      %s37 = scalar_select %p34, %s36, %s27
      %p38 = scmp.ge.s32.totalorder %s37, 2
      %s39 = scalar_select %p38, 0, %s37
      %s40 = ssub.s32 %s27, %s39
      %s41 = ssub.s32 %s28, %s35
      %s42 = sor.u32 %s40, %s41
      %p43 = scmp.eq.s32.totalorder %s42, 0
      %s45 = sadd.s32 %s44, 1
      %s46 = scalar_select %p43, %s44, %s45
      %p49 = pneg %p43
      %p50 = scmp.eq.s32.totalorder %s20, 3
      %p51 = por %p49, %p50
      %p52 = scmp.ne.s32.totalorder %s44, %s47
      %p53 = scmp.eq.s32.totalorder %s20, 0
      %p54 = por %p52, %p53
      %p55 = scmp.ne.s32.totalorder %s44, %s47
      %p56 = scmp.eq.s32.totalorder %s25, 3
      %p57 = por %p55, %p56
      %p58 = scmp.ne.s32.totalorder %s47, %s48
      %p59 = scmp.eq.s32.totalorder %s25, 0
      %p60 = por %p58, %p59
      %p61 = scmp.ne.s32.totalorder %s47, %s48
      %p62 = scmp.eq.s32.totalorder %s26, 3
      %p63 = por %p61, %p62
      %p65 = scmp.ne.s32.totalorder %s48, %s64
      %p66 = scmp.eq.s32.totalorder %s26, 0
      %p67 = por %p65, %p66
      %s68 = ssub.s32 %s27, %s39
      %p69 = scmp.eq.s32.totalorder %s68, 0
      %s71 = sadd.s32 %s70, 1
      %s72 = scalar_select %p69, %s70, %s71
      %p75 = pneg %p69
      %p76 = scmp.eq.s32.totalorder %s20, 3
      %p77 = por %p75, %p76
      %p78 = scmp.ne.s32.totalorder %s70, %s73
      %p79 = scmp.eq.s32.totalorder %s20, 0
      %p80 = por %p78, %p79
      %p81 = scmp.ne.s32.totalorder %s70, %s73
      %p82 = scmp.eq.s32.totalorder %s25, 3
      %p83 = por %p81, %p82
      %p84 = scmp.ne.s32.totalorder %s73, %s74
      %p85 = scmp.eq.s32.totalorder %s25, 0
      %p86 = por %p84, %p85
      %p87 = scmp.ne.s32.totalorder %s73, %s74
      %p88 = scmp.eq.s32.totalorder %s26, 3
      %p89 = por %p87, %p88
      %p91 = scmp.ne.s32.totalorder %s74, %s90
      %p92 = scmp.eq.s32.totalorder %s26, 0
      %p93 = por %p91, %p92
      %s94 = ssub.s32 %s28, %s35
      %p95 = scmp.eq.s32.totalorder %s94, 0
      %s97 = sadd.s32 %s96, 1
      %s98 = scalar_select %p95, %s96, %s97
      %p101 = pneg %p95
      %p102 = scmp.eq.s32.totalorder %s20, 3
      %p103 = por %p101, %p102
      %p104 = scmp.ne.s32.totalorder %s96, %s99
      %p105 = scmp.eq.s32.totalorder %s20, 0
      %p106 = por %p104, %p105
      %p107 = scmp.ne.s32.totalorder %s96, %s99
      %p108 = scmp.eq.s32.totalorder %s25, 3
      %p109 = por %p107, %p108
      %p110 = scmp.ne.s32.totalorder %s99, %s100
      %p111 = scmp.eq.s32.totalorder %s25, 0
      %p112 = por %p110, %p111
      %p113 = scmp.ne.s32.totalorder %s99, %s100
      %p114 = scmp.eq.s32.totalorder %s26, 3
      %p115 = por %p113, %p114
      %p117 = scmp.ne.s32.totalorder %s100, %s116
      %p118 = scmp.eq.s32.totalorder %s26, 0
      %p119 = por %p117, %p118
      %s121 = sadd.s32 %s120, 1
      %p124 = scmp.eq.s32.totalorder %s20, 3
      %p125 = scmp.ne.s32.totalorder %s120, %s122
      %p126 = scmp.eq.s32.totalorder %s20, 0
      %p127 = por %p125, %p126
      %p128 = scmp.ne.s32.totalorder %s120, %s122
      %p129 = scmp.eq.s32.totalorder %s25, 3
      %p130 = por %p128, %p129
      %p131 = scmp.ne.s32.totalorder %s122, %s123
      %p132 = scmp.eq.s32.totalorder %s25, 0
      %p133 = por %p131, %p132
      %p134 = scmp.ne.s32.totalorder %s122, %s123
      %p135 = scmp.eq.s32.totalorder %s26, 3
      %p136 = por %p134, %p135
      %p138 = scmp.ne.s32.totalorder %s123, %s137
      %p139 = scmp.eq.s32.totalorder %s26, 0
      %p140 = por %p138, %p139
      %s142 = sadd.s32 %s141, 1
      %p145 = scmp.eq.s32.totalorder %s20, 3
      %p146 = scmp.ne.s32.totalorder %s141, %s143
      %p147 = scmp.eq.s32.totalorder %s20, 0
      %p148 = por %p146, %p147
      %p149 = scmp.ne.s32.totalorder %s141, %s143
      %p150 = scmp.eq.s32.totalorder %s25, 3
      %p151 = por %p149, %p150
      %p152 = scmp.ne.s32.totalorder %s143, %s144
      %p153 = scmp.eq.s32.totalorder %s25, 0
      %p154 = por %p152, %p153
      %p155 = scmp.ne.s32.totalorder %s143, %s144
      %p156 = scmp.eq.s32.totalorder %s26, 3
      %p157 = por %p155, %p156
      %p159 = scmp.ne.s32.totalorder %s144, %s158
      %p160 = scmp.eq.s32.totalorder %s26, 0
      %p161 = por %p159, %p160
      %s163 = sadd.s32 %s162, 1
      %p166 = scmp.eq.s32.totalorder %s20, 3
      %p167 = scmp.ne.s32.totalorder %s162, %s164
      %p168 = scmp.eq.s32.totalorder %s20, 0
      %p169 = por %p167, %p168
      %p170 = scmp.ne.s32.totalorder %s162, %s164
      %p171 = scmp.eq.s32.totalorder %s25, 3
      %p172 = por %p170, %p171
      %p173 = scmp.ne.s32.totalorder %s164, %s165
      %p174 = scmp.eq.s32.totalorder %s25, 0
      %p175 = por %p173, %p174
      %p176 = scmp.ne.s32.totalorder %s164, %s165
      %p177 = scmp.eq.s32.totalorder %s26, 3
      %p178 = por %p176, %p177
      %p180 = scmp.ne.s32.totalorder %s165, %s179
      %p181 = scmp.eq.s32.totalorder %s26, 0
      %p182 = por %p180, %p181
      %s183 = ssub.s32 %s27, %s39
      %s184 = ssub.s32 %s28, %s35
      %s185 = sor.u32 %s183, %s184
      %p186 = scmp.eq.s32.totalorder %s185, 0
      %s188 = sadd.s32 %s187, 1
      %s189 = scalar_select %p186, %s187, %s188
      %p192 = pneg %p186
      %p193 = scmp.eq.s32.totalorder %s20, 3
      %p194 = por %p192, %p193
      %p195 = scmp.ne.s32.totalorder %s187, %s190
      %p196 = scmp.eq.s32.totalorder %s20, 0
      %p197 = por %p195, %p196
      %p198 = scmp.ne.s32.totalorder %s187, %s190
      %p199 = scmp.eq.s32.totalorder %s25, 3
      %p200 = por %p198, %p199
      %p201 = scmp.ne.s32.totalorder %s190, %s191
      %p202 = scmp.eq.s32.totalorder %s25, 0
      %p203 = por %p201, %p202
      %p204 = scmp.ne.s32.totalorder %s190, %s191
      %p205 = scmp.eq.s32.totalorder %s26, 3
      %p206 = por %p204, %p205
      %p208 = scmp.ne.s32.totalorder %s191, %s207
      %p209 = scmp.eq.s32.totalorder %s26, 0
      %p210 = por %p208, %p209
      %s211 = ssub.s32 %s27, %s39
      %s212 = ssub.s32 %s28, %s35
      %s213 = sor.u32 %s211, %s212
      %p214 = scmp.eq.s32.totalorder %s213, 0
      %s216 = sadd.s32 %s215, 1
      %s217 = scalar_select %p214, %s215, %s216
      %p220 = pneg %p214
      %p221 = scmp.eq.s32.totalorder %s20, 3
      %p222 = por %p220, %p221
      %p223 = scmp.ne.s32.totalorder %s215, %s218
      %p224 = scmp.eq.s32.totalorder %s20, 0
      %p225 = por %p223, %p224
      %p226 = scmp.ne.s32.totalorder %s215, %s218
      %p227 = scmp.eq.s32.totalorder %s25, 3
      %p228 = por %p226, %p227
      %p229 = scmp.ne.s32.totalorder %s218, %s219
      %p230 = scmp.eq.s32.totalorder %s25, 0
      %p231 = por %p229, %p230
      %p232 = scmp.ne.s32.totalorder %s218, %s219
      %p233 = scmp.eq.s32.totalorder %s26, 3
      %p234 = por %p232, %p233
      %p236 = scmp.ne.s32.totalorder %s219, %s235
      %p237 = scmp.eq.s32.totalorder %s26, 0
      %p238 = por %p236, %p237
      %s239 = smul.u32 %s27, 2
      %s240 = sadd.s32 %s239, %s28
      %s241 = smul.u32 %s39, 2
      %s242 = sadd.s32 %s241, %s35
      %s243 = ssub.s32 %s240, %s242
      %p244 = scmp.eq.s32.totalorder %s243, 0
      %s246 = sadd.s32 %s245, 1
      %s247 = scalar_select %p244, %s245, %s246
      %p250 = pneg %p244
      %p251 = scmp.eq.s32.totalorder %s20, 3
      %p252 = por %p250, %p251
      %p253 = scmp.ne.s32.totalorder %s245, %s248
      %p254 = scmp.eq.s32.totalorder %s20, 0
      %p255 = por %p253, %p254
      %p256 = scmp.ne.s32.totalorder %s245, %s248
      %p257 = scmp.eq.s32.totalorder %s25, 3
      %p258 = por %p256, %p257
      %p259 = scmp.ne.s32.totalorder %s248, %s249
      %p260 = scmp.eq.s32.totalorder %s25, 0
      %p261 = por %p259, %p260
      %p262 = scmp.ne.s32.totalorder %s248, %s249
      %p263 = scmp.eq.s32.totalorder %s26, 3
      %p264 = por %p262, %p263
      %p266 = scmp.ne.s32.totalorder %s249, %s265
      %p267 = scmp.eq.s32.totalorder %s26, 0
      %p268 = por %p266, %p267
      %p269 = scmp.le.s32.totalorder 1, %s20
      %p270 = scmp.lt.s32.totalorder %s20, 5
      %p271 = pnand %p269, %p270
      %p272 = pneg %p271
      // Predicated region
      $region9: #{grid_attention_forward.4} parent=5 // pred_check
        _
      $region10: #{grid_attention_forward.4} parent=5 // pred_check_branch
        %274 = sbr.rel (%p271) target = $region12
      $region11: #{grid_attention_forward.4} parent=5 // pred_region
        %s275 = ssub.s32 %s20, 1
        // Predicated region
        $region13: #{grid_attention_forward.4} parent=11 // pred_check
          %p276 = pneg %p133
        $region14: #{grid_attention_forward.4} parent=11 // pred_check_branch
          %278 = sbr.rel (%p276) target = $region16
        $region15: #{grid_attention_forward.4} parent=11 // pred_region
          _
        $region16: #{grid_attention_forward.4} parent=11 // pred_fallthru
          _
        // Predicated region
        $region17: #{grid_attention_forward.4} parent=11 // pred_check
          %p279 = pneg %p154
        $region18: #{grid_attention_forward.4} parent=11 // pred_check_branch
          %281 = sbr.rel (%p279) target = $region20
        $region19: #{grid_attention_forward.4} parent=11 // pred_region
          %s283 = ssub.s32 64, 64
          %284 = vsyncadd [#allocation5], %s283
          %s286 = sshll.u32 %s4, 4
          %s287 = int_to_ptr.vmem [resolvable:$true] %s286
          %289 = dma.vmem_to_smem %s287, 64, [#allocation3], [#allocation5]
        $region20: #{grid_attention_forward.4} parent=11 // pred_fallthru
          _
        // Predicated region
        $region21: #{grid_attention_forward.4} parent=11 // pred_check
          %p290 = pneg %p175
        $region22: #{grid_attention_forward.4} parent=11 // pred_check_branch
          %292 = sbr.rel (%p290) target = $region24
        $region23: #{grid_attention_forward.4} parent=11 // pred_region
          %s294 = ssub.s32 16, 16
          %295 = vsyncadd [#allocation7], %s294
          %s297 = sshll.u32 %s5, 4
          %s298 = int_to_ptr.vmem [resolvable:$true] %s297
          %300 = dma.vmem_to_smem %s298, 16, [#allocation6], [#allocation7]
        $region24: #{grid_attention_forward.4} parent=11 // pred_fallthru
          _
      $region12: #{grid_attention_forward.4} parent=5 // pred_fallthru
        _
      %p301 = scmp.lt.s32.totalorder %s20, 4
      // Predicated region
      $region25: #{grid_attention_forward.4} parent=5 // pred_check
        %p302 = pneg %p301
      $region26: #{grid_attention_forward.4} parent=5 // pred_check_branch
        %304 = sbr.rel (%p302) target = $region28
      $region27: #{grid_attention_forward.4} parent=5 // pred_region
        // Predicated region
        $region29: #{grid_attention_forward.4} parent=27 // pred_check
          %p305 = pneg %p54
        $region30: #{grid_attention_forward.4} parent=27 // pred_check_branch
          %307 = sbr.rel (%p305) target = $region32
        $region31: #{grid_attention_forward.4} parent=27 // pred_region
          %s308 = sand.u32 %s44, 1
          %s309 = sand.u32 %s44, 1
          %s310 = smul.addr %s309, 32
          %s311 = scalar_lea.vmem [#allocation2], %s310
          %s312 = smul.addr %s27, 8
          %s313 = sadd.s32 %s28, %s312
          %s314 = smul.addr %s313, 8
          %s315 = scalar_lea.vmem %s0, %s314
          // Predicated region
          $region33: #{grid_attention_forward.4} parent=31 // pred_check
            _
          $region34: #{grid_attention_forward.4} parent=31 // pred_check_branch
            %317 = sbr.rel (0) target = $region36
          $region35: #{grid_attention_forward.4} parent=31 // pred_region
            // Predicated region
            $region37: #{grid_attention_forward.4} parent=35 // pred_check
              _
            $region38: #{grid_attention_forward.4} parent=35 // pred_check_branch
              %319 = sbr.rel (0) target = $region40
            $region39: #{grid_attention_forward.4} parent=35 // pred_region
              // Predicated region
              $region52: #{grid_attention_forward.4} parent=39 // pred_check
                _
              $region53: #{grid_attention_forward.4} parent=39 // pred_check_branch
                %340 = sbr.rel (0) target = $region55
              $region54: #{grid_attention_forward.4} parent=39 // pred_region
                loop: start=0, step=1, limit=1
                $region56: #{grid_attention_forward.4} parent=54 // loop_pre_header
                  _
                $region57: #{grid_attention_forward.4} parent=54 // loop_header
                  %s342 = sphi 0, %s346
                  %p343 = scmp.ge.s32.totalorder %s342, 1
                  %s347 = sphi %s315, %s315
                  %s348 = sphi %s311, %s311
                $region58: #{grid_attention_forward.4} parent=54 // loop_header_branch
                  %345 = sbr.rel (%p343) target = $region62
                $region59: #{grid_attention_forward.4} parent=54 // loop_body
                  %v349 = vld [vmem:[%s347] sm:$0xff]
                  %350 = vst [vmem:[%s348] sm:$0xff] %v349
                  %v351 = vld [vmem:[%s347 + $0x10] sm:$0xff]
                  %352 = vst [vmem:[%s348 + $0x8] sm:$0xff] %v351
                  %v353 = vld [vmem:[%s347 + $0x20] sm:$0xff]
                  %354 = vst [vmem:[%s348 + $0x10] sm:$0xff] %v353
                  %v355 = vld [vmem:[%s347 + $0x30] sm:$0xff]
                  %356 = vst [vmem:[%s348 + $0x18] sm:$0xff] %v355
                $region60: #{grid_attention_forward.4} parent=54 // loop_footer
                  %s346 = sadd.s32 1, %s342
                $region61: #{grid_attention_forward.4} parent=54 // loop_footer_branch
                  %341 = sbr.rel target = $region57
                $region62: #{grid_attention_forward.4} parent=54 // loop_exit
                  _
              $region55: #{grid_attention_forward.4} parent=39 // pred_fallthru
                _
              // Predicated region
              $region63: #{grid_attention_forward.4} parent=39 // pred_check
                _
              $region64: #{grid_attention_forward.4} parent=39 // pred_check_branch
                %358 = sbr.rel target = $region66
              $region65: #{grid_attention_forward.4} parent=39 // pred_region
                _
              $region66: #{grid_attention_forward.4} parent=39 // pred_fallthru
                _
            $region40: #{grid_attention_forward.4} parent=35 // pred_fallthru
              _
            // Predicated region
            $region41: #{grid_attention_forward.4} parent=35 // pred_check
              _
            $region42: #{grid_attention_forward.4} parent=35 // pred_check_branch
              %321 = sbr.rel target = $region44
            $region43: #{grid_attention_forward.4} parent=35 // pred_region
              loop: start=0, step=1, limit=1
              $region45: #{grid_attention_forward.4} parent=43 // loop_pre_header
                _
              $region46: #{grid_attention_forward.4} parent=43 // loop_header
                %s324 = sphi 0, %s328
                %p325 = scmp.ge.s32.totalorder %s324, 1
                %s329 = sphi %s315, %s315
                %s330 = sphi %s311, %s311
              $region47: #{grid_attention_forward.4} parent=43 // loop_header_branch
                %327 = sbr.rel (%p325) target = $region51
              $region48: #{grid_attention_forward.4} parent=43 // loop_body
                %v331 = vld [vmem:[%s329] sm:$0xff]
                %332 = vst [vmem:[%s330] sm:$0xff] %v331
                %v333 = vld [vmem:[%s329 + $0x10] sm:$0xff]
                %334 = vst [vmem:[%s330 + $0x8] sm:$0xff] %v333
                %v335 = vld [vmem:[%s329 + $0x20] sm:$0xff]
                %336 = vst [vmem:[%s330 + $0x10] sm:$0xff] %v335
                %v337 = vld [vmem:[%s329 + $0x30] sm:$0xff]
                %338 = vst [vmem:[%s330 + $0x18] sm:$0xff] %v337
              $region49: #{grid_attention_forward.4} parent=43 // loop_footer
                %s328 = sadd.s32 1, %s324
              $region50: #{grid_attention_forward.4} parent=43 // loop_footer_branch
                %323 = sbr.rel target = $region46
              $region51: #{grid_attention_forward.4} parent=43 // loop_exit
                _
            $region44: #{grid_attention_forward.4} parent=35 // pred_fallthru
              _
          $region36: #{grid_attention_forward.4} parent=31 // pred_fallthru
            _
          %359 = vnop
        $region32: #{grid_attention_forward.4} parent=27 // pred_fallthru
          _
        // Predicated region
        $region67: #{grid_attention_forward.4} parent=27 // pred_check
          %p360 = pneg %p80
        $region68: #{grid_attention_forward.4} parent=27 // pred_check_branch
          %362 = sbr.rel (%p360) target = $region70
        $region69: #{grid_attention_forward.4} parent=27 // pred_region
          %p363 = scmp.lt.s32.totalorder %s27, 1
          %s364 = scalar_select %p363, %s27, 1
          %s365 = smul.addr %s364, 8
          %s366 = scalar_lea.vmem %s1, %s365
        $region70: #{grid_attention_forward.4} parent=27 // pred_fallthru
          _
        // Predicated region
        $region71: #{grid_attention_forward.4} parent=27 // pred_check
          %p367 = pneg %p106
        $region72: #{grid_attention_forward.4} parent=27 // pred_check_branch
          %369 = sbr.rel (%p367) target = $region74
        $region73: #{grid_attention_forward.4} parent=27 // pred_region
          %p370 = scmp.lt.s32.totalorder %s28, 1
          %s371 = scalar_select %p370, %s28, 1
          %s372 = smul.addr %s371, 8
          %s373 = scalar_lea.vmem %s2, %s372
        $region74: #{grid_attention_forward.4} parent=27 // pred_fallthru
          _
      $region28: #{grid_attention_forward.4} parent=5 // pred_fallthru
        _
      %p374 = scmp.le.s32.totalorder 1, %s20
      %p375 = scmp.lt.s32.totalorder %s20, 5
      %p376 = pnand %p374, %p375
      %p377 = pneg %p376
      // Predicated region
      $region75: #{grid_attention_forward.4} parent=5 // pred_check
        _
      $region76: #{grid_attention_forward.4} parent=5 // pred_check_branch
        %379 = sbr.rel (%p376) target = $region78
      $region77: #{grid_attention_forward.4} parent=5 // pred_region
        %s380 = ssub.s32 %s20, 1
        %s381 = sand.u32 %s47, 1
        %s382 = sand.u32 %s47, 1
        %s383 = smul.addr %s382, 32
        %s384 = scalar_lea.vmem [#allocation2], %s383
        // Predicated region
        $region79: #{grid_attention_forward.4} parent=77 // pred_check
          %p385 = pneg %p60
        $region80: #{grid_attention_forward.4} parent=77 // pred_check_branch
          %387 = sbr.rel (%p385) target = $region82
        $region81: #{grid_attention_forward.4} parent=77 // pred_region
          _
        $region82: #{grid_attention_forward.4} parent=77 // pred_fallthru
          _
        // Predicated region
        $region83: #{grid_attention_forward.4} parent=77 // pred_check
          %p388 = pneg %p154
        $region84: #{grid_attention_forward.4} parent=77 // pred_check_branch
          %390 = sbr.rel (%p388) target = $region86
        $region85: #{grid_attention_forward.4} parent=77 // pred_region
          %391 = dma.done [#allocation5], 64
        $region86: #{grid_attention_forward.4} parent=77 // pred_fallthru
          _
        // Predicated region
        $region87: #{grid_attention_forward.4} parent=77 // pred_check
          %p392 = pneg %p175
        $region88: #{grid_attention_forward.4} parent=77 // pred_check_branch
          %394 = sbr.rel (%p392) target = $region90
        $region89: #{grid_attention_forward.4} parent=77 // pred_region
          %395 = dma.done [#allocation7], 16
        $region90: #{grid_attention_forward.4} parent=77 // pred_fallthru
          _
        %396 = sfence
        %s397 = sand.u32 %s47, 1
        %s398 = sand.u32 %s47, 1
        %s399 = smul.addr %s398, 32
        %s400 = scalar_lea.vmem [#allocation2], %s399
        %p401 = pneg %p60
        %p402 = pneg %p57
        %p403 = scmp.lt.s32.totalorder %s29, 1
        %s404 = scalar_select %p403, %s29, 1
        %s405 = smul.addr %s404, 8
        %s406 = scalar_lea.vmem %s1, %s405
        %p407 = pneg %p86
        %p408 = pneg %p83
        %p409 = scmp.lt.s32.totalorder %s30, 1
        %s410 = scalar_select %p409, %s30, 1
        %s411 = smul.addr %s410, 8
        %s412 = scalar_lea.vmem %s2, %s411
        %p413 = pneg %p112
        %p414 = pneg %p109
        %p415 = pneg %p133
        %p416 = pneg %p130
        %p417 = pneg %p154
        %p418 = pneg %p151
        %p419 = pneg %p175
        %p420 = pneg %p172
        %p421 = pneg %p203
        %p422 = pneg %p200
        %s423 = sand.u32 %s190, 1
        %s424 = scalar_lea.sflag [#allocation4], %s423
        %s425 = sand.u32 %s190, 1
        %s426 = smul.addr %s425, 8
        %s427 = scalar_lea.vmem [#allocation8], %s426
        %p428 = pneg %p231
        %p429 = pneg %p228
        %s430 = sand.u32 %s218, 1
        %s431 = sand.u32 %s218, 1
        %s432 = smul.addr %s431, 32
        %s433 = scalar_lea.vmem [#allocation9], %s432
        %p434 = pneg %p261
        %p435 = pneg %p258
        %s436 = smul.u32 %s29, 2
        %s437 = sadd.s32 %s436, %s30
        %p438 = scmp.lt.s32.totalorder %s437, 3
        %s439 = scalar_select %p438, %s437, 3
        %s440 = smul.addr %s439, 8
        %s441 = scalar_lea.vmem %s8, %s440
        %p442 = scmp.lt.s32.totalorder %s29, 1
        %s443 = scalar_select %p442, %s29, 1
        %s444 = smul.addr %s443, 8
        %s445 = scalar_lea.vmem %s1, %s444
        %p446 = scmp.lt.s32.totalorder %s30, 1
        %s447 = scalar_select %p446, %s30, 1
        %s448 = smul.addr %s447, 8
        %s449 = scalar_lea.vmem %s2, %s448
        %s450 = smul.u32 %s29, 2
        %s451 = sadd.s32 %s450, %s30
        %p452 = scmp.lt.s32.totalorder %s451, 3
        %s453 = scalar_select %p452, %s451, 3
        %s454 = smul.addr %s453, 8
        %s455 = scalar_lea.vmem %s8, %s454
        %s456 = smul.u32 %s29, 2
        %s457 = sadd.s32 %s456, %s30
        %v458 = vld [vmem:[%s449] sm:$0xff]
        %v459 = vld [vmem:[%s445] sm:$0xff]
        %vm460 = vcmask 64512
        %v462 = vsel %vm460, %v458, 0
        %464 = vmatprep.subr.mxu0 0.0
        %465 = vmatpush1.msra.mxu0 %v459
        %466 = vmatprep.subr.mxu0 0.0
        %467 = vmatpush1.msra.mxu0 0.0
        %468 = vmatprep.subr.mxu0 0.0
        %469 = vmatpush1.msra.mxu0 0.0
        %470 = vmatprep.subr.mxu0 0.0
        %471 = vmatpush1.msra.mxu0 0.0
        %472 = vmatprep.subr.mxu0 0.0
        %473 = vmatpush1.msra.mxu0 0.0
        %474 = vmatprep.subr.mxu0 0.0
        %475 = vmatpush1.msra.mxu0 0.0
        %476 = vmatprep.subr.mxu0 0.0
        %477 = vmatpush1.msra.mxu0 0.0
        %478 = vmatprep.subr.mxu0 0.0
        %479 = vmatpush1.msra.mxu0 0.0
        %480 = vmatprep.subr.mxu0 0.0
        %481 = vmatpush1.msra.mxu0 0.0
        %482 = vmatprep.subr.mxu0 0.0
        %483 = vmatpush1.msra.mxu0 0.0
        %484 = vmatprep.subr.mxu0 0.0
        %485 = vmatpush1.msra.mxu0 0.0
        %486 = vmatprep.subr.mxu0 0.0
        %487 = vmatpush1.msra.mxu0 0.0
        %488 = vmatprep.subr.mxu0 0.0
        %489 = vmatpush1.msra.mxu0 0.0
        %490 = vmatprep.subr.mxu0 0.0
        %491 = vmatpush1.msra.mxu0 0.0
        %492 = vmatprep.subr.mxu0 0.0
        %493 = vmatpush1.msra.mxu0 0.0
        %494 = vmatprep.subr.mxu0 0.0
        %495 = vmatpush1.msra.mxu0 0.0
        %496 = vmatprep.subr.mxu0 0.0
        %497 = vmatpush1.msra.mxu0 0.0
        %498 = vmatprep.subr.mxu0 0.0
        %499 = vmatpush1.msra.mxu0 0.0
        %500 = vmatprep.subr.mxu0 0.0
        %501 = vmatpush1.msra.mxu0 0.0
        %502 = vmatprep.subr.mxu0 0.0
        %503 = vmatpush1.msra.mxu0 0.0
        %504 = vmatprep.subr.mxu0 0.0
        %505 = vmatpush1.msra.mxu0 0.0
        %506 = vmatprep.subr.mxu0 0.0
        %507 = vmatpush1.msra.mxu0 0.0
        %508 = vmatprep.subr.mxu0 0.0
        %509 = vmatpush1.msra.mxu0 0.0
        %510 = vmatprep.subr.mxu0 0.0
        %511 = vmatpush1.msra.mxu0 0.0
        %512 = vmatprep.subr.mxu0 0.0
        %513 = vmatpush1.msra.mxu0 0.0
        %514 = vmatprep.subr.mxu0 0.0
        %515 = vmatpush1.msra.mxu0 0.0
        %516 = vmatprep.subr.mxu0 0.0
        %517 = vmatpush1.msra.mxu0 0.0
        %518 = vmatprep.subr.mxu0 0.0
        %519 = vmatpush1.msra.mxu0 0.0
        %520 = vmatprep.subr.mxu0 0.0
        %521 = vmatpush1.msra.mxu0 0.0
        %522 = vmatprep.subr.mxu0 0.0
        %523 = vmatpush1.msra.mxu0 0.0
        %524 = vmatprep.subr.mxu0 0.0
        %525 = vmatpush1.msra.mxu0 0.0
        %526 = vmatprep.subr.mxu0 0.0
        %527 = vmatpush1.msra.mxu0 0.0
        %528 = vmatprep.mubr.f32.mxu0 0.0
        %529 = vmatmul.mubr.f32.gmra.mrb[0].mxu0 %v462
        %v530 = vpop.f32.mrb[0].mxu0
        %v531 = vadd.f32 0.0, %v530
        %v532 = vpop.f32.mrb[0].mxu0
        %533 = vdwg.mxu0
        %v534 = vld [vmem:[%s3] sm:$0xff]
        %v536 = vsel %vm460, %v531, 0
        %538 = vmatprep.subr.mxu0 0.0
        %539 = vmatpush1.msra.mxu0 %v534
        %540 = vmatprep.subr.mxu0 0.0
        %541 = vmatpush1.msra.mxu0 0.0
        %542 = vmatprep.subr.mxu0 0.0
        %543 = vmatpush1.msra.mxu0 0.0
        %544 = vmatprep.subr.mxu0 0.0
        %545 = vmatpush1.msra.mxu0 0.0
        %546 = vmatprep.subr.mxu0 0.0
        %547 = vmatpush1.msra.mxu0 0.0
        %548 = vmatprep.subr.mxu0 0.0
        %549 = vmatpush1.msra.mxu0 0.0
        %550 = vmatprep.subr.mxu0 0.0
        %551 = vmatpush1.msra.mxu0 0.0
        %552 = vmatprep.subr.mxu0 0.0
        %553 = vmatpush1.msra.mxu0 0.0
        %554 = vmatprep.subr.mxu0 0.0
        %555 = vmatpush1.msra.mxu0 0.0
        %556 = vmatprep.subr.mxu0 0.0
        %557 = vmatpush1.msra.mxu0 0.0
        %558 = vmatprep.subr.mxu0 0.0
        %559 = vmatpush1.msra.mxu0 0.0
        %560 = vmatprep.subr.mxu0 0.0
        %561 = vmatpush1.msra.mxu0 0.0
        %562 = vmatprep.subr.mxu0 0.0
        %563 = vmatpush1.msra.mxu0 0.0
        %564 = vmatprep.subr.mxu0 0.0
        %565 = vmatpush1.msra.mxu0 0.0
        %566 = vmatprep.subr.mxu0 0.0
        %567 = vmatpush1.msra.mxu0 0.0
        %568 = vmatprep.subr.mxu0 0.0
        %569 = vmatpush1.msra.mxu0 0.0
        %570 = vmatprep.subr.mxu0 0.0
        %571 = vmatpush1.msra.mxu0 0.0
        %572 = vmatprep.subr.mxu0 0.0
        %573 = vmatpush1.msra.mxu0 0.0
        %574 = vmatprep.subr.mxu0 0.0
        %575 = vmatpush1.msra.mxu0 0.0
        %576 = vmatprep.subr.mxu0 0.0
        %577 = vmatpush1.msra.mxu0 0.0
        %578 = vmatprep.subr.mxu0 0.0
        %579 = vmatpush1.msra.mxu0 0.0
        %580 = vmatprep.subr.mxu0 0.0
        %581 = vmatpush1.msra.mxu0 0.0
        %582 = vmatprep.subr.mxu0 0.0
        %583 = vmatpush1.msra.mxu0 0.0
        %584 = vmatprep.subr.mxu0 0.0
        %585 = vmatpush1.msra.mxu0 0.0
        %586 = vmatprep.subr.mxu0 0.0
        %587 = vmatpush1.msra.mxu0 0.0
        %588 = vmatprep.subr.mxu0 0.0
        %589 = vmatpush1.msra.mxu0 0.0
        %590 = vmatprep.subr.mxu0 0.0
        %591 = vmatpush1.msra.mxu0 0.0
        %592 = vmatprep.subr.mxu0 0.0
        %593 = vmatpush1.msra.mxu0 0.0
        %594 = vmatprep.subr.mxu0 0.0
        %595 = vmatpush1.msra.mxu0 0.0
        %596 = vmatprep.subr.mxu0 0.0
        %597 = vmatpush1.msra.mxu0 0.0
        %598 = vmatprep.subr.mxu0 0.0
        %599 = vmatpush1.msra.mxu0 0.0
        %600 = vmatprep.subr.mxu0 0.0
        %601 = vmatpush1.msra.mxu0 0.0
        %602 = vmatprep.mubr.f32.mxu0 0.0
        %603 = vmatmul.mubr.f32.gmra.mrb[0].mxu0 %v536
        %v604 = vpop.f32.mrb[0].mxu0
        %v605 = vadd.f32 0.0, %v604
        %v606 = vpop.f32.mrb[0].mxu0
        %607 = vdwg.mxu0
        %vm608 = vcmask 130048
        %609 = vst.msk [vmem:[%s427] sm:$0xff] %vm608, %v605
        %v610 = vld [vmem:[%s384] sm:$0xff]
        %v611 = vmul.f32 %v610, %v605
        %s612 = scalar_lea.vmem %s384, 8 [#allocation2]
        %v613 = vld [vmem:[%s612] sm:$0xff]
        %v614 = vmul.f32 %v613, %v605
        %s615 = scalar_lea.vmem %s384, 16 [#allocation2]
        %v616 = vld [vmem:[%s615] sm:$0xff]
        %v617 = vmul.f32 %v616, %v605
        %s618 = scalar_lea.vmem %s384, 24 [#allocation2]
        %v619 = vld [vmem:[%s618] sm:$0xff]
        %v620 = vmul.f32 %v619, %v605
        %v621 = vlaneseq
        %v622 = vshrl.u32 %v621, 7
        %v623 = vlaneseq
        %v624 = vand.u32 %v623, 127
        %s625 = sld [smem:[#allocation3]]
        %v626 = vstv %s625
        %v627 = vmul.f32 %v611, %v626
        %s628 = sld [smem:[#allocation3 + $0x1]]
        %v629 = vstv %s628
        %v630 = vmul.f32 %v614, %v629
        %v631 = vadd.f32 %v627, %v630
        %s632 = sld [smem:[#allocation3 + $0x2]]
        %v633 = vstv %s632
        %v634 = vmul.f32 %v617, %v633
        %v635 = vadd.f32 %v631, %v634
        %s636 = sld [smem:[#allocation3 + $0x3]]
        %v637 = vstv %s636
        %v638 = vmul.f32 %v620, %v637
        %v639 = vadd.f32 %v635, %v638
        %s640 = sld [smem:[#allocation6]]
        %v641 = vstv %s640
        %v642 = vadd.f32 %v639, %v641
        %643 = vst.msk [vmem:[%s433] sm:$0xff] %vm608, %v642
        %v644 = vsel %vm608, %v642, 0.0
        %645 = vadd.xlane.f32.xlu0 %v644
        %v646 = vpop.xlane.xlu0 %645
        %v647 = vrot.slane %v646, 4
        %v648 = vadd.f32 %v646, %v647
        %v649 = vrot.slane %v648, 2
        %v650 = vadd.f32 %v648, %v649
        %v651 = vrot.slane %v650, 1
        %v652 = vadd.f32 %v650, %v651
        %v653 = vmul.f32 %v642, %v642
        %v654 = vsel %vm608, %v653, 0.0
        %655 = vadd.xlane.f32.xlu0 %v654
        %v656 = vpop.xlane.xlu0 %655
        %v657 = vrot.slane %v656, 4
        %v658 = vadd.f32 %v656, %v657
        %v659 = vrot.slane %v658, 2
        %v660 = vadd.f32 %v658, %v659
        %v661 = vrot.slane %v660, 1
        %v662 = vadd.f32 %v660, %v661
        %vm663 = vcmp.eq.s32.totalorder %v622, 0
        %vm664 = vcmp.eq.s32.totalorder %v624, 0
        %vm665 = vmand %vm663, %vm664
        %v666 = vsel %vm665, %v652, 0.0
        %v667 = vadd.f32 %v666, 0.0
        %vm668 = vcmp.eq.s32.totalorder %v624, 4
        %vm669 = vmand %vm663, %vm668
        %v670 = vsel %vm669, %v662, 0.0
        %v671 = vadd.f32 %v667, %v670
        %s672 = sld [smem:[#allocation3 + $0x80]]
        %v673 = vstv %s672
        %v674 = vmul.f32 %v611, %v673
        %s675 = sld [smem:[#allocation3 + $0x81]]
        %v676 = vstv %s675
        %v677 = vmul.f32 %v614, %v676
        %v678 = vadd.f32 %v674, %v677
        %s679 = sld [smem:[#allocation3 + $0x82]]
        %v680 = vstv %s679
        %v681 = vmul.f32 %v617, %v680
        %v682 = vadd.f32 %v678, %v681
        %s683 = sld [smem:[#allocation3 + $0x83]]
        %v684 = vstv %s683
        %v685 = vmul.f32 %v620, %v684
        %v686 = vadd.f32 %v682, %v685
        %s687 = sld [smem:[#allocation6 + $0x1]]
        %v688 = vstv %s687
        %v689 = vadd.f32 %v686, %v688
        %s690 = scalar_lea.vmem %s433, 8 [#allocation9]
        %691 = vst.msk [vmem:[%s690] sm:$0xff] %vm608, %v689
        %v692 = vsel %vm608, %v689, 0.0
        %693 = vadd.xlane.f32.xlu0 %v692
        %v694 = vpop.xlane.xlu0 %693
        %v695 = vrot.slane %v694, 4
        %v696 = vadd.f32 %v694, %v695
        %v697 = vrot.slane %v696, 2
        %v698 = vadd.f32 %v696, %v697
        %v699 = vrot.slane %v698, 1
        %v700 = vadd.f32 %v698, %v699
        %v701 = vmul.f32 %v689, %v689
        %v702 = vsel %vm608, %v701, 0.0
        %703 = vadd.xlane.f32.xlu0 %v702
        %v704 = vpop.xlane.xlu0 %703
        %v705 = vrot.slane %v704, 4
        %v706 = vadd.f32 %v704, %v705
        %v707 = vrot.slane %v706, 2
        %v708 = vadd.f32 %v706, %v707
        %v709 = vrot.slane %v708, 1
        %v710 = vadd.f32 %v708, %v709
        %vm711 = vcmp.eq.s32.totalorder %v624, 1
        %vm712 = vmand %vm663, %vm711
        %v713 = vsel %vm712, %v700, 0.0
        %v714 = vadd.f32 %v671, %v713
        %vm715 = vcmp.eq.s32.totalorder %v624, 5
        %vm716 = vmand %vm663, %vm715
        %v717 = vsel %vm716, %v710, 0.0
        %v718 = vadd.f32 %v714, %v717
        %s719 = sld [smem:[#allocation3 + $0x100]]
        %v720 = vstv %s719
        %v721 = vmul.f32 %v611, %v720
        %s722 = sld [smem:[#allocation3 + $0x101]]
        %v723 = vstv %s722
        %v724 = vmul.f32 %v614, %v723
        %v725 = vadd.f32 %v721, %v724
        %s726 = sld [smem:[#allocation3 + $0x102]]
        %v727 = vstv %s726
        %v728 = vmul.f32 %v617, %v727
        %v729 = vadd.f32 %v725, %v728
        %s730 = sld [smem:[#allocation3 + $0x103]]
        %v731 = vstv %s730
        %v732 = vmul.f32 %v620, %v731
        %v733 = vadd.f32 %v729, %v732
        %s734 = sld [smem:[#allocation6 + $0x2]]
        %v735 = vstv %s734
        %v736 = vadd.f32 %v733, %v735
        %s737 = scalar_lea.vmem %s433, 16 [#allocation9]
        %738 = vst.msk [vmem:[%s737] sm:$0xff] %vm608, %v736
        %v739 = vsel %vm608, %v736, 0.0
        %740 = vadd.xlane.f32.xlu0 %v739
        %v741 = vpop.xlane.xlu0 %740
        %v742 = vrot.slane %v741, 4
        %v743 = vadd.f32 %v741, %v742
        %v744 = vrot.slane %v743, 2
        %v745 = vadd.f32 %v743, %v744
        %v746 = vrot.slane %v745, 1
        %v747 = vadd.f32 %v745, %v746
        %v748 = vmul.f32 %v736, %v736
        %v749 = vsel %vm608, %v748, 0.0
        %750 = vadd.xlane.f32.xlu0 %v749
        %v751 = vpop.xlane.xlu0 %750
        %v752 = vrot.slane %v751, 4
        %v753 = vadd.f32 %v751, %v752
        %v754 = vrot.slane %v753, 2
        %v755 = vadd.f32 %v753, %v754
        %v756 = vrot.slane %v755, 1
        %v757 = vadd.f32 %v755, %v756
        %vm758 = vcmp.eq.s32.totalorder %v624, 2
        %vm759 = vmand %vm663, %vm758
        %v760 = vsel %vm759, %v747, 0.0
        %v761 = vadd.f32 %v718, %v760
        %vm762 = vcmp.eq.s32.totalorder %v624, 6
        %vm763 = vmand %vm663, %vm762
        %v764 = vsel %vm763, %v757, 0.0
        %v765 = vadd.f32 %v761, %v764
        %s766 = sld [smem:[#allocation3 + $0x180]]
        %v767 = vstv %s766
        %v768 = vmul.f32 %v611, %v767
        %s769 = sld [smem:[#allocation3 + $0x181]]
        %v770 = vstv %s769
        %v771 = vmul.f32 %v614, %v770
        %v772 = vadd.f32 %v768, %v771
        %s773 = sld [smem:[#allocation3 + $0x182]]
        %v774 = vstv %s773
        %v775 = vmul.f32 %v617, %v774
        %v776 = vadd.f32 %v772, %v775
        %s777 = sld [smem:[#allocation3 + $0x183]]
        %v778 = vstv %s777
        %v779 = vmul.f32 %v620, %v778
        %v780 = vadd.f32 %v776, %v779
        %s781 = sld [smem:[#allocation6 + $0x3]]
        %v782 = vstv %s781
        %v783 = vadd.f32 %v780, %v782
        %s784 = scalar_lea.vmem %s433, 24 [#allocation9]
        %785 = vst.msk [vmem:[%s784] sm:$0xff] %vm608, %v783
        %v786 = vsel %vm608, %v783, 0.0
        %787 = vadd.xlane.f32.xlu0 %v786
        %v788 = vpop.xlane.xlu0 %787
        %v789 = vrot.slane %v788, 4
        %v790 = vadd.f32 %v788, %v789
        %v791 = vrot.slane %v790, 2
        %v792 = vadd.f32 %v790, %v791
        %v793 = vrot.slane %v792, 1
        %v794 = vadd.f32 %v792, %v793
        %v795 = vmul.f32 %v783, %v783
        %v796 = vsel %vm608, %v795, 0.0
        %797 = vadd.xlane.f32.xlu0 %v796
        %v798 = vpop.xlane.xlu0 %797
        %v799 = vrot.slane %v798, 4
        %v800 = vadd.f32 %v798, %v799
        %v801 = vrot.slane %v800, 2
        %v802 = vadd.f32 %v800, %v801
        %v803 = vrot.slane %v802, 1
        %v804 = vadd.f32 %v802, %v803
        %vm805 = vcmp.eq.s32.totalorder %v624, 3
        %vm806 = vmand %vm663, %vm805
        %v807 = vsel %vm806, %v794, 0.0
        %v808 = vadd.f32 %v765, %v807
        %vm809 = vcmp.eq.s32.totalorder %v624, 7
        %vm810 = vmand %vm663, %vm809
        %v811 = vsel %vm810, %v804, 0.0
        %v812 = vadd.f32 %v808, %v811
        %813 = vst.msk [vmem:[%s455] sm:$0xff] %vm460, %v812
        %s814 = sand.u32 %s190, 1
        %s815 = scalar_lea.sflag [#allocation4], %s814
        %s816 = sand.u32 %s190, 1
        %s817 = smul.addr %s816, 8
        %s818 = scalar_lea.vmem [#allocation8], %s817
        %s819 = sand.u32 %s218, 1
        %s820 = sand.u32 %s218, 1
        %s821 = smul.addr %s820, 32
        %s822 = scalar_lea.vmem [#allocation9], %s821
        %s823 = smul.u32 %s29, 2
        %s824 = sadd.s32 %s823, %s30
        %p825 = scmp.lt.s32.totalorder %s824, 3
        %s826 = scalar_select %p825, %s824, 3
        %s827 = smul.addr %s826, 8
        %s828 = scalar_lea.vmem %s8, %s827
        // Predicated region
        $region91: #{grid_attention_forward.4} parent=77 // pred_check
          %p829 = pneg %p200
        $region92: #{grid_attention_forward.4} parent=77 // pred_check_branch
          %831 = sbr.rel (%p829) target = $region94
        $region93: #{grid_attention_forward.4} parent=77 // pred_region
          %s833 = ssub.s32 128, 128
          %834 = vsyncadd %s815, %s833
          %s835 = smul.addr %s29, 2
          %s836 = sadd.s32 %s30, %s835
          %s837 = smul.addr %s836, 128
          %s838 = scalar_lea.hbm %s6, %s837
          %s840 = sshll.u32 %s818, 4
          %s841 = int_to_ptr.vmem [resolvable:$true] %s840
          %843 = dma.vmem_to_hbm [thread:$0]  %s841, 128, %s838, %s815
        $region94: #{grid_attention_forward.4} parent=77 // pred_fallthru
          _
        // Predicated region
        $region95: #{grid_attention_forward.4} parent=77 // pred_check
          %p844 = pneg %p228
        $region96: #{grid_attention_forward.4} parent=77 // pred_check_branch
          %846 = sbr.rel (%p844) target = $region98
        $region97: #{grid_attention_forward.4} parent=77 // pred_region
          %s847 = smul.addr %s29, 8
          %s848 = sadd.s32 %s30, %s847
          %s849 = smul.addr %s848, 8
          %s850 = scalar_lea.vmem %s7, %s849
          // Predicated region
          $region99: #{grid_attention_forward.4} parent=97 // pred_check
            _
          $region100: #{grid_attention_forward.4} parent=97 // pred_check_branch
            %852 = sbr.rel (0) target = $region102
          $region101: #{grid_attention_forward.4} parent=97 // pred_region
            // Predicated region
            $region103: #{grid_attention_forward.4} parent=101 // pred_check
              _
            $region104: #{grid_attention_forward.4} parent=101 // pred_check_branch
              %854 = sbr.rel (0) target = $region106
            $region105: #{grid_attention_forward.4} parent=101 // pred_region
              // Predicated region
              $region118: #{grid_attention_forward.4} parent=105 // pred_check
                _
              $region119: #{grid_attention_forward.4} parent=105 // pred_check_branch
                %875 = sbr.rel (0) target = $region121
              $region120: #{grid_attention_forward.4} parent=105 // pred_region
                loop: start=0, step=1, limit=1
                $region122: #{grid_attention_forward.4} parent=120 // loop_pre_header
                  _
                $region123: #{grid_attention_forward.4} parent=120 // loop_header
                  %s877 = sphi 0, %s881
                  %p878 = scmp.ge.s32.totalorder %s877, 1
                  %s882 = sphi %s822, %s822
                  %s883 = sphi %s850, %s850
                $region124: #{grid_attention_forward.4} parent=120 // loop_header_branch
                  %880 = sbr.rel (%p878) target = $region128
                $region125: #{grid_attention_forward.4} parent=120 // loop_body
                  %v884 = vld [vmem:[%s882] sm:$0xff]
                  %885 = vst [vmem:[%s883] sm:$0xff] %v884
                  %v886 = vld [vmem:[%s882 + $0x8] sm:$0xff]
                  %887 = vst [vmem:[%s883 + $0x10] sm:$0xff] %v886
                  %v888 = vld [vmem:[%s882 + $0x10] sm:$0xff]
                  %889 = vst [vmem:[%s883 + $0x20] sm:$0xff] %v888
                  %v890 = vld [vmem:[%s882 + $0x18] sm:$0xff]
                  %891 = vst [vmem:[%s883 + $0x30] sm:$0xff] %v890
                $region126: #{grid_attention_forward.4} parent=120 // loop_footer
                  %s881 = sadd.s32 1, %s877
                $region127: #{grid_attention_forward.4} parent=120 // loop_footer_branch
                  %876 = sbr.rel target = $region123
                $region128: #{grid_attention_forward.4} parent=120 // loop_exit
                  _
              $region121: #{grid_attention_forward.4} parent=105 // pred_fallthru
                _
              // Predicated region
              $region129: #{grid_attention_forward.4} parent=105 // pred_check
                _
              $region130: #{grid_attention_forward.4} parent=105 // pred_check_branch
                %893 = sbr.rel target = $region132
              $region131: #{grid_attention_forward.4} parent=105 // pred_region
                _
              $region132: #{grid_attention_forward.4} parent=105 // pred_fallthru
                _
            $region106: #{grid_attention_forward.4} parent=101 // pred_fallthru
              _
            // Predicated region
            $region107: #{grid_attention_forward.4} parent=101 // pred_check
              _
            $region108: #{grid_attention_forward.4} parent=101 // pred_check_branch
              %856 = sbr.rel target = $region110
            $region109: #{grid_attention_forward.4} parent=101 // pred_region
              loop: start=0, step=1, limit=1
              $region111: #{grid_attention_forward.4} parent=109 // loop_pre_header
                _
              $region112: #{grid_attention_forward.4} parent=109 // loop_header
                %s859 = sphi 0, %s863
                %p860 = scmp.ge.s32.totalorder %s859, 1
                %s864 = sphi %s822, %s822
                %s865 = sphi %s850, %s850
              $region113: #{grid_attention_forward.4} parent=109 // loop_header_branch
                %862 = sbr.rel (%p860) target = $region117
              $region114: #{grid_attention_forward.4} parent=109 // loop_body
                %v866 = vld [vmem:[%s864] sm:$0xff]
                %867 = vst [vmem:[%s865] sm:$0xff] %v866
                %v868 = vld [vmem:[%s864 + $0x8] sm:$0xff]
                %869 = vst [vmem:[%s865 + $0x10] sm:$0xff] %v868
                %v870 = vld [vmem:[%s864 + $0x10] sm:$0xff]
                %871 = vst [vmem:[%s865 + $0x20] sm:$0xff] %v870
                %v872 = vld [vmem:[%s864 + $0x18] sm:$0xff]
                %873 = vst [vmem:[%s865 + $0x30] sm:$0xff] %v872
              $region115: #{grid_attention_forward.4} parent=109 // loop_footer
                %s863 = sadd.s32 1, %s859
              $region116: #{grid_attention_forward.4} parent=109 // loop_footer_branch
                %858 = sbr.rel target = $region112
              $region117: #{grid_attention_forward.4} parent=109 // loop_exit
                _
            $region110: #{grid_attention_forward.4} parent=101 // pred_fallthru
              _
          $region102: #{grid_attention_forward.4} parent=97 // pred_fallthru
            _
          %894 = vnop
        $region98: #{grid_attention_forward.4} parent=77 // pred_fallthru
          _
        // Predicated region
        $region133: #{grid_attention_forward.4} parent=77 // pred_check
          %p895 = pneg %p258
        $region134: #{grid_attention_forward.4} parent=77 // pred_check_branch
          %897 = sbr.rel (%p895) target = $region136
        $region135: #{grid_attention_forward.4} parent=77 // pred_region
          %s898 = smul.u32 %s29, 2
          %s899 = sadd.s32 %s898, %s30
        $region136: #{grid_attention_forward.4} parent=77 // pred_fallthru
          _
      $region78: #{grid_attention_forward.4} parent=5 // pred_fallthru
        _
      %p900 = scmp.le.s32.totalorder 2, %s20
      // Predicated region
      $region137: #{grid_attention_forward.4} parent=5 // pred_check
        %p901 = pneg %p900
      $region138: #{grid_attention_forward.4} parent=5 // pred_check_branch
        %903 = sbr.rel (%p901) target = $region140
      $region139: #{grid_attention_forward.4} parent=5 // pred_region
        %s904 = ssub.s32 %s20, 2
        // Predicated region
        $region141: #{grid_attention_forward.4} parent=139 // pred_check
          %p905 = pneg %p206
        $region142: #{grid_attention_forward.4} parent=139 // pred_check_branch
          %907 = sbr.rel (%p905) target = $region144
        $region143: #{grid_attention_forward.4} parent=139 // pred_region
          %s908 = sand.u32 %s191, 1
          %s909 = scalar_lea.sflag [#allocation4], %s908
          %s910 = sand.u32 %s191, 1
          %s911 = smul.addr %s910, 8
          %s912 = scalar_lea.vmem [#allocation8], %s911
          %913 = dma.done %s909, 128
        $region144: #{grid_attention_forward.4} parent=139 // pred_fallthru
          _
        // Predicated region
        $region145: #{grid_attention_forward.4} parent=139 // pred_check
          %p914 = pneg %p234
        $region146: #{grid_attention_forward.4} parent=139 // pred_check_branch
          %916 = sbr.rel (%p914) target = $region148
        $region147: #{grid_attention_forward.4} parent=139 // pred_region
          %s917 = sand.u32 %s219, 1
          %s918 = sand.u32 %s219, 1
          %s919 = smul.addr %s918, 32
          %s920 = scalar_lea.vmem [#allocation9], %s919
        $region148: #{grid_attention_forward.4} parent=139 // pred_fallthru
          _
        // Predicated region
        $region149: #{grid_attention_forward.4} parent=139 // pred_check
          %p921 = pneg %p264
        $region150: #{grid_attention_forward.4} parent=139 // pred_check_branch
          %923 = sbr.rel (%p921) target = $region152
        $region151: #{grid_attention_forward.4} parent=139 // pred_region
          %s924 = smul.u32 %s31, 2
          %s925 = sadd.s32 %s924, %s32
          %p926 = scmp.lt.s32.totalorder %s925, 3
          %s927 = scalar_select %p926, %s925, 3
          %s928 = smul.addr %s927, 8
          %s929 = scalar_lea.vmem %s8, %s928
        $region152: #{grid_attention_forward.4} parent=139 // pred_fallthru
          _
      $region140: #{grid_attention_forward.4} parent=5 // pred_fallthru
        _
    $region6: #{grid_attention_forward.4} parent=1 // loop_footer
      %s24 = sadd.s32 1, %s20
    $region7: #{grid_attention_forward.4} parent=1 // loop_footer_branch
      %19 = sbr.rel target = $region3
    $region8: #{grid_attention_forward.4} parent=1 // loop_exit
      _
    %930 = vsyncpa [#allocation4], 1
    %s931 = scalar_lea.sflag [#allocation4], 1
    %932 = vsyncpa %s931, 1
    %933 = vsyncpa [#allocation5], 1
    %s934 = scalar_lea.sflag [#allocation5], 1
    %935 = vsyncpa %s934, 1
    %936 = vsyncpa [#allocation7], 1

// kernel: grid_attention_forward.3
$region0: #{grid_attention_forward.3}
  #allocation0 [shape = 'u32[]', space=smem, size = 0x4, offset = 0x4, fixed_abs, tag = 'smem constant byte address 0x4 - core index']
  #allocation1 [shape = 'u32[144,128]{1,0:T(1,128)}', space=vmem, size = 0x12000, scoped, tag = 'internal scratch']
  #allocation2 [shape = 'f32[1]{0:T(128)S(6)}', space=smem, size = 0x200, scoped, tag = 'scoped memory for grid_attention_forward.3']
  %s0 = inlined_call_operand.vmem [shape: f32[2,16,8,8], index: 0, kind: input, shape index: {}]
  %s1 = inlined_call_operand.vmem [shape: f32[2,8,4,4], index: 1, kind: input, shape index: {}]
  %s2 = inlined_call_operand.vmem [shape: f32[8,4], index: 2, kind: input, shape index: {}]
  %s3 = inlined_call_operand.vmem [shape: f32[4,8], index: 3, kind: input, shape index: {}]
  %s4 = inlined_call_operand.vmem [shape: f32[2,16], index: 4, kind: input, shape index: {}]
  %s5 = inlined_call_operand.vmem [shape: f32[2,8], index: 5, kind: input, shape index: {}]
  %s6 = inlined_call_operand.vmem [shape: f32[2], index: 6, kind: input, shape index: {}]
  %s7 = inlined_call_operand.vmem [shape: f32[2], index: 7, kind: input, shape index: {}]
  %s8 = inlined_call_operand.<no memory space> [shape: f32[1], index: 8, kind: input, shape index: {}]
  %s9 = inlined_call_operand.vmem [shape: f32[2,8,8], index: 9, kind: output, shape index: {}]
  %s10 = sld [smem:[#allocation0]]
  $region85: #{grid_attention_forward.3} parent=0
    _
  %s12 = ssub.s32 1, %s10
  %s13 = scalar_select 0, %s12, %s10
  %14 = sst [smem:[#allocation2]] %s8
  $region1: #{grid_attention_forward.3} parent=0
    #allocation3 [shape = 'u8[1024]{0}', space=smem, size = 0x400, scoped, tag = 'input window, operand 4, single buffered']
    #allocation4 [shape = 's32[2]{0}', space=sflag, size = 0x8, scoped, tag = 'scoped memory for grid_attention_forward.3']
    #allocation5 [shape = 'u8[1024]{0}', space=smem, size = 0x400, scoped, tag = 'input window, operand 5, single buffered']
    #allocation6 [shape = 's32[1]{0}', space=sflag, size = 0x4, scoped, tag = 'scoped memory for grid_attention_forward.3']
    #allocation7 [shape = 'u8[512]{0}', space=smem, size = 0x200, scoped, tag = 'input window, operand 6, single buffered']
    #allocation8 [shape = 'u8[512]{0}', space=smem, size = 0x200, scoped, tag = 'input window, operand 7, single buffered']
    #allocation9 [shape = 's32[1]{0}', space=sflag, size = 0x4, scoped, tag = 'scoped memory for grid_attention_forward.3']
    %15 = vsyncpa [#allocation4], 0
    %16 = vsyncpa [#allocation6], 0
    %17 = vsyncpa [#allocation9], 0
    loop: start=0, step=1, limit=4
    $region2: #{grid_attention_forward.3} parent=1 // loop_pre_header
      _
    $region3: #{grid_attention_forward.3} parent=1 // loop_header
      %s19 = sphi 0, %s23
      %p20 = scmp.ge.s32.totalorder %s19, 4
      %s26 = sphi 0, %s38
      %s27 = sphi 0, %s34
      %s28 = sphi 0, %s26
      %s29 = sphi 0, %s27
      %s30 = sphi 0, %s28
      %s31 = sphi 0, %s29
      %s43 = sphi 0, %s45
      %s46 = sphi 0, %s43
      %s47 = sphi 0, %s46
      %s63 = sphi 0, %s47
      %s69 = sphi 0, %s71
      %s72 = sphi 0, %s69
      %s73 = sphi 0, %s72
      %s89 = sphi 0, %s73
      %s95 = sphi 0, %s97
      %s98 = sphi 0, %s95
      %s99 = sphi 0, %s98
      %s115 = sphi 0, %s99
      %s119 = sphi 0, %s119
      %s121 = sphi 0, %s119
      %s122 = sphi 0, %s121
      %s136 = sphi 0, %s122
      %s140 = sphi 0, %s140
      %s142 = sphi 0, %s140
      %s143 = sphi 0, %s142
      %s157 = sphi 0, %s143
      %s161 = sphi 0, %s161
      %s163 = sphi 0, %s161
      %s164 = sphi 0, %s163
      %s178 = sphi 0, %s164
      %s182 = sphi 0, %s182
      %s184 = sphi 0, %s182
      %s185 = sphi 0, %s184
      %s199 = sphi 0, %s185
      %s203 = sphi 0, %s203
      %s205 = sphi 0, %s203
      %s206 = sphi 0, %s205
      %s220 = sphi 0, %s206
      %s224 = sphi 0, %s224
      %s226 = sphi 0, %s224
      %s227 = sphi 0, %s226
      %s241 = sphi 0, %s227
      %s249 = sphi 0, %s251
      %s252 = sphi 0, %s249
      %s253 = sphi 0, %s252
      %s269 = sphi 0, %s253
    $region4: #{grid_attention_forward.3} parent=1 // loop_header_branch
      %22 = sbr.rel (%p20) target = $region8
    $region5: #{grid_attention_forward.3} parent=1 // loop_body
      %s24 = ssub.s32 %s19, 1
      %s25 = ssub.s32 %s19, 2
      %s32 = sadd.s32 1, %s27
      %p33 = scmp.ge.s32.totalorder %s32, 1
      %s34 = scalar_select %p33, 0, %s32
      %s35 = sadd.s32 1, %s26
      %s36 = scalar_select %p33, %s35, %s26
      %p37 = scmp.ge.s32.totalorder %s36, 2
      %s38 = scalar_select %p37, 0, %s36
      %s39 = ssub.s32 %s26, %s38
      %s40 = ssub.s32 %s27, %s34
      %s41 = sor.u32 %s39, %s40
      %p42 = scmp.eq.s32.totalorder %s41, 0
      %s44 = sadd.s32 %s43, 1
      %s45 = scalar_select %p42, %s43, %s44
      %p48 = pneg %p42
      %p49 = scmp.eq.s32.totalorder %s19, 1
      %p50 = por %p48, %p49
      %p51 = scmp.ne.s32.totalorder %s43, %s46
      %p52 = scmp.eq.s32.totalorder %s19, 0
      %p53 = por %p51, %p52
      %p54 = scmp.ne.s32.totalorder %s43, %s46
      %p55 = scmp.eq.s32.totalorder %s24, 1
      %p56 = por %p54, %p55
      %p57 = scmp.ne.s32.totalorder %s46, %s47
      %p58 = scmp.eq.s32.totalorder %s24, 0
      %p59 = por %p57, %p58
      %p60 = scmp.ne.s32.totalorder %s46, %s47
      %p61 = scmp.eq.s32.totalorder %s25, 1
      %p62 = por %p60, %p61
      %p64 = scmp.ne.s32.totalorder %s47, %s63
      %p65 = scmp.eq.s32.totalorder %s25, 0
      %p66 = por %p64, %p65
      %s67 = ssub.s32 %s26, %s38
      %p68 = scmp.eq.s32.totalorder %s67, 0
      %s70 = sadd.s32 %s69, 1
      %s71 = scalar_select %p68, %s69, %s70
      %p74 = pneg %p68
      %p75 = scmp.eq.s32.totalorder %s19, 1
      %p76 = por %p74, %p75
      %p77 = scmp.ne.s32.totalorder %s69, %s72
      %p78 = scmp.eq.s32.totalorder %s19, 0
      %p79 = por %p77, %p78
      %p80 = scmp.ne.s32.totalorder %s69, %s72
      %p81 = scmp.eq.s32.totalorder %s24, 1
      %p82 = por %p80, %p81
      %p83 = scmp.ne.s32.totalorder %s72, %s73
      %p84 = scmp.eq.s32.totalorder %s24, 0
      %p85 = por %p83, %p84
      %p86 = scmp.ne.s32.totalorder %s72, %s73
      %p87 = scmp.eq.s32.totalorder %s25, 1
      %p88 = por %p86, %p87
      %p90 = scmp.ne.s32.totalorder %s73, %s89
      %p91 = scmp.eq.s32.totalorder %s25, 0
      %p92 = por %p90, %p91
      %s93 = ssub.s32 %s27, %s34
      %p94 = scmp.eq.s32.totalorder %s93, 0
      %s96 = sadd.s32 %s95, 1
      %s97 = scalar_select %p94, %s95, %s96
      %p100 = pneg %p94
      %p101 = scmp.eq.s32.totalorder %s19, 1
      %p102 = por %p100, %p101
      %p103 = scmp.ne.s32.totalorder %s95, %s98
      %p104 = scmp.eq.s32.totalorder %s19, 0
      %p105 = por %p103, %p104
      %p106 = scmp.ne.s32.totalorder %s95, %s98
      %p107 = scmp.eq.s32.totalorder %s24, 1
      %p108 = por %p106, %p107
      %p109 = scmp.ne.s32.totalorder %s98, %s99
      %p110 = scmp.eq.s32.totalorder %s24, 0
      %p111 = por %p109, %p110
      %p112 = scmp.ne.s32.totalorder %s98, %s99
      %p113 = scmp.eq.s32.totalorder %s25, 1
      %p114 = por %p112, %p113
      %p116 = scmp.ne.s32.totalorder %s99, %s115
      %p117 = scmp.eq.s32.totalorder %s25, 0
      %p118 = por %p116, %p117
      %s120 = sadd.s32 %s119, 1
      %p123 = scmp.eq.s32.totalorder %s19, 1
      %p124 = scmp.ne.s32.totalorder %s119, %s121
      %p125 = scmp.eq.s32.totalorder %s19, 0
      %p126 = por %p124, %p125
      %p127 = scmp.ne.s32.totalorder %s119, %s121
      %p128 = scmp.eq.s32.totalorder %s24, 1
      %p129 = por %p127, %p128
      %p130 = scmp.ne.s32.totalorder %s121, %s122
      %p131 = scmp.eq.s32.totalorder %s24, 0
      %p132 = por %p130, %p131
      %p133 = scmp.ne.s32.totalorder %s121, %s122
      %p134 = scmp.eq.s32.totalorder %s25, 1
      %p135 = por %p133, %p134
      %p137 = scmp.ne.s32.totalorder %s122, %s136
      %p138 = scmp.eq.s32.totalorder %s25, 0
      %p139 = por %p137, %p138
      %s141 = sadd.s32 %s140, 1
      %p144 = scmp.eq.s32.totalorder %s19, 1
      %p145 = scmp.ne.s32.totalorder %s140, %s142
      %p146 = scmp.eq.s32.totalorder %s19, 0
      %p147 = por %p145, %p146
      %p148 = scmp.ne.s32.totalorder %s140, %s142
      %p149 = scmp.eq.s32.totalorder %s24, 1
      %p150 = por %p148, %p149
      %p151 = scmp.ne.s32.totalorder %s142, %s143
      %p152 = scmp.eq.s32.totalorder %s24, 0
      %p153 = por %p151, %p152
      %p154 = scmp.ne.s32.totalorder %s142, %s143
      %p155 = scmp.eq.s32.totalorder %s25, 1
      %p156 = por %p154, %p155
      %p158 = scmp.ne.s32.totalorder %s143, %s157
      %p159 = scmp.eq.s32.totalorder %s25, 0
      %p160 = por %p158, %p159
      %s162 = sadd.s32 %s161, 1
      %p165 = scmp.eq.s32.totalorder %s19, 1
      %p166 = scmp.ne.s32.totalorder %s161, %s163
      %p167 = scmp.eq.s32.totalorder %s19, 0
      %p168 = por %p166, %p167
      %p169 = scmp.ne.s32.totalorder %s161, %s163
      %p170 = scmp.eq.s32.totalorder %s24, 1
      %p171 = por %p169, %p170
      %p172 = scmp.ne.s32.totalorder %s163, %s164
      %p173 = scmp.eq.s32.totalorder %s24, 0
      %p174 = por %p172, %p173
      %p175 = scmp.ne.s32.totalorder %s163, %s164
      %p176 = scmp.eq.s32.totalorder %s25, 1
      %p177 = por %p175, %p176
      %p179 = scmp.ne.s32.totalorder %s164, %s178
      %p180 = scmp.eq.s32.totalorder %s25, 0
      %p181 = por %p179, %p180
      %s183 = sadd.s32 %s182, 1
      %p186 = scmp.eq.s32.totalorder %s19, 1
      %p187 = scmp.ne.s32.totalorder %s182, %s184
      %p188 = scmp.eq.s32.totalorder %s19, 0
      %p189 = por %p187, %p188
      %p190 = scmp.ne.s32.totalorder %s182, %s184
      %p191 = scmp.eq.s32.totalorder %s24, 1
      %p192 = por %p190, %p191
      %p193 = scmp.ne.s32.totalorder %s184, %s185
      %p194 = scmp.eq.s32.totalorder %s24, 0
      %p195 = por %p193, %p194
      %p196 = scmp.ne.s32.totalorder %s184, %s185
      %p197 = scmp.eq.s32.totalorder %s25, 1
      %p198 = por %p196, %p197
      %p200 = scmp.ne.s32.totalorder %s185, %s199
      %p201 = scmp.eq.s32.totalorder %s25, 0
      %p202 = por %p200, %p201
      %s204 = sadd.s32 %s203, 1
      %p207 = scmp.eq.s32.totalorder %s19, 1
      %p208 = scmp.ne.s32.totalorder %s203, %s205
      %p209 = scmp.eq.s32.totalorder %s19, 0
      %p210 = por %p208, %p209
      %p211 = scmp.ne.s32.totalorder %s203, %s205
      %p212 = scmp.eq.s32.totalorder %s24, 1
      %p213 = por %p211, %p212
      %p214 = scmp.ne.s32.totalorder %s205, %s206
      %p215 = scmp.eq.s32.totalorder %s24, 0
      %p216 = por %p214, %p215
      %p217 = scmp.ne.s32.totalorder %s205, %s206
      %p218 = scmp.eq.s32.totalorder %s25, 1
      %p219 = por %p217, %p218
      %p221 = scmp.ne.s32.totalorder %s206, %s220
      %p222 = scmp.eq.s32.totalorder %s25, 0
      %p223 = por %p221, %p222
      %s225 = sadd.s32 %s224, 1
      %p228 = scmp.eq.s32.totalorder %s19, 1
      %p229 = scmp.ne.s32.totalorder %s224, %s226
      %p230 = scmp.eq.s32.totalorder %s19, 0
      %p231 = por %p229, %p230
      %p232 = scmp.ne.s32.totalorder %s224, %s226
      %p233 = scmp.eq.s32.totalorder %s24, 1
      %p234 = por %p232, %p233
      %p235 = scmp.ne.s32.totalorder %s226, %s227
      %p236 = scmp.eq.s32.totalorder %s24, 0
      %p237 = por %p235, %p236
      %p238 = scmp.ne.s32.totalorder %s226, %s227
      %p239 = scmp.eq.s32.totalorder %s25, 1
      %p240 = por %p238, %p239
      %p242 = scmp.ne.s32.totalorder %s227, %s241
      %p243 = scmp.eq.s32.totalorder %s25, 0
      %p244 = por %p242, %p243
      %s245 = ssub.s32 %s26, %s38
      %s246 = ssub.s32 %s27, %s34
      %s247 = sor.u32 %s245, %s246
      %p248 = scmp.eq.s32.totalorder %s247, 0
      %s250 = sadd.s32 %s249, 1
      %s251 = scalar_select %p248, %s249, %s250
      %p254 = pneg %p248
      %p255 = scmp.eq.s32.totalorder %s19, 1
      %p256 = por %p254, %p255
      %p257 = scmp.ne.s32.totalorder %s249, %s252
      %p258 = scmp.eq.s32.totalorder %s19, 0
      %p259 = por %p257, %p258
      %p260 = scmp.ne.s32.totalorder %s249, %s252
      %p261 = scmp.eq.s32.totalorder %s24, 1
      %p262 = por %p260, %p261
      %p263 = scmp.ne.s32.totalorder %s252, %s253
      %p264 = scmp.eq.s32.totalorder %s24, 0
      %p265 = por %p263, %p264
      %p266 = scmp.ne.s32.totalorder %s252, %s253
      %p267 = scmp.eq.s32.totalorder %s25, 1
      %p268 = por %p266, %p267
      %p270 = scmp.ne.s32.totalorder %s253, %s269
      %p271 = scmp.eq.s32.totalorder %s25, 0
      %p272 = por %p270, %p271
      %p273 = scmp.le.s32.totalorder 1, %s19
      %p274 = scmp.lt.s32.totalorder %s19, 3
      %p275 = pnand %p273, %p274
      %p276 = pneg %p275
      // Predicated region
      $region9: #{grid_attention_forward.3} parent=5 // pred_check
        _
      $region10: #{grid_attention_forward.3} parent=5 // pred_check_branch
        %278 = sbr.rel (%p275) target = $region12
      $region11: #{grid_attention_forward.3} parent=5 // pred_region
        %s279 = ssub.s32 %s19, 1
        // Predicated region
        $region13: #{grid_attention_forward.3} parent=11 // pred_check
          %p280 = pneg %p111
        $region14: #{grid_attention_forward.3} parent=11 // pred_check_branch
          %282 = sbr.rel (%p280) target = $region16
        $region15: #{grid_attention_forward.3} parent=11 // pred_region
          %p283 = scmp.lt.s32.totalorder %s29, 0
          %s284 = scalar_select %p283, %s29, 0
          %s285 = smul.addr %s284, 8
          %s286 = scalar_lea.vmem %s2, %s285
        $region16: #{grid_attention_forward.3} parent=11 // pred_fallthru
          _
        // Predicated region
        $region17: #{grid_attention_forward.3} parent=11 // pred_check
          %p287 = pneg %p132
        $region18: #{grid_attention_forward.3} parent=11 // pred_check_branch
          %289 = sbr.rel (%p287) target = $region20
        $region19: #{grid_attention_forward.3} parent=11 // pred_region
          _
        $region20: #{grid_attention_forward.3} parent=11 // pred_fallthru
          _
        // Predicated region
        $region21: #{grid_attention_forward.3} parent=11 // pred_check
          %p290 = pneg %p153
        $region22: #{grid_attention_forward.3} parent=11 // pred_check_branch
          %292 = sbr.rel (%p290) target = $region24
        $region23: #{grid_attention_forward.3} parent=11 // pred_region
          %s294 = ssub.s32 32, 32
          %295 = vsyncadd [#allocation4], %s294
          %s297 = sshll.u32 %s4, 4
          %s298 = int_to_ptr.vmem [resolvable:$true] %s297
          %300 = dma.vmem_to_smem %s298, 32, [#allocation3], [#allocation4]
        $region24: #{grid_attention_forward.3} parent=11 // pred_fallthru
          _
        // Predicated region
        $region25: #{grid_attention_forward.3} parent=11 // pred_check
          %p301 = pneg %p174
        $region26: #{grid_attention_forward.3} parent=11 // pred_check_branch
          %303 = sbr.rel (%p301) target = $region28
        $region27: #{grid_attention_forward.3} parent=11 // pred_region
          %s305 = ssub.s32 32, 32
          %306 = vsyncadd [#allocation6], %s305
          %s308 = sshll.u32 %s5, 4
          %s309 = int_to_ptr.vmem [resolvable:$true] %s308
          %311 = dma.vmem_to_smem %s309, 32, [#allocation5], [#allocation6]
        $region28: #{grid_attention_forward.3} parent=11 // pred_fallthru
          _
        // Predicated region
        $region29: #{grid_attention_forward.3} parent=11 // pred_check
          %p312 = pneg %p195
        $region30: #{grid_attention_forward.3} parent=11 // pred_check_branch
          %314 = sbr.rel (%p312) target = $region32
        $region31: #{grid_attention_forward.3} parent=11 // pred_region
          %s316 = ssub.s32 16, 16
          %317 = vsyncadd [#allocation6], %s316
          %s319 = sshll.u32 %s6, 4
          %s320 = int_to_ptr.vmem [resolvable:$true] %s319
          %322 = dma.vmem_to_smem %s320, 16, [#allocation7], [#allocation6]
        $region32: #{grid_attention_forward.3} parent=11 // pred_fallthru
          _
        // Predicated region
        $region33: #{grid_attention_forward.3} parent=11 // pred_check
          %p323 = pneg %p216
        $region34: #{grid_attention_forward.3} parent=11 // pred_check_branch
          %325 = sbr.rel (%p323) target = $region36
        $region35: #{grid_attention_forward.3} parent=11 // pred_region
          %s327 = ssub.s32 16, 16
          %328 = vsyncadd [#allocation9], %s327
          %s330 = sshll.u32 %s7, 4
          %s331 = int_to_ptr.vmem [resolvable:$true] %s330
          %333 = dma.vmem_to_smem %s331, 16, [#allocation8], [#allocation9]
        $region36: #{grid_attention_forward.3} parent=11 // pred_fallthru
          _
        // Predicated region
        $region37: #{grid_attention_forward.3} parent=11 // pred_check
          %p334 = pneg %p237
        $region38: #{grid_attention_forward.3} parent=11 // pred_check_branch
          %336 = sbr.rel (%p334) target = $region40
        $region39: #{grid_attention_forward.3} parent=11 // pred_region
          _
        $region40: #{grid_attention_forward.3} parent=11 // pred_fallthru
          _
      $region12: #{grid_attention_forward.3} parent=5 // pred_fallthru
        _
      %p337 = scmp.lt.s32.totalorder %s19, 2
      // Predicated region
      $region41: #{grid_attention_forward.3} parent=5 // pred_check
        %p338 = pneg %p337
      $region42: #{grid_attention_forward.3} parent=5 // pred_check_branch
        %340 = sbr.rel (%p338) target = $region44
      $region43: #{grid_attention_forward.3} parent=5 // pred_region
        // Predicated region
        $region45: #{grid_attention_forward.3} parent=43 // pred_check
          %p341 = pneg %p53
        $region46: #{grid_attention_forward.3} parent=43 // pred_check_branch
          %343 = sbr.rel (%p341) target = $region48
        $region47: #{grid_attention_forward.3} parent=43 // pred_region
          %p344 = scmp.lt.s32.totalorder %s26, 1
          %s345 = scalar_select %p344, %s26, 1
          %p346 = scmp.lt.s32.totalorder %s27, 0
          %s347 = scalar_select %p346, %s27, 0
          %s348 = smul.addr %s345, 16
          %s349 = sadd.s32 %s347, %s348
          %s350 = smul.addr %s349, 8
          %s351 = scalar_lea.vmem %s0, %s350
        $region48: #{grid_attention_forward.3} parent=43 // pred_fallthru
          _
        // Predicated region
        $region49: #{grid_attention_forward.3} parent=43 // pred_check
          %p352 = pneg %p79
        $region50: #{grid_attention_forward.3} parent=43 // pred_check_branch
          %354 = sbr.rel (%p352) target = $region52
        $region51: #{grid_attention_forward.3} parent=43 // pred_region
          %p355 = scmp.lt.s32.totalorder %s26, 1
          %s356 = scalar_select %p355, %s26, 1
          %s357 = smul.addr %s356, 8
          %s358 = smul.addr %s357, 4
          %s359 = scalar_lea.vmem %s1, %s358
        $region52: #{grid_attention_forward.3} parent=43 // pred_fallthru
          _
      $region44: #{grid_attention_forward.3} parent=5 // pred_fallthru
        _
      %p360 = scmp.le.s32.totalorder 1, %s19
      %p361 = scmp.lt.s32.totalorder %s19, 3
      %p362 = pnand %p360, %p361
      %p363 = pneg %p362
      // Predicated region
      $region53: #{grid_attention_forward.3} parent=5 // pred_check
        _
      $region54: #{grid_attention_forward.3} parent=5 // pred_check_branch
        %365 = sbr.rel (%p362) target = $region56
      $region55: #{grid_attention_forward.3} parent=5 // pred_region
        %s366 = ssub.s32 %s19, 1
        // Predicated region
        $region57: #{grid_attention_forward.3} parent=55 // pred_check
          %p367 = pneg %p153
        $region58: #{grid_attention_forward.3} parent=55 // pred_check_branch
          %369 = sbr.rel (%p367) target = $region60
        $region59: #{grid_attention_forward.3} parent=55 // pred_region
          %370 = dma.done [#allocation4], 32
        $region60: #{grid_attention_forward.3} parent=55 // pred_fallthru
          _
        // Predicated region
        $region61: #{grid_attention_forward.3} parent=55 // pred_check
          %p371 = pneg %p174
        $region62: #{grid_attention_forward.3} parent=55 // pred_check_branch
          %373 = sbr.rel (%p371) target = $region64
        $region63: #{grid_attention_forward.3} parent=55 // pred_region
          %374 = dma.done [#allocation6], 32
        $region64: #{grid_attention_forward.3} parent=55 // pred_fallthru
          _
        // Predicated region
        $region65: #{grid_attention_forward.3} parent=55 // pred_check
          %p375 = pneg %p195
        $region66: #{grid_attention_forward.3} parent=55 // pred_check_branch
          %377 = sbr.rel (%p375) target = $region68
        $region67: #{grid_attention_forward.3} parent=55 // pred_region
          %378 = dma.done [#allocation6], 16
        $region68: #{grid_attention_forward.3} parent=55 // pred_fallthru
          _
        // Predicated region
        $region69: #{grid_attention_forward.3} parent=55 // pred_check
          %p379 = pneg %p216
        $region70: #{grid_attention_forward.3} parent=55 // pred_check_branch
          %381 = sbr.rel (%p379) target = $region72
        $region71: #{grid_attention_forward.3} parent=55 // pred_region
          %382 = dma.done [#allocation9], 16
        $region72: #{grid_attention_forward.3} parent=55 // pred_fallthru
          _
        %383 = sfence
        %p384 = scmp.lt.s32.totalorder %s28, 1
        %s385 = scalar_select %p384, %s28, 1
        %p386 = scmp.lt.s32.totalorder %s29, 0
        %s387 = scalar_select %p386, %s29, 0
        %s388 = smul.addr %s385, 16
        %s389 = sadd.s32 %s387, %s388
        %s390 = smul.addr %s389, 8
        %s391 = scalar_lea.vmem %s0, %s390
        %p392 = pneg %p59
        %p393 = pneg %p56
        %p394 = scmp.lt.s32.totalorder %s28, 1
        %s395 = scalar_select %p394, %s28, 1
        %s396 = smul.addr %s395, 8
        %s397 = smul.addr %s396, 4
        %s398 = scalar_lea.vmem %s1, %s397
        %p399 = pneg %p85
        %p400 = pneg %p82
        %p401 = scmp.lt.s32.totalorder %s29, 0
        %s402 = scalar_select %p401, %s29, 0
        %s403 = smul.addr %s402, 8
        %s404 = scalar_lea.vmem %s2, %s403
        %p405 = pneg %p111
        %p406 = pneg %p108
        %p407 = pneg %p132
        %p408 = pneg %p129
        %p409 = pneg %p153
        %p410 = pneg %p150
        %p411 = pneg %p174
        %p412 = pneg %p171
        %p413 = pneg %p195
        %p414 = pneg %p192
        %p415 = pneg %p216
        %p416 = pneg %p213
        %p417 = pneg %p237
        %p418 = pneg %p234
        %p419 = pneg %p265
        %p420 = pneg %p262
        %p421 = scmp.lt.s32.totalorder %s28, 1
        %s422 = scalar_select %p421, %s28, 1
        %p423 = scmp.lt.s32.totalorder %s29, 0
        %s424 = scalar_select %p423, %s29, 0
        %s425 = sadd.s32 %s424, %s422
        %s426 = smul.addr %s425, 8
        %s427 = scalar_lea.vmem %s9, %s426
        %p428 = scmp.lt.s32.totalorder %s28, 1
        %s429 = scalar_select %p428, %s28, 1
        %p430 = scmp.lt.s32.totalorder %s29, 0
        %s431 = scalar_select %p430, %s29, 0
        %s432 = smul.addr %s429, 16
        %s433 = sadd.s32 %s431, %s432
        %s434 = smul.addr %s433, 8
        %s435 = scalar_lea.vmem %s0, %s434
        %p436 = scmp.lt.s32.totalorder %s28, 1
        %s437 = scalar_select %p436, %s28, 1
        %s438 = smul.addr %s437, 8
        %s439 = smul.addr %s438, 4
        %s440 = scalar_lea.vmem %s1, %s439
        %p441 = scmp.lt.s32.totalorder %s29, 0
        %s442 = scalar_select %p441, %s29, 0
        %s443 = smul.addr %s442, 8
        %s444 = scalar_lea.vmem %s2, %s443
        %p445 = scmp.lt.s32.totalorder %s28, 1
        %s446 = scalar_select %p445, %s28, 1
        %p447 = scmp.lt.s32.totalorder %s29, 0
        %s448 = scalar_select %p447, %s29, 0
        %s449 = sadd.s32 %s448, %s446
        %s450 = smul.addr %s449, 8
        %s451 = scalar_lea.vmem %s9, %s450
        %v452 = vld [vmem:[%s440] sm:$0xf]
        %s453 = sld [smem:[#allocation5]]
        %v454 = vstv %s453
        %v455 = vmul.f32 %v452, %v454
        %s456 = scalar_lea.vmem %s440, 4
        %v457 = vld [vmem:[%s456] sm:$0xf]
        %s458 = sld [smem:[#allocation5 + $0x1]]
        %v459 = vstv %s458
        %v460 = vmul.f32 %v457, %v459
        %v461 = vadd.f32 %v455, %v460
        %s462 = scalar_lea.vmem %s440, 8
        %v463 = vld [vmem:[%s462] sm:$0xf]
        %s464 = sld [smem:[#allocation5 + $0x2]]
        %v465 = vstv %s464
        %v466 = vmul.f32 %v463, %v465
        %v467 = vadd.f32 %v461, %v466
        %s468 = scalar_lea.vmem %s440, 12
        %v469 = vld [vmem:[%s468] sm:$0xf]
        %s470 = sld [smem:[#allocation5 + $0x3]]
        %v471 = vstv %s470
        %v472 = vmul.f32 %v469, %v471
        %v473 = vadd.f32 %v467, %v472
        %s474 = scalar_lea.vmem %s440, 16
        %v475 = vld [vmem:[%s474] sm:$0xf]
        %s476 = sld [smem:[#allocation5 + $0x4]]
        %v477 = vstv %s476
        %v478 = vmul.f32 %v475, %v477
        %v479 = vadd.f32 %v473, %v478
        %s480 = scalar_lea.vmem %s440, 20
        %v481 = vld [vmem:[%s480] sm:$0xf]
        %s482 = sld [smem:[#allocation5 + $0x5]]
        %v483 = vstv %s482
        %v484 = vmul.f32 %v481, %v483
        %v485 = vadd.f32 %v479, %v484
        %s486 = scalar_lea.vmem %s440, 24
        %v487 = vld [vmem:[%s486] sm:$0xf]
        %s488 = sld [smem:[#allocation5 + $0x6]]
        %v489 = vstv %s488
        %v490 = vmul.f32 %v487, %v489
        %v491 = vadd.f32 %v485, %v490
        %s492 = scalar_lea.vmem %s440, 28
        %v493 = vld [vmem:[%s492] sm:$0xf]
        %s494 = sld [smem:[#allocation5 + $0x7]]
        %v495 = vstv %s494
        %v496 = vmul.f32 %v493, %v495
        %v497 = vadd.f32 %v491, %v496
        %s498 = sld [smem:[#allocation7]]
        %v499 = vstv %s498
        %v500 = vadd.f32 %v497, %v499
        %v501 = vld [vmem:[%s444] sm:$0xff]
        %vm502 = vcmask 31744
        %v504 = vsel %vm502, %v501, 0
        %vm506 = vcmask 1043456
        %v508 = vsel %vm506, %v500, 0
        %510 = vmatprep.subr.mxu0 0.0
        %511 = vmatpush1.msra.mxu0 %v508
        %512 = vmatprep.subr.mxu0 0.0
        %513 = vmatpush1.msra.mxu0 0.0
        %514 = vmatprep.subr.mxu0 0.0
        %515 = vmatpush1.msra.mxu0 0.0
        %516 = vmatprep.subr.mxu0 0.0
        %517 = vmatpush1.msra.mxu0 0.0
        %518 = vmatprep.subr.mxu0 0.0
        %519 = vmatpush1.msra.mxu0 0.0
        %520 = vmatprep.subr.mxu0 0.0
        %521 = vmatpush1.msra.mxu0 0.0
        %522 = vmatprep.subr.mxu0 0.0
        %523 = vmatpush1.msra.mxu0 0.0
        %524 = vmatprep.subr.mxu0 0.0
        %525 = vmatpush1.msra.mxu0 0.0
        %526 = vmatprep.subr.mxu0 0.0
        %527 = vmatpush1.msra.mxu0 0.0
        %528 = vmatprep.subr.mxu0 0.0
        %529 = vmatpush1.msra.mxu0 0.0
        %530 = vmatprep.subr.mxu0 0.0
        %531 = vmatpush1.msra.mxu0 0.0
        %532 = vmatprep.subr.mxu0 0.0
        %533 = vmatpush1.msra.mxu0 0.0
        %534 = vmatprep.subr.mxu0 0.0
        %535 = vmatpush1.msra.mxu0 0.0
        %536 = vmatprep.subr.mxu0 0.0
        %537 = vmatpush1.msra.mxu0 0.0
        %538 = vmatprep.subr.mxu0 0.0
        %539 = vmatpush1.msra.mxu0 0.0
        %540 = vmatprep.subr.mxu0 0.0
        %541 = vmatpush1.msra.mxu0 0.0
        %542 = vmatprep.subr.mxu0 0.0
        %543 = vmatpush1.msra.mxu0 0.0
        %544 = vmatprep.subr.mxu0 0.0
        %545 = vmatpush1.msra.mxu0 0.0
        %546 = vmatprep.subr.mxu0 0.0
        %547 = vmatpush1.msra.mxu0 0.0
        %548 = vmatprep.subr.mxu0 0.0
        %549 = vmatpush1.msra.mxu0 0.0
        %550 = vmatprep.subr.mxu0 0.0
        %551 = vmatpush1.msra.mxu0 0.0
        %552 = vmatprep.subr.mxu0 0.0
        %553 = vmatpush1.msra.mxu0 0.0
        %554 = vmatprep.subr.mxu0 0.0
        %555 = vmatpush1.msra.mxu0 0.0
        %556 = vmatprep.subr.mxu0 0.0
        %557 = vmatpush1.msra.mxu0 0.0
        %558 = vmatprep.subr.mxu0 0.0
        %559 = vmatpush1.msra.mxu0 0.0
        %560 = vmatprep.subr.mxu0 0.0
        %561 = vmatpush1.msra.mxu0 0.0
        %562 = vmatprep.subr.mxu0 0.0
        %563 = vmatpush1.msra.mxu0 0.0
        %564 = vmatprep.subr.mxu0 0.0
        %565 = vmatpush1.msra.mxu0 0.0
        %566 = vmatprep.subr.mxu0 0.0
        %567 = vmatpush1.msra.mxu0 0.0
        %568 = vmatprep.subr.mxu0 0.0
        %569 = vmatpush1.msra.mxu0 0.0
        %570 = vmatprep.subr.mxu0 0.0
        %571 = vmatpush1.msra.mxu0 0.0
        %572 = vmatprep.subr.mxu0 0.0
        %573 = vmatpush1.msra.mxu0 0.0
        %574 = vmatprep.mubr.f32.mxu0 0.0
        %575 = vmatmul.mubr.f32.gmra.mrb[0].mxu0 %v504
        %v576 = vpop.f32.mrb[0].mxu0
        %v577 = vadd.f32 0.0, %v576
        %v578 = vpop.f32.mrb[0].mxu0
        %579 = vdwg.mxu0
        %v580 = vld [vmem:[%s3] sm:$0xf]
        %v582 = vsel %vm502, %v577, 0
        %v585 = vsel %vm506, %v580, 0
        %587 = vmatprep.subr.mxu0 0.0
        %588 = vmatpush1.msra.mxu0 %v585
        %589 = vmatprep.subr.mxu0 0.0
        %590 = vmatpush1.msra.mxu0 0.0
        %591 = vmatprep.subr.mxu0 0.0
        %592 = vmatpush1.msra.mxu0 0.0
        %593 = vmatprep.subr.mxu0 0.0
        %594 = vmatpush1.msra.mxu0 0.0
        %595 = vmatprep.subr.mxu0 0.0
        %596 = vmatpush1.msra.mxu0 0.0
        %597 = vmatprep.subr.mxu0 0.0
        %598 = vmatpush1.msra.mxu0 0.0
        %599 = vmatprep.subr.mxu0 0.0
        %600 = vmatpush1.msra.mxu0 0.0
        %601 = vmatprep.subr.mxu0 0.0
        %602 = vmatpush1.msra.mxu0 0.0
        %603 = vmatprep.subr.mxu0 0.0
        %604 = vmatpush1.msra.mxu0 0.0
        %605 = vmatprep.subr.mxu0 0.0
        %606 = vmatpush1.msra.mxu0 0.0
        %607 = vmatprep.subr.mxu0 0.0
        %608 = vmatpush1.msra.mxu0 0.0
        %609 = vmatprep.subr.mxu0 0.0
        %610 = vmatpush1.msra.mxu0 0.0
        %611 = vmatprep.subr.mxu0 0.0
        %612 = vmatpush1.msra.mxu0 0.0
        %613 = vmatprep.subr.mxu0 0.0
        %614 = vmatpush1.msra.mxu0 0.0
        %615 = vmatprep.subr.mxu0 0.0
        %616 = vmatpush1.msra.mxu0 0.0
        %617 = vmatprep.subr.mxu0 0.0
        %618 = vmatpush1.msra.mxu0 0.0
        %619 = vmatprep.subr.mxu0 0.0
        %620 = vmatpush1.msra.mxu0 0.0
        %621 = vmatprep.subr.mxu0 0.0
        %622 = vmatpush1.msra.mxu0 0.0
        %623 = vmatprep.subr.mxu0 0.0
        %624 = vmatpush1.msra.mxu0 0.0
        %625 = vmatprep.subr.mxu0 0.0
        %626 = vmatpush1.msra.mxu0 0.0
        %627 = vmatprep.subr.mxu0 0.0
        %628 = vmatpush1.msra.mxu0 0.0
        %629 = vmatprep.subr.mxu0 0.0
        %630 = vmatpush1.msra.mxu0 0.0
        %631 = vmatprep.subr.mxu0 0.0
        %632 = vmatpush1.msra.mxu0 0.0
        %633 = vmatprep.subr.mxu0 0.0
        %634 = vmatpush1.msra.mxu0 0.0
        %635 = vmatprep.subr.mxu0 0.0
        %636 = vmatpush1.msra.mxu0 0.0
        %637 = vmatprep.subr.mxu0 0.0
        %638 = vmatpush1.msra.mxu0 0.0
        %639 = vmatprep.subr.mxu0 0.0
        %640 = vmatpush1.msra.mxu0 0.0
        %641 = vmatprep.subr.mxu0 0.0
        %642 = vmatpush1.msra.mxu0 0.0
        %643 = vmatprep.subr.mxu0 0.0
        %644 = vmatpush1.msra.mxu0 0.0
        %645 = vmatprep.subr.mxu0 0.0
        %646 = vmatpush1.msra.mxu0 0.0
        %647 = vmatprep.subr.mxu0 0.0
        %648 = vmatpush1.msra.mxu0 0.0
        %649 = vmatprep.subr.mxu0 0.0
        %650 = vmatpush1.msra.mxu0 0.0
        %651 = vmatprep.mubr.f32.mxu0 0.0
        %652 = vmatmul.mubr.f32.gmra.mrb[0].mxu0 %v582
        %v653 = vpop.f32.mrb[0].mxu0
        %v654 = vadd.f32 0.0, %v653
        %v655 = vpop.f32.mrb[0].mxu0
        %656 = vdwg.mxu0
        %v657 = vld [vmem:[%s435] sm:$0xff]
        %s658 = sld [smem:[#allocation3]]
        %v659 = vstv %s658
        %v660 = vmul.f32 %v657, %v659
        %s661 = scalar_lea.vmem %s435, 8
        %v662 = vld [vmem:[%s661] sm:$0xff]
        %s663 = sld [smem:[#allocation3 + $0x1]]
        %v664 = vstv %s663
        %v665 = vmul.f32 %v662, %v664
        %v666 = vadd.f32 %v660, %v665
        %s667 = scalar_lea.vmem %s435, 16
        %v668 = vld [vmem:[%s667] sm:$0xff]
        %s669 = sld [smem:[#allocation3 + $0x2]]
        %v670 = vstv %s669
        %v671 = vmul.f32 %v668, %v670
        %v672 = vadd.f32 %v666, %v671
        %s673 = scalar_lea.vmem %s435, 24
        %v674 = vld [vmem:[%s673] sm:$0xff]
        %s675 = sld [smem:[#allocation3 + $0x3]]
        %v676 = vstv %s675
        %v677 = vmul.f32 %v674, %v676
        %v678 = vadd.f32 %v672, %v677
        %s679 = scalar_lea.vmem %s435, 32
        %v680 = vld [vmem:[%s679] sm:$0xff]
        %s681 = sld [smem:[#allocation3 + $0x4]]
        %v682 = vstv %s681
        %v683 = vmul.f32 %v680, %v682
        %v684 = vadd.f32 %v678, %v683
        %s685 = scalar_lea.vmem %s435, 40
        %v686 = vld [vmem:[%s685] sm:$0xff]
        %s687 = sld [smem:[#allocation3 + $0x5]]
        %v688 = vstv %s687
        %v689 = vmul.f32 %v686, %v688
        %v690 = vadd.f32 %v684, %v689
        %s691 = scalar_lea.vmem %s435, 48
        %v692 = vld [vmem:[%s691] sm:$0xff]
        %s693 = sld [smem:[#allocation3 + $0x6]]
        %v694 = vstv %s693
        %v695 = vmul.f32 %v692, %v694
        %v696 = vadd.f32 %v690, %v695
        %s697 = scalar_lea.vmem %s435, 56
        %v698 = vld [vmem:[%s697] sm:$0xff]
        %s699 = sld [smem:[#allocation3 + $0x7]]
        %v700 = vstv %s699
        %v701 = vmul.f32 %v698, %v700
        %v702 = vadd.f32 %v696, %v701
        %s703 = scalar_lea.vmem %s435, 64
        %v704 = vld [vmem:[%s703] sm:$0xff]
        %s705 = sld [smem:[#allocation3 + $0x8]]
        %v706 = vstv %s705
        %v707 = vmul.f32 %v704, %v706
        %v708 = vadd.f32 %v702, %v707
        %s709 = scalar_lea.vmem %s435, 72
        %v710 = vld [vmem:[%s709] sm:$0xff]
        %s711 = sld [smem:[#allocation3 + $0x9]]
        %v712 = vstv %s711
        %v713 = vmul.f32 %v710, %v712
        %v714 = vadd.f32 %v708, %v713
        %s715 = scalar_lea.vmem %s435, 80
        %v716 = vld [vmem:[%s715] sm:$0xff]
        %s717 = sld [smem:[#allocation3 + $0xa]]
        %v718 = vstv %s717
        %v719 = vmul.f32 %v716, %v718
        %v720 = vadd.f32 %v714, %v719
        %s721 = scalar_lea.vmem %s435, 88
        %v722 = vld [vmem:[%s721] sm:$0xff]
        %s723 = sld [smem:[#allocation3 + $0xb]]
        %v724 = vstv %s723
        %v725 = vmul.f32 %v722, %v724
        %v726 = vadd.f32 %v720, %v725
        %s727 = scalar_lea.vmem %s435, 96
        %v728 = vld [vmem:[%s727] sm:$0xff]
        %s729 = sld [smem:[#allocation3 + $0xc]]
        %v730 = vstv %s729
        %v731 = vmul.f32 %v728, %v730
        %v732 = vadd.f32 %v726, %v731
        %s733 = scalar_lea.vmem %s435, 104
        %v734 = vld [vmem:[%s733] sm:$0xff]
        %s735 = sld [smem:[#allocation3 + $0xd]]
        %v736 = vstv %s735
        %v737 = vmul.f32 %v734, %v736
        %v738 = vadd.f32 %v732, %v737
        %s739 = scalar_lea.vmem %s435, 112
        %v740 = vld [vmem:[%s739] sm:$0xff]
        %s741 = sld [smem:[#allocation3 + $0xe]]
        %v742 = vstv %s741
        %v743 = vmul.f32 %v740, %v742
        %v744 = vadd.f32 %v738, %v743
        %s745 = scalar_lea.vmem %s435, 120
        %v746 = vld [vmem:[%s745] sm:$0xff]
        %s747 = sld [smem:[#allocation3 + $0xf]]
        %v748 = vstv %s747
        %v749 = vmul.f32 %v746, %v748
        %v750 = vadd.f32 %v744, %v749
        %v751 = vadd.f32 %v750, %v654
        %v752 = vmax.f32 %v751, 0.0
        %s753 = sld [smem:[#allocation8]]
        %v754 = vstv %s753
        %v755 = vmul.f32 %v752, %v754
        %s756 = sld [smem:[#allocation5 + $0x80]]
        %v757 = vstv %s756
        %v758 = vmul.f32 %v452, %v757
        %s759 = sld [smem:[#allocation5 + $0x81]]
        %v760 = vstv %s759
        %v761 = vmul.f32 %v457, %v760
        %v762 = vadd.f32 %v758, %v761
        %s763 = sld [smem:[#allocation5 + $0x82]]
        %v764 = vstv %s763
        %v765 = vmul.f32 %v463, %v764
        %v766 = vadd.f32 %v762, %v765
        %s767 = sld [smem:[#allocation5 + $0x83]]
        %v768 = vstv %s767
        %v769 = vmul.f32 %v469, %v768
        %v770 = vadd.f32 %v766, %v769
        %s771 = sld [smem:[#allocation5 + $0x84]]
        %v772 = vstv %s771
        %v773 = vmul.f32 %v475, %v772
        %v774 = vadd.f32 %v770, %v773
        %s775 = sld [smem:[#allocation5 + $0x85]]
        %v776 = vstv %s775
        %v777 = vmul.f32 %v481, %v776
        %v778 = vadd.f32 %v774, %v777
        %s779 = sld [smem:[#allocation5 + $0x86]]
        %v780 = vstv %s779
        %v781 = vmul.f32 %v487, %v780
        %v782 = vadd.f32 %v778, %v781
        %s783 = sld [smem:[#allocation5 + $0x87]]
        %v784 = vstv %s783
        %v785 = vmul.f32 %v493, %v784
        %v786 = vadd.f32 %v782, %v785
        %s787 = sld [smem:[#allocation7 + $0x1]]
        %v788 = vstv %s787
        %v789 = vadd.f32 %v786, %v788
        %v791 = vsel %vm506, %v789, 0
        %793 = vmatprep.subr.mxu0 0.0
        %794 = vmatpush1.msra.mxu0 %v791
        %795 = vmatprep.subr.mxu0 0.0
        %796 = vmatpush1.msra.mxu0 0.0
        %797 = vmatprep.subr.mxu0 0.0
        %798 = vmatpush1.msra.mxu0 0.0
        %799 = vmatprep.subr.mxu0 0.0
        %800 = vmatpush1.msra.mxu0 0.0
        %801 = vmatprep.subr.mxu0 0.0
        %802 = vmatpush1.msra.mxu0 0.0
        %803 = vmatprep.subr.mxu0 0.0
        %804 = vmatpush1.msra.mxu0 0.0
        %805 = vmatprep.subr.mxu0 0.0
        %806 = vmatpush1.msra.mxu0 0.0
        %807 = vmatprep.subr.mxu0 0.0
        %808 = vmatpush1.msra.mxu0 0.0
        %809 = vmatprep.subr.mxu0 0.0
        %810 = vmatpush1.msra.mxu0 0.0
        %811 = vmatprep.subr.mxu0 0.0
        %812 = vmatpush1.msra.mxu0 0.0
        %813 = vmatprep.subr.mxu0 0.0
        %814 = vmatpush1.msra.mxu0 0.0
        %815 = vmatprep.subr.mxu0 0.0
        %816 = vmatpush1.msra.mxu0 0.0
        %817 = vmatprep.subr.mxu0 0.0
        %818 = vmatpush1.msra.mxu0 0.0
        %819 = vmatprep.subr.mxu0 0.0
        %820 = vmatpush1.msra.mxu0 0.0
        %821 = vmatprep.subr.mxu0 0.0
        %822 = vmatpush1.msra.mxu0 0.0
        %823 = vmatprep.subr.mxu0 0.0
        %824 = vmatpush1.msra.mxu0 0.0
        %825 = vmatprep.subr.mxu0 0.0
        %826 = vmatpush1.msra.mxu0 0.0
        %827 = vmatprep.subr.mxu0 0.0
        %828 = vmatpush1.msra.mxu0 0.0
        %829 = vmatprep.subr.mxu0 0.0
        %830 = vmatpush1.msra.mxu0 0.0
        %831 = vmatprep.subr.mxu0 0.0
        %832 = vmatpush1.msra.mxu0 0.0
        %833 = vmatprep.subr.mxu0 0.0
        %834 = vmatpush1.msra.mxu0 0.0
        %835 = vmatprep.subr.mxu0 0.0
        %836 = vmatpush1.msra.mxu0 0.0
        %837 = vmatprep.subr.mxu0 0.0
        %838 = vmatpush1.msra.mxu0 0.0
        %839 = vmatprep.subr.mxu0 0.0
        %840 = vmatpush1.msra.mxu0 0.0
        %841 = vmatprep.subr.mxu0 0.0
        %842 = vmatpush1.msra.mxu0 0.0
        %843 = vmatprep.subr.mxu0 0.0
        %844 = vmatpush1.msra.mxu0 0.0
        %845 = vmatprep.subr.mxu0 0.0
        %846 = vmatpush1.msra.mxu0 0.0
        %847 = vmatprep.subr.mxu0 0.0
        %848 = vmatpush1.msra.mxu0 0.0
        %849 = vmatprep.subr.mxu0 0.0
        %850 = vmatpush1.msra.mxu0 0.0
        %851 = vmatprep.subr.mxu0 0.0
        %852 = vmatpush1.msra.mxu0 0.0
        %853 = vmatprep.subr.mxu0 0.0
        %854 = vmatpush1.msra.mxu0 0.0
        %855 = vmatprep.subr.mxu0 0.0
        %856 = vmatpush1.msra.mxu0 0.0
        %857 = vmatprep.mubr.f32.mxu0 0.0
        %858 = vmatmul.mubr.f32.gmra.mrb[0].mxu0 %v504
        %v859 = vpop.f32.mrb[0].mxu0
        %v860 = vadd.f32 0.0, %v859
        %v861 = vpop.f32.mrb[0].mxu0
        %862 = vdwg.mxu0
        %v864 = vsel %vm502, %v860, 0
        %866 = vmatprep.subr.mxu0 0.0
        %867 = vmatpush1.msra.mxu0 %v585
        %868 = vmatprep.subr.mxu0 0.0
        %869 = vmatpush1.msra.mxu0 0.0
        %870 = vmatprep.subr.mxu0 0.0
        %871 = vmatpush1.msra.mxu0 0.0
        %872 = vmatprep.subr.mxu0 0.0
        %873 = vmatpush1.msra.mxu0 0.0
        %874 = vmatprep.subr.mxu0 0.0
        %875 = vmatpush1.msra.mxu0 0.0
        %876 = vmatprep.subr.mxu0 0.0
        %877 = vmatpush1.msra.mxu0 0.0
        %878 = vmatprep.subr.mxu0 0.0
        %879 = vmatpush1.msra.mxu0 0.0
        %880 = vmatprep.subr.mxu0 0.0
        %881 = vmatpush1.msra.mxu0 0.0
        %882 = vmatprep.subr.mxu0 0.0
        %883 = vmatpush1.msra.mxu0 0.0
        %884 = vmatprep.subr.mxu0 0.0
        %885 = vmatpush1.msra.mxu0 0.0
        %886 = vmatprep.subr.mxu0 0.0
        %887 = vmatpush1.msra.mxu0 0.0
        %888 = vmatprep.subr.mxu0 0.0
        %889 = vmatpush1.msra.mxu0 0.0
        %890 = vmatprep.subr.mxu0 0.0
        %891 = vmatpush1.msra.mxu0 0.0
        %892 = vmatprep.subr.mxu0 0.0
        %893 = vmatpush1.msra.mxu0 0.0
        %894 = vmatprep.subr.mxu0 0.0
        %895 = vmatpush1.msra.mxu0 0.0
        %896 = vmatprep.subr.mxu0 0.0
        %897 = vmatpush1.msra.mxu0 0.0
        %898 = vmatprep.subr.mxu0 0.0
        %899 = vmatpush1.msra.mxu0 0.0
        %900 = vmatprep.subr.mxu0 0.0
        %901 = vmatpush1.msra.mxu0 0.0
        %902 = vmatprep.subr.mxu0 0.0
        %903 = vmatpush1.msra.mxu0 0.0
        %904 = vmatprep.subr.mxu0 0.0
        %905 = vmatpush1.msra.mxu0 0.0
        %906 = vmatprep.subr.mxu0 0.0
        %907 = vmatpush1.msra.mxu0 0.0
        %908 = vmatprep.subr.mxu0 0.0
        %909 = vmatpush1.msra.mxu0 0.0
        %910 = vmatprep.subr.mxu0 0.0
        %911 = vmatpush1.msra.mxu0 0.0
        %912 = vmatprep.subr.mxu0 0.0
        %913 = vmatpush1.msra.mxu0 0.0
        %914 = vmatprep.subr.mxu0 0.0
        %915 = vmatpush1.msra.mxu0 0.0
        %916 = vmatprep.subr.mxu0 0.0
        %917 = vmatpush1.msra.mxu0 0.0
        %918 = vmatprep.subr.mxu0 0.0
        %919 = vmatpush1.msra.mxu0 0.0
        %920 = vmatprep.subr.mxu0 0.0
        %921 = vmatpush1.msra.mxu0 0.0
        %922 = vmatprep.subr.mxu0 0.0
        %923 = vmatpush1.msra.mxu0 0.0
        %924 = vmatprep.subr.mxu0 0.0
        %925 = vmatpush1.msra.mxu0 0.0
        %926 = vmatprep.subr.mxu0 0.0
        %927 = vmatpush1.msra.mxu0 0.0
        %928 = vmatprep.subr.mxu0 0.0
        %929 = vmatpush1.msra.mxu0 0.0
        %930 = vmatprep.mubr.f32.mxu0 0.0
        %931 = vmatmul.mubr.f32.gmra.mrb[0].mxu0 %v864
        %v932 = vpop.f32.mrb[0].mxu0
        %v933 = vadd.f32 0.0, %v932
        %v934 = vpop.f32.mrb[0].mxu0
        %935 = vdwg.mxu0
        %s936 = sld [smem:[#allocation3 + $0x80]]
        %v937 = vstv %s936
        %v938 = vmul.f32 %v657, %v937
        %s939 = sld [smem:[#allocation3 + $0x81]]
        %v940 = vstv %s939
        %v941 = vmul.f32 %v662, %v940
        %v942 = vadd.f32 %v938, %v941
        %s943 = sld [smem:[#allocation3 + $0x82]]
        %v944 = vstv %s943
        %v945 = vmul.f32 %v668, %v944
        %v946 = vadd.f32 %v942, %v945
        %s947 = sld [smem:[#allocation3 + $0x83]]
        %v948 = vstv %s947
        %v949 = vmul.f32 %v674, %v948
        %v950 = vadd.f32 %v946, %v949
        %s951 = sld [smem:[#allocation3 + $0x84]]
        %v952 = vstv %s951
        %v953 = vmul.f32 %v680, %v952
        %v954 = vadd.f32 %v950, %v953
        %s955 = sld [smem:[#allocation3 + $0x85]]
        %v956 = vstv %s955
        %v957 = vmul.f32 %v686, %v956
        %v958 = vadd.f32 %v954, %v957
        %s959 = sld [smem:[#allocation3 + $0x86]]
        %v960 = vstv %s959
        %v961 = vmul.f32 %v692, %v960
        %v962 = vadd.f32 %v958, %v961
        %s963 = sld [smem:[#allocation3 + $0x87]]
        %v964 = vstv %s963
        %v965 = vmul.f32 %v698, %v964
        %v966 = vadd.f32 %v962, %v965
        %s967 = sld [smem:[#allocation3 + $0x88]]
        %v968 = vstv %s967
        %v969 = vmul.f32 %v704, %v968
        %v970 = vadd.f32 %v966, %v969
        %s971 = sld [smem:[#allocation3 + $0x89]]
        %v972 = vstv %s971
        %v973 = vmul.f32 %v710, %v972
        %v974 = vadd.f32 %v970, %v973
        %s975 = sld [smem:[#allocation3 + $0x8a]]
        %v976 = vstv %s975
        %v977 = vmul.f32 %v716, %v976
        %v978 = vadd.f32 %v974, %v977
        %s979 = sld [smem:[#allocation3 + $0x8b]]
        %v980 = vstv %s979
        %v981 = vmul.f32 %v722, %v980
        %v982 = vadd.f32 %v978, %v981
        %s983 = sld [smem:[#allocation3 + $0x8c]]
        %v984 = vstv %s983
        %v985 = vmul.f32 %v728, %v984
        %v986 = vadd.f32 %v982, %v985
        %s987 = sld [smem:[#allocation3 + $0x8d]]
        %v988 = vstv %s987
        %v989 = vmul.f32 %v734, %v988
        %v990 = vadd.f32 %v986, %v989
        %s991 = sld [smem:[#allocation3 + $0x8e]]
        %v992 = vstv %s991
        %v993 = vmul.f32 %v740, %v992
        %v994 = vadd.f32 %v990, %v993
        %s995 = sld [smem:[#allocation3 + $0x8f]]
        %v996 = vstv %s995
        %v997 = vmul.f32 %v746, %v996
        %v998 = vadd.f32 %v994, %v997
        %v999 = vadd.f32 %v998, %v933
        %v1000 = vmax.f32 %v999, 0.0
        %s1001 = sld [smem:[#allocation8 + $0x1]]
        %v1002 = vstv %s1001
        %v1003 = vmul.f32 %v1000, %v1002
        %v1004 = vadd.f32 %v755, %v1003
        %s1005 = sld [smem:[#allocation2]]
        %v1006 = vstv %s1005
        %v1007 = vadd.f32 %v1004, %v1006
        %v1008 = vand.u32 2147483647, %v1007
        %v1009 = vsub.f32 0.0, %v1008
        %v1010 = vmul.f32 %v1009, 1.442695
        %v1011 = vpow.pop %v1010
        %vm1012 = vcmp.ge.f32.partialorder %v1007, 0.0
        %v1013 = vadd.f32 %v1011, 1.0
        %v1014 = vrcp.pop %v1013
        %v1015 = vmul.f32 1.0, %v1014
        %v1016 = vmul.f32 %v1011, %v1014
        %v1017 = vsel %vm1012, %v1015, %v1016
        %vm1018 = vcmask 64512
        %1019 = vst.msk [vmem:[%s451] sm:$0xff] %vm1018, %v1017
        %p1020 = scmp.lt.s32.totalorder %s28, 1
        %s1021 = scalar_select %p1020, %s28, 1
        %p1022 = scmp.lt.s32.totalorder %s29, 0
        %s1023 = scalar_select %p1022, %s29, 0
        %s1024 = sadd.s32 %s1023, %s1021
        %s1025 = smul.addr %s1024, 8
        %s1026 = scalar_lea.vmem %s9, %s1025
        // Predicated region
        $region73: #{grid_attention_forward.3} parent=55 // pred_check
          %p1027 = pneg %p262
        $region74: #{grid_attention_forward.3} parent=55 // pred_check_branch
          %1029 = sbr.rel (%p1027) target = $region76
        $region75: #{grid_attention_forward.3} parent=55 // pred_region
          _
        $region76: #{grid_attention_forward.3} parent=55 // pred_fallthru
          _
      $region56: #{grid_attention_forward.3} parent=5 // pred_fallthru
        _
      %p1030 = scmp.le.s32.totalorder 2, %s19
      // Predicated region
      $region77: #{grid_attention_forward.3} parent=5 // pred_check
        %p1031 = pneg %p1030
      $region78: #{grid_attention_forward.3} parent=5 // pred_check_branch
        %1033 = sbr.rel (%p1031) target = $region80
      $region79: #{grid_attention_forward.3} parent=5 // pred_region
        %s1034 = ssub.s32 %s19, 2
        // Predicated region
        $region81: #{grid_attention_forward.3} parent=79 // pred_check
          %p1035 = pneg %p268
        $region82: #{grid_attention_forward.3} parent=79 // pred_check_branch
          %1037 = sbr.rel (%p1035) target = $region84
        $region83: #{grid_attention_forward.3} parent=79 // pred_region
          %p1038 = scmp.lt.s32.totalorder %s30, 1
          %s1039 = scalar_select %p1038, %s30, 1
          %p1040 = scmp.lt.s32.totalorder %s31, 0
          %s1041 = scalar_select %p1040, %s31, 0
          %s1042 = sadd.s32 %s1041, %s1039
          %s1043 = smul.addr %s1042, 8
          %s1044 = scalar_lea.vmem %s9, %s1043
        $region84: #{grid_attention_forward.3} parent=79 // pred_fallthru
          _
      $region80: #{grid_attention_forward.3} parent=5 // pred_fallthru
        _
    $region6: #{grid_attention_forward.3} parent=1 // loop_footer
      %s23 = sadd.s32 1, %s19
    $region7: #{grid_attention_forward.3} parent=1 // loop_footer_branch
      %18 = sbr.rel target = $region3
    $region8: #{grid_attention_forward.3} parent=1 // loop_exit
      _
    %1045 = vsyncpa [#allocation4], 1
    %s1046 = scalar_lea.sflag [#allocation4], 1
    %1047 = vsyncpa %s1046, 1
    %1048 = vsyncpa [#allocation6], 1
    %1049 = vsyncpa [#allocation9], 1

</llo_original>
